<compile_context>
chip_gen: v6e
topology: v6e:2x2x1
jax: 0.10.0
libtpu: 0.0.40
codegen_flags: <defaults>
</compile_context>

<pallas_src>
import jax
import jax.numpy as jnp
import numpy as np
from jax.experimental import pallas as pl
from jax.experimental.pallas import tpu as pltpu

IN_FEATS = 32 * 10 * 10          # 3200 flattened conv4 features
OUT_FEATS = 64                   # Linear(3200, 64)
NORM_EPS = 1e-12                 # F.normalize eps
BN_EPS = 1e-5                    # nn.BatchNorm1d default eps
B_TILE_MAX = 384                 # batch rows per grid step (multiple of 128)
VMEM_LIMIT_BYTES = 48 * 1024 * 1024   # <= v7x's 64 MiB physical VMEM per TC


def _cod_kernel(x1_ref, x2_ref, x3_ref, w_ref, b_ref, out_ref):
    """One grid step = one b_tile-row batch tile, all three objects.

    out_ref is a (2, b_tile) block: row 0 = cossim12, row 1 = cossim23.
    """
    w = w_ref[...]                       # (3200, 64), BN folded in, input dtype
    b = b_ref[...]                       # (1, 64) f32
    ones_row = jnp.ones((1, OUT_FEATS), jnp.float32)

    def embed(x_ref):
        # Linear(3200, 64) + eval-mode BatchNorm1d (folded into w/b), f32 accum.
        return jnp.dot(x_ref[...], w, preferred_element_type=jnp.float32) + b

    def row_reduce(p):
        # sum_j p[:, j]  produced lane-major as a (1, b_tile) row via an MXU
        # mat-vec (contract feature dim of both operands), so the lane-dense
        # output block is written with no (b,1)->(1,b) relayout.
        return jax.lax.dot_general(
            ones_row, p,
            dimension_numbers=(((1,), (1,)), ((), ())),
            preferred_element_type=jnp.float32)

    g1 = embed(x1_ref)                   # (b_tile, 64) f32
    g2 = embed(x2_ref)
    g3 = embed(x3_ref)

    # Squared L2 norms and pairwise dot products, each (1, b_tile).
    n1 = row_reduce(g1 * g1)
    n2 = row_reduce(g2 * g2)
    n3 = row_reduce(g3 * g3)
    d12 = row_reduce(g1 * g2)
    d23 = row_reduce(g2 * g3)

    # cos(f1, f2) with F.normalize semantics:
    #   (g1.g2) / (max(||g1||, eps) * max(||g2||, eps))
    # = (g1.g2) * rsqrt(max(||g1||^2, eps^2)) * rsqrt(max(||g2||^2, eps^2))
    eps2 = NORM_EPS * NORM_EPS
    inv1 = jax.lax.rsqrt(jnp.maximum(n1, eps2))
    inv2 = jax.lax.rsqrt(jnp.maximum(n2, eps2))
    inv3 = jax.lax.rsqrt(jnp.maximum(n3, eps2))

    out_ref[0:1, :] = d12 * inv1 * inv2
    out_ref[1:2, :] = d23 * inv2 * inv3


def _choose_b_tile(n, b_tile_max):
    b_tile_max = max(128, (b_tile_max // 128) * 128)
    if n < 256:
        # Single whole-array block: block dims == array dims, so there is no
        # (8,128) divisibility requirement, no ragged edge, and at this size
        # the whole problem is a few microseconds of HBM traffic anyway.
        return n
    # Multiple of 128 (keeps the lane-dense (2, b_tile) output block legal and
    # satisfies bf16 sublane packing), sized so the grid has >= 2 steps and
    # both v7x TensorCores get work under dimension_semantics=("parallel",).
    half = -(-n // 2)                       # ceil(n / 2)
    return min(b_tile_max, max(128, (half // 128) * 128))


def compare_object_dist(obj1, obj2, obj3, params, *, b_tile_max=B_TILE_MAX):
    """params = (w, b, gamma, beta, running_mean, running_var); returns
    (cossim12, cossim23), each of shape (n,) float32."""
    n = obj1.shape[0]
    w, b, gamma, beta, mean, var = params

    # Fold eval-mode BatchNorm1d into the linear:
    #   BN(x @ w + b) = x @ (w * s) + ((b - mean) * s + beta),
    #   s = gamma / sqrt(var + eps)
    scale = gamma / jnp.sqrt(var + BN_EPS)
    w_eff = (w * scale[None, :]).astype(jnp.float32)                   # (3200, 64)
    b_eff = ((b - mean) * scale + beta).reshape(1, OUT_FEATS).astype(jnp.float32)

    # Contiguous flatten (free view), matching torch .reshape(n, -1).
    # Inputs keep the producer's dtype: NO wrapper-side cast and NO padding --
    # either would add a full HBM round trip on the dominant traffic.
    x1 = obj1.reshape(n, IN_FEATS)
    x2 = obj2.reshape(n, IN_FEATS)
    x3 = obj3.reshape(n, IN_FEATS)

    # If the producer hands us a narrower float dtype (e.g. bf16), feed the
    # MXU in that dtype (accumulation stays f32).  The weight is tiny, so this
    # cast costs nothing relative to the 3 x 3200/row input reads.
    if x1.dtype != jnp.float32:
        w_eff = w_eff.astype(x1.dtype)

    b_tile = _choose_b_tile(n, b_tile_max)
    num_blocks = pl.cdiv(n, b_tile)          # ragged last block handled by Pallas

    def x_spec():
        return pl.BlockSpec((b_tile, IN_FEATS), lambda i: (i, 0))

    grid_spec = pltpu.PrefetchScalarGridSpec(
        num_scalar_prefetch=0,
        grid=(num_blocks,),
        in_specs=[
            x_spec(), x_spec(), x_spec(),
            pl.BlockSpec((IN_FEATS, OUT_FEATS), lambda i: (0, 0)),   # w_eff (resident)
            pl.BlockSpec((1, OUT_FEATS), lambda i: (0, 0)),          # b_eff (resident)
        ],
        out_specs=pl.BlockSpec((2, b_tile), lambda i: (0, i)),       # lane-dense
    )

    out = pl.pallas_call(
        _cod_kernel,
        out_shape=jax.ShapeDtypeStruct((2, n), jnp.float32),
        grid_spec=grid_spec,
        compiler_params=pltpu.CompilerParams(
            dimension_semantics=("parallel",),        # megacore-shard the batch
            vmem_limit_bytes=VMEM_LIMIT_BYTES,
        ),
    )(x1, x2, x3, w_eff, b_eff)

    return out[0], out[1]


def init_params(key):
    ks = jax.random.split(key, 6)
    w = jax.random.normal(ks[0], (IN_FEATS, OUT_FEATS), jnp.float32) * 0.02
    b = jax.random.normal(ks[1], (OUT_FEATS,), jnp.float32) * 0.01
    gamma = 1.0 + 0.1 * jax.random.normal(ks[2], (OUT_FEATS,), jnp.float32)
    beta = 0.1 * jax.random.normal(ks[3], (OUT_FEATS,), jnp.float32)
    mean = 0.1 * jax.random.normal(ks[4], (OUT_FEATS,), jnp.float32)
    var = jnp.abs(1.0 + 0.1 * jax.random.normal(ks[5], (OUT_FEATS,), jnp.float32))
    return (w, b, gamma, beta, mean, var)


def reference(obj1, obj2, obj3, params):
    # Pure-JAX mirror of the PyTorch forward (BatchNorm1d in eval mode).
    w, b, gamma, beta, mean, var = params
    n = obj1.shape[0]

    def mlp(x):
        h = x.reshape(n, IN_FEATS) @ w + b
        return (h - mean) / jnp.sqrt(var + BN_EPS) * gamma + beta

    def cossim(a, c):
        an = a / jnp.maximum(jnp.linalg.norm(a, axis=1, keepdims=True), NORM_EPS)
        cn = c / jnp.maximum(jnp.linalg.norm(c, axis=1, keepdims=True), NORM_EPS)
        return jnp.sum(an * cn, axis=1)

    f1, f2, f3 = mlp(obj1), mlp(obj2), mlp(obj3)
    return cossim(f1, f2), cossim(f2, f3)


if __name__ == "__main__":
    key = jax.random.PRNGKey(0)
    k1, k2, k3, kw, k5, k6, k7 = jax.random.split(key, 7)
    params = init_params(kw)

    # --- Small f32 case (single whole-array block path, matches module spec) ---
    n = 2
    obj1 = jax.random.normal(k1, (n, 32, 10, 10), jnp.float32)
    obj2 = jax.random.normal(k2, (n, 32, 10, 10), jnp.float32)
    obj3 = jax.random.normal(k3, (n, 32, 10, 10), jnp.float32)

    c12, c23 = compare_object_dist(obj1, obj2, obj3, params)
    jax.block_until_ready((c12, c23))
    r12, r23 = reference(obj1, obj2, obj3, params)
    assert c12.shape == (n,) and c23.shape == (n,)
    np.testing.assert_allclose(np.asarray(c12), np.asarray(r12), rtol=1e-3, atol=1e-3)
    np.testing.assert_allclose(np.asarray(c23), np.asarray(r23), rtol=1e-3, atol=1e-3)

    # --- Ragged multi-tile case (grid > 1, masked edge block, megacore split) ---
    n2 = 260
    o1 = jax.random.normal(k5, (n2, 32, 10, 10), jnp.float32)
    o2 = jax.random.normal(k6, (n2, 32, 10, 10), jnp.float32)
    o3 = jax.random.normal(k7, (n2, 32, 10, 10), jnp.float32)

    d12, d23 = compare_object_dist(o1, o2, o3, params)
    jax.block_until_ready((d12, d23))
    e12, e23 = reference(o1, o2, o3, params)
    assert d12.shape == (n2,) and d23.shape == (n2,)
    np.testing.assert_allclose(np.asarray(d12), np.asarray(e12), rtol=1e-3, atol=1e-3)
    np.testing.assert_allclose(np.asarray(d23), np.asarray(e23), rtol=1e-3, atol=1e-3)

    # --- bf16 producer path (inputs stay bf16 end-to-end; f32 accumulation) ---
    b1 = obj1.astype(jnp.bfloat16)
    b2 = obj2.astype(jnp.bfloat16)
    b3 = obj3.astype(jnp.bfloat16)
    f12, f23 = compare_object_dist(b1, b2, b3, params)
    jax.block_until_ready((f12, f23))
    g12, g23 = reference(b1.astype(jnp.float32), b2.astype(jnp.float32),
                         b3.astype(jnp.float32), params)
    np.testing.assert_allclose(np.asarray(f12), np.asarray(g12), rtol=2e-2, atol=2e-2)
    np.testing.assert_allclose(np.asarray(f23), np.asarray(g23), rtol=2e-2, atol=2e-2)

    print("KERNEL_OK")
</pallas_src>

<mosaic_0001>
module attributes {stable_mosaic.version = 11 : i64} {
  func.func @_cod_kernel(%arg0: i32, %arg1: memref<2x3200xf32, #tpu.memory_space<vmem>>, %arg2: memref<2x3200xf32, #tpu.memory_space<vmem>>, %arg3: memref<2x3200xf32, #tpu.memory_space<vmem>>, %arg4: memref<3200x64xf32, #tpu.memory_space<vmem>>, %arg5: memref<1x64xf32, #tpu.memory_space<vmem>>, %arg6: memref<2x2xf32, #tpu.memory_space<vmem>>) attributes {dimension_semantics = [#tpu.dimension_semantics<parallel>], iteration_bounds = array<i64: 1>, scalar_prefetch = 0 : i64, scratch_operands = 0 : i64, tpu.core_type = #tpu.core_type<tc>, window_params = [{transform_indices = @transform_0, window_bounds = array<i64: 2, 3200>}, {transform_indices = @transform_1, window_bounds = array<i64: 2, 3200>}, {transform_indices = @transform_2, window_bounds = array<i64: 2, 3200>}, {pipeline_mode = #tpu.pipeline_mode<synchronous>, transform_indices = @transform_3, window_bounds = array<i64: 3200, 64>}, {pipeline_mode = #tpu.pipeline_mode<synchronous>, transform_indices = @transform_4, window_bounds = array<i64: 1, 64>}, {transform_indices = @transform_5, window_bounds = array<i64: 2, 2>}]} {
    %c0 = arith.constant 0 : index
    %c0_0 = arith.constant 0 : index
    %0 = vector.load %arg4[%c0, %c0_0] : memref<3200x64xf32, #tpu.memory_space<vmem>>, vector<3200x64xf32>
    %c0_1 = arith.constant 0 : index
    %c0_2 = arith.constant 0 : index
    %1 = vector.load %arg5[%c0_1, %c0_2] : memref<1x64xf32, #tpu.memory_space<vmem>>, vector<1x64xf32>
    %cst = arith.constant 1.000000e+00 : f32
    %2 = vector.broadcast %cst : f32 to vector<1x64xf32>
    %c0_3 = arith.constant 0 : index
    %c0_4 = arith.constant 0 : index
    %3 = vector.load %arg1[%c0_3, %c0_4] : memref<2x3200xf32, #tpu.memory_space<vmem>>, vector<2x3200xf32>
    %cst_5 = arith.constant dense<0.000000e+00> : vector<2x64xf32>
    %4 = tpu.matmul %3, %0, %cst_5 {dimension_numbers = #tpu.dot_dimension_numbers<[1], [0], [0], [1], [0, 0, 1, 1], [], []>} : vector<2x3200xf32>, vector<3200x64xf32>, vector<2x64xf32> -> vector<2x64xf32>
    %5 = vector.broadcast %1 : vector<1x64xf32> to vector<2x64xf32>
    %6 = arith.addf %4, %5 : vector<2x64xf32>
    %c0_6 = arith.constant 0 : index
    %c0_7 = arith.constant 0 : index
    %7 = vector.load %arg2[%c0_6, %c0_7] : memref<2x3200xf32, #tpu.memory_space<vmem>>, vector<2x3200xf32>
    %cst_8 = arith.constant dense<0.000000e+00> : vector<2x64xf32>
    %8 = tpu.matmul %7, %0, %cst_8 {dimension_numbers = #tpu.dot_dimension_numbers<[1], [0], [0], [1], [0, 0, 1, 1], [], []>} : vector<2x3200xf32>, vector<3200x64xf32>, vector<2x64xf32> -> vector<2x64xf32>
    %9 = vector.broadcast %1 : vector<1x64xf32> to vector<2x64xf32>
    %10 = arith.addf %8, %9 : vector<2x64xf32>
    %c0_9 = arith.constant 0 : index
    %c0_10 = arith.constant 0 : index
    %11 = vector.load %arg3[%c0_9, %c0_10] : memref<2x3200xf32, #tpu.memory_space<vmem>>, vector<2x3200xf32>
    %cst_11 = arith.constant dense<0.000000e+00> : vector<2x64xf32>
    %12 = tpu.matmul %11, %0, %cst_11 {dimension_numbers = #tpu.dot_dimension_numbers<[1], [0], [0], [1], [0, 0, 1, 1], [], []>} : vector<2x3200xf32>, vector<3200x64xf32>, vector<2x64xf32> -> vector<2x64xf32>
    %13 = vector.broadcast %1 : vector<1x64xf32> to vector<2x64xf32>
    %14 = arith.addf %12, %13 : vector<2x64xf32>
    %15 = arith.mulf %6, %6 : vector<2x64xf32>
    %cst_12 = arith.constant dense<0.000000e+00> : vector<1x2xf32>
    %16 = tpu.matmul %2, %15, %cst_12 {dimension_numbers = #tpu.dot_dimension_numbers<[1], [1], [0], [0], [0, 0, 1, 0], [], []>} : vector<1x64xf32>, vector<2x64xf32>, vector<1x2xf32> -> vector<1x2xf32>
    %17 = arith.mulf %10, %10 : vector<2x64xf32>
    %cst_13 = arith.constant dense<0.000000e+00> : vector<1x2xf32>
    %18 = tpu.matmul %2, %17, %cst_13 {dimension_numbers = #tpu.dot_dimension_numbers<[1], [1], [0], [0], [0, 0, 1, 0], [], []>} : vector<1x64xf32>, vector<2x64xf32>, vector<1x2xf32> -> vector<1x2xf32>
    %19 = arith.mulf %14, %14 : vector<2x64xf32>
    %cst_14 = arith.constant dense<0.000000e+00> : vector<1x2xf32>
    %20 = tpu.matmul %2, %19, %cst_14 {dimension_numbers = #tpu.dot_dimension_numbers<[1], [1], [0], [0], [0, 0, 1, 0], [], []>} : vector<1x64xf32>, vector<2x64xf32>, vector<1x2xf32> -> vector<1x2xf32>
    %21 = arith.mulf %6, %10 : vector<2x64xf32>
    %cst_15 = arith.constant dense<0.000000e+00> : vector<1x2xf32>
    %22 = tpu.matmul %2, %21, %cst_15 {dimension_numbers = #tpu.dot_dimension_numbers<[1], [1], [0], [0], [0, 0, 1, 0], [], []>} : vector<1x64xf32>, vector<2x64xf32>, vector<1x2xf32> -> vector<1x2xf32>
    %23 = arith.mulf %10, %14 : vector<2x64xf32>
    %cst_16 = arith.constant dense<0.000000e+00> : vector<1x2xf32>
    %24 = tpu.matmul %2, %23, %cst_16 {dimension_numbers = #tpu.dot_dimension_numbers<[1], [1], [0], [0], [0, 0, 1, 0], [], []>} : vector<1x64xf32>, vector<2x64xf32>, vector<1x2xf32> -> vector<1x2xf32>
    %cst_17 = arith.constant 1.000000e-24 : f32
    %25 = vector.broadcast %cst_17 : f32 to vector<1x2xf32>
    %26 = arith.maximumf %16, %25 : vector<1x2xf32>
    %27 = math.rsqrt %26 : vector<1x2xf32>
    %cst_18 = arith.constant 1.000000e-24 : f32
    %28 = vector.broadcast %cst_18 : f32 to vector<1x2xf32>
    %29 = arith.maximumf %18, %28 : vector<1x2xf32>
    %30 = math.rsqrt %29 : vector<1x2xf32>
    %cst_19 = arith.constant 1.000000e-24 : f32
    %31 = vector.broadcast %cst_19 : f32 to vector<1x2xf32>
    %32 = arith.maximumf %20, %31 : vector<1x2xf32>
    %33 = math.rsqrt %32 : vector<1x2xf32>
    %34 = arith.mulf %22, %27 : vector<1x2xf32>
    %35 = arith.mulf %34, %30 : vector<1x2xf32>
    %c0_20 = arith.constant 0 : index
    %c0_21 = arith.constant 0 : index
    %36 = vector.load %arg6[%c0_20, %c0_21] : memref<2x2xf32, #tpu.memory_space<vmem>>, vector<1x2xf32>
    tpu.vector_store %arg6[%c0_20, %c0_21], %35 {strides = array<i32>} : memref<2x2xf32, #tpu.memory_space<vmem>>, vector<1x2xf32>,
    %37 = arith.mulf %24, %30 : vector<1x2xf32>
    %38 = arith.mulf %37, %33 : vector<1x2xf32>
    %c1 = arith.constant 1 : index
    %c0_22 = arith.constant 0 : index
    %39 = vector.load %arg6[%c1, %c0_22] : memref<2x2xf32, #tpu.memory_space<vmem>>, vector<1x2xf32>
    tpu.vector_store %arg6[%c1, %c0_22], %38 {strides = array<i32>} : memref<2x2xf32, #tpu.memory_space<vmem>>, vector<1x2xf32>,
    return
  }
  func.func @transform_0(%arg0: i32) -> (i32, i32) {
    %c0_i32 = arith.constant 0 : i32
    %c0_i32_0 = arith.constant 0 : i32
    return %arg0, %c0_i32 : i32, i32
  }
  func.func @transform_1(%arg0: i32) -> (i32, i32) {
    %c0_i32 = arith.constant 0 : i32
    %c0_i32_0 = arith.constant 0 : i32
    return %arg0, %c0_i32 : i32, i32
  }
  func.func @transform_2(%arg0: i32) -> (i32, i32) {
    %c0_i32 = arith.constant 0 : i32
    %c0_i32_0 = arith.constant 0 : i32
    return %arg0, %c0_i32 : i32, i32
  }
  func.func @transform_3(%arg0: i32) -> (i32, i32) {
    %c0_i32 = arith.constant 0 : i32
    %c0_i32_0 = arith.constant 0 : i32
    %c0_i32_1 = arith.constant 0 : i32
    return %c0_i32, %c0_i32_0 : i32, i32
  }
  func.func @transform_4(%arg0: i32) -> (i32, i32) {
    %c0_i32 = arith.constant 0 : i32
    %c0_i32_0 = arith.constant 0 : i32
    %c0_i32_1 = arith.constant 0 : i32
    return %c0_i32, %c0_i32_0 : i32, i32
  }
  func.func @transform_5(%arg0: i32) -> (i32, i32) {
    %c0_i32 = arith.constant 0 : i32
    %c0_i32_0 = arith.constant 0 : i32
    return %c0_i32, %arg0 : i32, i32
  }
}

</mosaic_0001>

<llo_original>
// kernel: tpu_custom_call.1
$region0: #{tpu_custom_call.1}
  #allocation0 [shape = 'u32[]', space=smem, size = 0x4, offset = 0x4, fixed_abs, tag = 'smem constant byte address 0x4 - core index']
  #allocation1 [shape = 'u32[144,128]{1,0:T(1,128)}', space=vmem, size = 0x12000, scoped, tag = 'internal scratch']
  %s0 = inlined_call_operand.vmem [shape: f32[2,3200], index: 0, kind: input, shape index: {}]
  %s1 = inlined_call_operand.vmem [shape: f32[2,3200], index: 1, kind: input, shape index: {}]
  %s2 = inlined_call_operand.vmem [shape: f32[2,3200], index: 2, kind: input, shape index: {}]
  %s3 = inlined_call_operand.vmem [shape: f32[3200,64], index: 3, kind: input, shape index: {}]
  %s4 = inlined_call_operand.vmem [shape: f32[1,64], index: 4, kind: input, shape index: {}]
  %s5 = inlined_call_operand.hbm [shape: f32[2,2], index: 5, kind: output, shape index: {}]
  %s6 = sld [smem:[#allocation0]]
  $region30: #{tpu_custom_call.1} parent=0
    _
  %s8 = ssub.s32 1, %s6
  %s9 = scalar_select 0, %s8, %s6
  $region1: #{tpu_custom_call.1} parent=0
    #allocation2 [shape = 'u8[1024]{0}', space=vmem, size = 0x400, scoped, tag = 'output window, operand 0, single buffered']
    #allocation3 [shape = 's32[1]{0}', space=sflag, size = 0x4, scoped, tag = 'scoped memory for tpu_custom_call.1']
    %10 = vsyncpa [#allocation3], 0
    // Predicated region
    $region2: #{tpu_custom_call.1} parent=1 // pred_check
      _
    $region3: #{tpu_custom_call.1} parent=1 // pred_check_branch
      %12 = sbr.rel (0) target = $region5
    $region4: #{tpu_custom_call.1} parent=1 // pred_region
      _
    $region5: #{tpu_custom_call.1} parent=1 // pred_fallthru
      _
    // Predicated region
    $region6: #{tpu_custom_call.1} parent=1 // pred_check
      _
    $region7: #{tpu_custom_call.1} parent=1 // pred_check_branch
      %14 = sbr.rel (0) target = $region9
    $region8: #{tpu_custom_call.1} parent=1 // pred_region
      _
    $region9: #{tpu_custom_call.1} parent=1 // pred_fallthru
      _
    // Predicated region
    $region10: #{tpu_custom_call.1} parent=1 // pred_check
      _
    $region11: #{tpu_custom_call.1} parent=1 // pred_check_branch
      %16 = sbr.rel (0) target = $region13
    $region12: #{tpu_custom_call.1} parent=1 // pred_region
      _
    $region13: #{tpu_custom_call.1} parent=1 // pred_fallthru
      _
    // Predicated region
    $region14: #{tpu_custom_call.1} parent=1 // pred_check
      _
    $region15: #{tpu_custom_call.1} parent=1 // pred_check_branch
      %18 = sbr.rel (0) target = $region17
    $region16: #{tpu_custom_call.1} parent=1 // pred_region
      _
    $region17: #{tpu_custom_call.1} parent=1 // pred_fallthru
      _
    // Predicated region
    $region18: #{tpu_custom_call.1} parent=1 // pred_check
      _
    $region19: #{tpu_custom_call.1} parent=1 // pred_check_branch
      %20 = sbr.rel (0) target = $region21
    $region20: #{tpu_custom_call.1} parent=1 // pred_region
      _
    $region21: #{tpu_custom_call.1} parent=1 // pred_fallthru
      _
    %v21 = vld [vmem:[%s3] sm:$0xff]
    %v22 = vld [vmem:[%s3 + $0x8] sm:$0xff]
    %v23 = vld [vmem:[%s3 + $0x10] sm:$0xff]
    %v24 = vld [vmem:[%s3 + $0x18] sm:$0xff]
    %v25 = vld [vmem:[%s3 + $0x20] sm:$0xff]
    %v26 = vld [vmem:[%s3 + $0x28] sm:$0xff]
    %v27 = vld [vmem:[%s3 + $0x30] sm:$0xff]
    %v28 = vld [vmem:[%s3 + $0x38] sm:$0xff]
    %v29 = vld [vmem:[%s3 + $0x40] sm:$0xff]
    %v30 = vld [vmem:[%s3 + $0x48] sm:$0xff]
    %v31 = vld [vmem:[%s3 + $0x50] sm:$0xff]
    %v32 = vld [vmem:[%s3 + $0x58] sm:$0xff]
    %v33 = vld [vmem:[%s3 + $0x60] sm:$0xff]
    %v34 = vld [vmem:[%s3 + $0x68] sm:$0xff]
    %v35 = vld [vmem:[%s3 + $0x70] sm:$0xff]
    %v36 = vld [vmem:[%s3 + $0x78] sm:$0xff]
    %v37 = vld [vmem:[%s3 + $0x80] sm:$0xff]
    %v38 = vld [vmem:[%s3 + $0x88] sm:$0xff]
    %v39 = vld [vmem:[%s3 + $0x90] sm:$0xff]
    %v40 = vld [vmem:[%s3 + $0x98] sm:$0xff]
    %v41 = vld [vmem:[%s3 + $0xa0] sm:$0xff]
    %v42 = vld [vmem:[%s3 + $0xa8] sm:$0xff]
    %v43 = vld [vmem:[%s3 + $0xb0] sm:$0xff]
    %v44 = vld [vmem:[%s3 + $0xb8] sm:$0xff]
    %v45 = vld [vmem:[%s3 + $0xc0] sm:$0xff]
    %v46 = vld [vmem:[%s3 + $0xc8] sm:$0xff]
    %v47 = vld [vmem:[%s3 + $0xd0] sm:$0xff]
    %v48 = vld [vmem:[%s3 + $0xd8] sm:$0xff]
    %v49 = vld [vmem:[%s3 + $0xe0] sm:$0xff]
    %v50 = vld [vmem:[%s3 + $0xe8] sm:$0xff]
    %v51 = vld [vmem:[%s3 + $0xf0] sm:$0xff]
    %v52 = vld [vmem:[%s3 + $0xf8] sm:$0xff]
    %v53 = vld [vmem:[%s3 + $0x100] sm:$0xff]
    %v54 = vld [vmem:[%s3 + $0x108] sm:$0xff]
    %v55 = vld [vmem:[%s3 + $0x110] sm:$0xff]
    %v56 = vld [vmem:[%s3 + $0x118] sm:$0xff]
    %v57 = vld [vmem:[%s3 + $0x120] sm:$0xff]
    %v58 = vld [vmem:[%s3 + $0x128] sm:$0xff]
    %v59 = vld [vmem:[%s3 + $0x130] sm:$0xff]
    %v60 = vld [vmem:[%s3 + $0x138] sm:$0xff]
    %v61 = vld [vmem:[%s3 + $0x140] sm:$0xff]
    %v62 = vld [vmem:[%s3 + $0x148] sm:$0xff]
    %v63 = vld [vmem:[%s3 + $0x150] sm:$0xff]
    %v64 = vld [vmem:[%s3 + $0x158] sm:$0xff]
    %v65 = vld [vmem:[%s3 + $0x160] sm:$0xff]
    %v66 = vld [vmem:[%s3 + $0x168] sm:$0xff]
    %v67 = vld [vmem:[%s3 + $0x170] sm:$0xff]
    %v68 = vld [vmem:[%s3 + $0x178] sm:$0xff]
    %v69 = vld [vmem:[%s3 + $0x180] sm:$0xff]
    %v70 = vld [vmem:[%s3 + $0x188] sm:$0xff]
    %v71 = vld [vmem:[%s3 + $0x190] sm:$0xff]
    %v72 = vld [vmem:[%s3 + $0x198] sm:$0xff]
    %v73 = vld [vmem:[%s3 + $0x1a0] sm:$0xff]
    %v74 = vld [vmem:[%s3 + $0x1a8] sm:$0xff]
    %v75 = vld [vmem:[%s3 + $0x1b0] sm:$0xff]
    %v76 = vld [vmem:[%s3 + $0x1b8] sm:$0xff]
    %v77 = vld [vmem:[%s3 + $0x1c0] sm:$0xff]
    %v78 = vld [vmem:[%s3 + $0x1c8] sm:$0xff]
    %v79 = vld [vmem:[%s3 + $0x1d0] sm:$0xff]
    %v80 = vld [vmem:[%s3 + $0x1d8] sm:$0xff]
    %v81 = vld [vmem:[%s3 + $0x1e0] sm:$0xff]
    %v82 = vld [vmem:[%s3 + $0x1e8] sm:$0xff]
    %v83 = vld [vmem:[%s3 + $0x1f0] sm:$0xff]
    %v84 = vld [vmem:[%s3 + $0x1f8] sm:$0xff]
    %v85 = vld [vmem:[%s3 + $0x200] sm:$0xff]
    %v86 = vld [vmem:[%s3 + $0x208] sm:$0xff]
    %v87 = vld [vmem:[%s3 + $0x210] sm:$0xff]
    %v88 = vld [vmem:[%s3 + $0x218] sm:$0xff]
    %v89 = vld [vmem:[%s3 + $0x220] sm:$0xff]
    %v90 = vld [vmem:[%s3 + $0x228] sm:$0xff]
    %v91 = vld [vmem:[%s3 + $0x230] sm:$0xff]
    %v92 = vld [vmem:[%s3 + $0x238] sm:$0xff]
    %v93 = vld [vmem:[%s3 + $0x240] sm:$0xff]
    %v94 = vld [vmem:[%s3 + $0x248] sm:$0xff]
    %v95 = vld [vmem:[%s3 + $0x250] sm:$0xff]
    %v96 = vld [vmem:[%s3 + $0x258] sm:$0xff]
    %v97 = vld [vmem:[%s3 + $0x260] sm:$0xff]
    %v98 = vld [vmem:[%s3 + $0x268] sm:$0xff]
    %v99 = vld [vmem:[%s3 + $0x270] sm:$0xff]
    %v100 = vld [vmem:[%s3 + $0x278] sm:$0xff]
    %v101 = vld [vmem:[%s3 + $0x280] sm:$0xff]
    %v102 = vld [vmem:[%s3 + $0x288] sm:$0xff]
    %v103 = vld [vmem:[%s3 + $0x290] sm:$0xff]
    %v104 = vld [vmem:[%s3 + $0x298] sm:$0xff]
    %v105 = vld [vmem:[%s3 + $0x2a0] sm:$0xff]
    %v106 = vld [vmem:[%s3 + $0x2a8] sm:$0xff]
    %v107 = vld [vmem:[%s3 + $0x2b0] sm:$0xff]
    %v108 = vld [vmem:[%s3 + $0x2b8] sm:$0xff]
    %v109 = vld [vmem:[%s3 + $0x2c0] sm:$0xff]
    %v110 = vld [vmem:[%s3 + $0x2c8] sm:$0xff]
    %v111 = vld [vmem:[%s3 + $0x2d0] sm:$0xff]
    %v112 = vld [vmem:[%s3 + $0x2d8] sm:$0xff]
    %v113 = vld [vmem:[%s3 + $0x2e0] sm:$0xff]
    %v114 = vld [vmem:[%s3 + $0x2e8] sm:$0xff]
    %v115 = vld [vmem:[%s3 + $0x2f0] sm:$0xff]
    %v116 = vld [vmem:[%s3 + $0x2f8] sm:$0xff]
    %v117 = vld [vmem:[%s3 + $0x300] sm:$0xff]
    %v118 = vld [vmem:[%s3 + $0x308] sm:$0xff]
    %v119 = vld [vmem:[%s3 + $0x310] sm:$0xff]
    %v120 = vld [vmem:[%s3 + $0x318] sm:$0xff]
    %v121 = vld [vmem:[%s3 + $0x320] sm:$0xff]
    %v122 = vld [vmem:[%s3 + $0x328] sm:$0xff]
    %v123 = vld [vmem:[%s3 + $0x330] sm:$0xff]
    %v124 = vld [vmem:[%s3 + $0x338] sm:$0xff]
    %v125 = vld [vmem:[%s3 + $0x340] sm:$0xff]
    %v126 = vld [vmem:[%s3 + $0x348] sm:$0xff]
    %v127 = vld [vmem:[%s3 + $0x350] sm:$0xff]
    %v128 = vld [vmem:[%s3 + $0x358] sm:$0xff]
    %v129 = vld [vmem:[%s3 + $0x360] sm:$0xff]
    %v130 = vld [vmem:[%s3 + $0x368] sm:$0xff]
    %v131 = vld [vmem:[%s3 + $0x370] sm:$0xff]
    %v132 = vld [vmem:[%s3 + $0x378] sm:$0xff]
    %v133 = vld [vmem:[%s3 + $0x380] sm:$0xff]
    %v134 = vld [vmem:[%s3 + $0x388] sm:$0xff]
    %v135 = vld [vmem:[%s3 + $0x390] sm:$0xff]
    %v136 = vld [vmem:[%s3 + $0x398] sm:$0xff]
    %v137 = vld [vmem:[%s3 + $0x3a0] sm:$0xff]
    %v138 = vld [vmem:[%s3 + $0x3a8] sm:$0xff]
    %v139 = vld [vmem:[%s3 + $0x3b0] sm:$0xff]
    %v140 = vld [vmem:[%s3 + $0x3b8] sm:$0xff]
    %v141 = vld [vmem:[%s3 + $0x3c0] sm:$0xff]
    %v142 = vld [vmem:[%s3 + $0x3c8] sm:$0xff]
    %v143 = vld [vmem:[%s3 + $0x3d0] sm:$0xff]
    %v144 = vld [vmem:[%s3 + $0x3d8] sm:$0xff]
    %v145 = vld [vmem:[%s3 + $0x3e0] sm:$0xff]
    %v146 = vld [vmem:[%s3 + $0x3e8] sm:$0xff]
    %v147 = vld [vmem:[%s3 + $0x3f0] sm:$0xff]
    %v148 = vld [vmem:[%s3 + $0x3f8] sm:$0xff]
    %v149 = vld [vmem:[%s3 + $0x400] sm:$0xff]
    %v150 = vld [vmem:[%s3 + $0x408] sm:$0xff]
    %v151 = vld [vmem:[%s3 + $0x410] sm:$0xff]
    %v152 = vld [vmem:[%s3 + $0x418] sm:$0xff]
    %v153 = vld [vmem:[%s3 + $0x420] sm:$0xff]
    %v154 = vld [vmem:[%s3 + $0x428] sm:$0xff]
    %v155 = vld [vmem:[%s3 + $0x430] sm:$0xff]
    %v156 = vld [vmem:[%s3 + $0x438] sm:$0xff]
    %v157 = vld [vmem:[%s3 + $0x440] sm:$0xff]
    %v158 = vld [vmem:[%s3 + $0x448] sm:$0xff]
    %v159 = vld [vmem:[%s3 + $0x450] sm:$0xff]
    %v160 = vld [vmem:[%s3 + $0x458] sm:$0xff]
    %v161 = vld [vmem:[%s3 + $0x460] sm:$0xff]
    %v162 = vld [vmem:[%s3 + $0x468] sm:$0xff]
    %v163 = vld [vmem:[%s3 + $0x470] sm:$0xff]
    %v164 = vld [vmem:[%s3 + $0x478] sm:$0xff]
    %v165 = vld [vmem:[%s3 + $0x480] sm:$0xff]
    %v166 = vld [vmem:[%s3 + $0x488] sm:$0xff]
    %v167 = vld [vmem:[%s3 + $0x490] sm:$0xff]
    %v168 = vld [vmem:[%s3 + $0x498] sm:$0xff]
    %v169 = vld [vmem:[%s3 + $0x4a0] sm:$0xff]
    %v170 = vld [vmem:[%s3 + $0x4a8] sm:$0xff]
    %v171 = vld [vmem:[%s3 + $0x4b0] sm:$0xff]
    %v172 = vld [vmem:[%s3 + $0x4b8] sm:$0xff]
    %v173 = vld [vmem:[%s3 + $0x4c0] sm:$0xff]
    %v174 = vld [vmem:[%s3 + $0x4c8] sm:$0xff]
    %v175 = vld [vmem:[%s3 + $0x4d0] sm:$0xff]
    %v176 = vld [vmem:[%s3 + $0x4d8] sm:$0xff]
    %v177 = vld [vmem:[%s3 + $0x4e0] sm:$0xff]
    %v178 = vld [vmem:[%s3 + $0x4e8] sm:$0xff]
    %v179 = vld [vmem:[%s3 + $0x4f0] sm:$0xff]
    %v180 = vld [vmem:[%s3 + $0x4f8] sm:$0xff]
    %v181 = vld [vmem:[%s3 + $0x500] sm:$0xff]
    %v182 = vld [vmem:[%s3 + $0x508] sm:$0xff]
    %v183 = vld [vmem:[%s3 + $0x510] sm:$0xff]
    %v184 = vld [vmem:[%s3 + $0x518] sm:$0xff]
    %v185 = vld [vmem:[%s3 + $0x520] sm:$0xff]
    %v186 = vld [vmem:[%s3 + $0x528] sm:$0xff]
    %v187 = vld [vmem:[%s3 + $0x530] sm:$0xff]
    %v188 = vld [vmem:[%s3 + $0x538] sm:$0xff]
    %v189 = vld [vmem:[%s3 + $0x540] sm:$0xff]
    %v190 = vld [vmem:[%s3 + $0x548] sm:$0xff]
    %v191 = vld [vmem:[%s3 + $0x550] sm:$0xff]
    %v192 = vld [vmem:[%s3 + $0x558] sm:$0xff]
    %v193 = vld [vmem:[%s3 + $0x560] sm:$0xff]
    %v194 = vld [vmem:[%s3 + $0x568] sm:$0xff]
    %v195 = vld [vmem:[%s3 + $0x570] sm:$0xff]
    %v196 = vld [vmem:[%s3 + $0x578] sm:$0xff]
    %v197 = vld [vmem:[%s3 + $0x580] sm:$0xff]
    %v198 = vld [vmem:[%s3 + $0x588] sm:$0xff]
    %v199 = vld [vmem:[%s3 + $0x590] sm:$0xff]
    %v200 = vld [vmem:[%s3 + $0x598] sm:$0xff]
    %v201 = vld [vmem:[%s3 + $0x5a0] sm:$0xff]
    %v202 = vld [vmem:[%s3 + $0x5a8] sm:$0xff]
    %v203 = vld [vmem:[%s3 + $0x5b0] sm:$0xff]
    %v204 = vld [vmem:[%s3 + $0x5b8] sm:$0xff]
    %v205 = vld [vmem:[%s3 + $0x5c0] sm:$0xff]
    %v206 = vld [vmem:[%s3 + $0x5c8] sm:$0xff]
    %v207 = vld [vmem:[%s3 + $0x5d0] sm:$0xff]
    %v208 = vld [vmem:[%s3 + $0x5d8] sm:$0xff]
    %v209 = vld [vmem:[%s3 + $0x5e0] sm:$0xff]
    %v210 = vld [vmem:[%s3 + $0x5e8] sm:$0xff]
    %v211 = vld [vmem:[%s3 + $0x5f0] sm:$0xff]
    %v212 = vld [vmem:[%s3 + $0x5f8] sm:$0xff]
    %v213 = vld [vmem:[%s3 + $0x600] sm:$0xff]
    %v214 = vld [vmem:[%s3 + $0x608] sm:$0xff]
    %v215 = vld [vmem:[%s3 + $0x610] sm:$0xff]
    %v216 = vld [vmem:[%s3 + $0x618] sm:$0xff]
    %v217 = vld [vmem:[%s3 + $0x620] sm:$0xff]
    %v218 = vld [vmem:[%s3 + $0x628] sm:$0xff]
    %v219 = vld [vmem:[%s3 + $0x630] sm:$0xff]
    %v220 = vld [vmem:[%s3 + $0x638] sm:$0xff]
    %v221 = vld [vmem:[%s3 + $0x640] sm:$0xff]
    %v222 = vld [vmem:[%s3 + $0x648] sm:$0xff]
    %v223 = vld [vmem:[%s3 + $0x650] sm:$0xff]
    %v224 = vld [vmem:[%s3 + $0x658] sm:$0xff]
    %v225 = vld [vmem:[%s3 + $0x660] sm:$0xff]
    %v226 = vld [vmem:[%s3 + $0x668] sm:$0xff]
    %v227 = vld [vmem:[%s3 + $0x670] sm:$0xff]
    %v228 = vld [vmem:[%s3 + $0x678] sm:$0xff]
    %v229 = vld [vmem:[%s3 + $0x680] sm:$0xff]
    %v230 = vld [vmem:[%s3 + $0x688] sm:$0xff]
    %v231 = vld [vmem:[%s3 + $0x690] sm:$0xff]
    %v232 = vld [vmem:[%s3 + $0x698] sm:$0xff]
    %v233 = vld [vmem:[%s3 + $0x6a0] sm:$0xff]
    %v234 = vld [vmem:[%s3 + $0x6a8] sm:$0xff]
    %v235 = vld [vmem:[%s3 + $0x6b0] sm:$0xff]
    %v236 = vld [vmem:[%s3 + $0x6b8] sm:$0xff]
    %v237 = vld [vmem:[%s3 + $0x6c0] sm:$0xff]
    %v238 = vld [vmem:[%s3 + $0x6c8] sm:$0xff]
    %v239 = vld [vmem:[%s3 + $0x6d0] sm:$0xff]
    %v240 = vld [vmem:[%s3 + $0x6d8] sm:$0xff]
    %v241 = vld [vmem:[%s3 + $0x6e0] sm:$0xff]
    %v242 = vld [vmem:[%s3 + $0x6e8] sm:$0xff]
    %v243 = vld [vmem:[%s3 + $0x6f0] sm:$0xff]
    %v244 = vld [vmem:[%s3 + $0x6f8] sm:$0xff]
    %v245 = vld [vmem:[%s3 + $0x700] sm:$0xff]
    %v246 = vld [vmem:[%s3 + $0x708] sm:$0xff]
    %v247 = vld [vmem:[%s3 + $0x710] sm:$0xff]
    %v248 = vld [vmem:[%s3 + $0x718] sm:$0xff]
    %v249 = vld [vmem:[%s3 + $0x720] sm:$0xff]
    %v250 = vld [vmem:[%s3 + $0x728] sm:$0xff]
    %v251 = vld [vmem:[%s3 + $0x730] sm:$0xff]
    %v252 = vld [vmem:[%s3 + $0x738] sm:$0xff]
    %v253 = vld [vmem:[%s3 + $0x740] sm:$0xff]
    %v254 = vld [vmem:[%s3 + $0x748] sm:$0xff]
    %v255 = vld [vmem:[%s3 + $0x750] sm:$0xff]
    %v256 = vld [vmem:[%s3 + $0x758] sm:$0xff]
    %v257 = vld [vmem:[%s3 + $0x760] sm:$0xff]
    %v258 = vld [vmem:[%s3 + $0x768] sm:$0xff]
    %v259 = vld [vmem:[%s3 + $0x770] sm:$0xff]
    %v260 = vld [vmem:[%s3 + $0x778] sm:$0xff]
    %v261 = vld [vmem:[%s3 + $0x780] sm:$0xff]
    %v262 = vld [vmem:[%s3 + $0x788] sm:$0xff]
    %v263 = vld [vmem:[%s3 + $0x790] sm:$0xff]
    %v264 = vld [vmem:[%s3 + $0x798] sm:$0xff]
    %v265 = vld [vmem:[%s3 + $0x7a0] sm:$0xff]
    %v266 = vld [vmem:[%s3 + $0x7a8] sm:$0xff]
    %v267 = vld [vmem:[%s3 + $0x7b0] sm:$0xff]
    %v268 = vld [vmem:[%s3 + $0x7b8] sm:$0xff]
    %v269 = vld [vmem:[%s3 + $0x7c0] sm:$0xff]
    %v270 = vld [vmem:[%s3 + $0x7c8] sm:$0xff]
    %v271 = vld [vmem:[%s3 + $0x7d0] sm:$0xff]
    %v272 = vld [vmem:[%s3 + $0x7d8] sm:$0xff]
    %v273 = vld [vmem:[%s3 + $0x7e0] sm:$0xff]
    %v274 = vld [vmem:[%s3 + $0x7e8] sm:$0xff]
    %v275 = vld [vmem:[%s3 + $0x7f0] sm:$0xff]
    %v276 = vld [vmem:[%s3 + $0x7f8] sm:$0xff]
    %v277 = vld [vmem:[%s3 + $0x800] sm:$0xff]
    %v278 = vld [vmem:[%s3 + $0x808] sm:$0xff]
    %v279 = vld [vmem:[%s3 + $0x810] sm:$0xff]
    %v280 = vld [vmem:[%s3 + $0x818] sm:$0xff]
    %v281 = vld [vmem:[%s3 + $0x820] sm:$0xff]
    %v282 = vld [vmem:[%s3 + $0x828] sm:$0xff]
    %v283 = vld [vmem:[%s3 + $0x830] sm:$0xff]
    %v284 = vld [vmem:[%s3 + $0x838] sm:$0xff]
    %v285 = vld [vmem:[%s3 + $0x840] sm:$0xff]
    %v286 = vld [vmem:[%s3 + $0x848] sm:$0xff]
    %v287 = vld [vmem:[%s3 + $0x850] sm:$0xff]
    %v288 = vld [vmem:[%s3 + $0x858] sm:$0xff]
    %v289 = vld [vmem:[%s3 + $0x860] sm:$0xff]
    %v290 = vld [vmem:[%s3 + $0x868] sm:$0xff]
    %v291 = vld [vmem:[%s3 + $0x870] sm:$0xff]
    %v292 = vld [vmem:[%s3 + $0x878] sm:$0xff]
    %v293 = vld [vmem:[%s3 + $0x880] sm:$0xff]
    %v294 = vld [vmem:[%s3 + $0x888] sm:$0xff]
    %v295 = vld [vmem:[%s3 + $0x890] sm:$0xff]
    %v296 = vld [vmem:[%s3 + $0x898] sm:$0xff]
    %v297 = vld [vmem:[%s3 + $0x8a0] sm:$0xff]
    %v298 = vld [vmem:[%s3 + $0x8a8] sm:$0xff]
    %v299 = vld [vmem:[%s3 + $0x8b0] sm:$0xff]
    %v300 = vld [vmem:[%s3 + $0x8b8] sm:$0xff]
    %v301 = vld [vmem:[%s3 + $0x8c0] sm:$0xff]
    %v302 = vld [vmem:[%s3 + $0x8c8] sm:$0xff]
    %v303 = vld [vmem:[%s3 + $0x8d0] sm:$0xff]
    %v304 = vld [vmem:[%s3 + $0x8d8] sm:$0xff]
    %v305 = vld [vmem:[%s3 + $0x8e0] sm:$0xff]
    %v306 = vld [vmem:[%s3 + $0x8e8] sm:$0xff]
    %v307 = vld [vmem:[%s3 + $0x8f0] sm:$0xff]
    %v308 = vld [vmem:[%s3 + $0x8f8] sm:$0xff]
    %v309 = vld [vmem:[%s3 + $0x900] sm:$0xff]
    %v310 = vld [vmem:[%s3 + $0x908] sm:$0xff]
    %v311 = vld [vmem:[%s3 + $0x910] sm:$0xff]
    %v312 = vld [vmem:[%s3 + $0x918] sm:$0xff]
    %v313 = vld [vmem:[%s3 + $0x920] sm:$0xff]
    %v314 = vld [vmem:[%s3 + $0x928] sm:$0xff]
    %v315 = vld [vmem:[%s3 + $0x930] sm:$0xff]
    %v316 = vld [vmem:[%s3 + $0x938] sm:$0xff]
    %v317 = vld [vmem:[%s3 + $0x940] sm:$0xff]
    %v318 = vld [vmem:[%s3 + $0x948] sm:$0xff]
    %v319 = vld [vmem:[%s3 + $0x950] sm:$0xff]
    %v320 = vld [vmem:[%s3 + $0x958] sm:$0xff]
    %v321 = vld [vmem:[%s3 + $0x960] sm:$0xff]
    %v322 = vld [vmem:[%s3 + $0x968] sm:$0xff]
    %v323 = vld [vmem:[%s3 + $0x970] sm:$0xff]
    %v324 = vld [vmem:[%s3 + $0x978] sm:$0xff]
    %v325 = vld [vmem:[%s3 + $0x980] sm:$0xff]
    %v326 = vld [vmem:[%s3 + $0x988] sm:$0xff]
    %v327 = vld [vmem:[%s3 + $0x990] sm:$0xff]
    %v328 = vld [vmem:[%s3 + $0x998] sm:$0xff]
    %v329 = vld [vmem:[%s3 + $0x9a0] sm:$0xff]
    %v330 = vld [vmem:[%s3 + $0x9a8] sm:$0xff]
    %v331 = vld [vmem:[%s3 + $0x9b0] sm:$0xff]
    %v332 = vld [vmem:[%s3 + $0x9b8] sm:$0xff]
    %v333 = vld [vmem:[%s3 + $0x9c0] sm:$0xff]
    %v334 = vld [vmem:[%s3 + $0x9c8] sm:$0xff]
    %v335 = vld [vmem:[%s3 + $0x9d0] sm:$0xff]
    %v336 = vld [vmem:[%s3 + $0x9d8] sm:$0xff]
    %v337 = vld [vmem:[%s3 + $0x9e0] sm:$0xff]
    %v338 = vld [vmem:[%s3 + $0x9e8] sm:$0xff]
    %v339 = vld [vmem:[%s3 + $0x9f0] sm:$0xff]
    %v340 = vld [vmem:[%s3 + $0x9f8] sm:$0xff]
    %v341 = vld [vmem:[%s3 + $0xa00] sm:$0xff]
    %v342 = vld [vmem:[%s3 + $0xa08] sm:$0xff]
    %v343 = vld [vmem:[%s3 + $0xa10] sm:$0xff]
    %v344 = vld [vmem:[%s3 + $0xa18] sm:$0xff]
    %v345 = vld [vmem:[%s3 + $0xa20] sm:$0xff]
    %v346 = vld [vmem:[%s3 + $0xa28] sm:$0xff]
    %v347 = vld [vmem:[%s3 + $0xa30] sm:$0xff]
    %v348 = vld [vmem:[%s3 + $0xa38] sm:$0xff]
    %v349 = vld [vmem:[%s3 + $0xa40] sm:$0xff]
    %v350 = vld [vmem:[%s3 + $0xa48] sm:$0xff]
    %v351 = vld [vmem:[%s3 + $0xa50] sm:$0xff]
    %v352 = vld [vmem:[%s3 + $0xa58] sm:$0xff]
    %v353 = vld [vmem:[%s3 + $0xa60] sm:$0xff]
    %v354 = vld [vmem:[%s3 + $0xa68] sm:$0xff]
    %v355 = vld [vmem:[%s3 + $0xa70] sm:$0xff]
    %v356 = vld [vmem:[%s3 + $0xa78] sm:$0xff]
    %v357 = vld [vmem:[%s3 + $0xa80] sm:$0xff]
    %v358 = vld [vmem:[%s3 + $0xa88] sm:$0xff]
    %v359 = vld [vmem:[%s3 + $0xa90] sm:$0xff]
    %v360 = vld [vmem:[%s3 + $0xa98] sm:$0xff]
    %v361 = vld [vmem:[%s3 + $0xaa0] sm:$0xff]
    %v362 = vld [vmem:[%s3 + $0xaa8] sm:$0xff]
    %v363 = vld [vmem:[%s3 + $0xab0] sm:$0xff]
    %v364 = vld [vmem:[%s3 + $0xab8] sm:$0xff]
    %v365 = vld [vmem:[%s3 + $0xac0] sm:$0xff]
    %v366 = vld [vmem:[%s3 + $0xac8] sm:$0xff]
    %v367 = vld [vmem:[%s3 + $0xad0] sm:$0xff]
    %v368 = vld [vmem:[%s3 + $0xad8] sm:$0xff]
    %v369 = vld [vmem:[%s3 + $0xae0] sm:$0xff]
    %v370 = vld [vmem:[%s3 + $0xae8] sm:$0xff]
    %v371 = vld [vmem:[%s3 + $0xaf0] sm:$0xff]
    %v372 = vld [vmem:[%s3 + $0xaf8] sm:$0xff]
    %v373 = vld [vmem:[%s3 + $0xb00] sm:$0xff]
    %v374 = vld [vmem:[%s3 + $0xb08] sm:$0xff]
    %v375 = vld [vmem:[%s3 + $0xb10] sm:$0xff]
    %v376 = vld [vmem:[%s3 + $0xb18] sm:$0xff]
    %v377 = vld [vmem:[%s3 + $0xb20] sm:$0xff]
    %v378 = vld [vmem:[%s3 + $0xb28] sm:$0xff]
    %v379 = vld [vmem:[%s3 + $0xb30] sm:$0xff]
    %v380 = vld [vmem:[%s3 + $0xb38] sm:$0xff]
    %v381 = vld [vmem:[%s3 + $0xb40] sm:$0xff]
    %v382 = vld [vmem:[%s3 + $0xb48] sm:$0xff]
    %v383 = vld [vmem:[%s3 + $0xb50] sm:$0xff]
    %v384 = vld [vmem:[%s3 + $0xb58] sm:$0xff]
    %v385 = vld [vmem:[%s3 + $0xb60] sm:$0xff]
    %v386 = vld [vmem:[%s3 + $0xb68] sm:$0xff]
    %v387 = vld [vmem:[%s3 + $0xb70] sm:$0xff]
    %v388 = vld [vmem:[%s3 + $0xb78] sm:$0xff]
    %v389 = vld [vmem:[%s3 + $0xb80] sm:$0xff]
    %v390 = vld [vmem:[%s3 + $0xb88] sm:$0xff]
    %v391 = vld [vmem:[%s3 + $0xb90] sm:$0xff]
    %v392 = vld [vmem:[%s3 + $0xb98] sm:$0xff]
    %v393 = vld [vmem:[%s3 + $0xba0] sm:$0xff]
    %v394 = vld [vmem:[%s3 + $0xba8] sm:$0xff]
    %v395 = vld [vmem:[%s3 + $0xbb0] sm:$0xff]
    %v396 = vld [vmem:[%s3 + $0xbb8] sm:$0xff]
    %v397 = vld [vmem:[%s3 + $0xbc0] sm:$0xff]
    %v398 = vld [vmem:[%s3 + $0xbc8] sm:$0xff]
    %v399 = vld [vmem:[%s3 + $0xbd0] sm:$0xff]
    %v400 = vld [vmem:[%s3 + $0xbd8] sm:$0xff]
    %v401 = vld [vmem:[%s3 + $0xbe0] sm:$0xff]
    %v402 = vld [vmem:[%s3 + $0xbe8] sm:$0xff]
    %v403 = vld [vmem:[%s3 + $0xbf0] sm:$0xff]
    %v404 = vld [vmem:[%s3 + $0xbf8] sm:$0xff]
    %v405 = vld [vmem:[%s3 + $0xc00] sm:$0xff]
    %v406 = vld [vmem:[%s3 + $0xc08] sm:$0xff]
    %v407 = vld [vmem:[%s3 + $0xc10] sm:$0xff]
    %v408 = vld [vmem:[%s3 + $0xc18] sm:$0xff]
    %v409 = vld [vmem:[%s3 + $0xc20] sm:$0xff]
    %v410 = vld [vmem:[%s3 + $0xc28] sm:$0xff]
    %v411 = vld [vmem:[%s3 + $0xc30] sm:$0xff]
    %v412 = vld [vmem:[%s3 + $0xc38] sm:$0xff]
    %v413 = vld [vmem:[%s3 + $0xc40] sm:$0xff]
    %v414 = vld [vmem:[%s3 + $0xc48] sm:$0xff]
    %v415 = vld [vmem:[%s3 + $0xc50] sm:$0xff]
    %v416 = vld [vmem:[%s3 + $0xc58] sm:$0xff]
    %v417 = vld [vmem:[%s3 + $0xc60] sm:$0xff]
    %v418 = vld [vmem:[%s3 + $0xc68] sm:$0xff]
    %v419 = vld [vmem:[%s3 + $0xc70] sm:$0xff]
    %v420 = vld [vmem:[%s3 + $0xc78] sm:$0xff]
    %v421 = vld [vmem:[%s4] sm:$0x1]
    %v422 = vld [vmem:[%s0] sm:$0xff]
    %v423 = vld [vmem:[%s0 + $0x8] sm:$0xff]
    %v424 = vld [vmem:[%s0 + $0x10] sm:$0xff]
    %v425 = vld [vmem:[%s0 + $0x18] sm:$0xff]
    %v426 = vld [vmem:[%s0 + $0x20] sm:$0xff]
    %v427 = vld [vmem:[%s0 + $0x28] sm:$0xff]
    %v428 = vld [vmem:[%s0 + $0x30] sm:$0x3]
    %v430 = vlaneseq
    %v431 = vshrl.u32 %v430, 7
    %v432 = vsub.s32 0, %v431
    %v433 = vrot.slane %v421, %v432
    %v442 = vcombine.high %v422, %v422
    %v444 = vunpack.c.l.s4 1983009808
    %v445 = vunpack.c.0.s8 %v444
    %v446 = vlaneseq
    %v447 = vshrl.u32 %v446, 7
    %v448 = vsub.s32 %v445, %v447
    %v449 = vrot.slane %v422, %v448
    %v451 = vunpack.c.l.s4 1983009808
    %v452 = vunpack.c.0.s8 %v451
    %v453 = vlaneseq
    %v454 = vshrl.u32 %v453, 7
    %v455 = vsub.s32 %v452, %v454
    %v456 = vrot.slane %v442, %v455
    %v457 = vcombine.high %v449, %v449
    %v458 = vcombine.high %v456, %v456
    %v459 = vcombine.high %v423, %v423
    %v461 = vunpack.c.l.s4 1983009808
    %v462 = vunpack.c.0.s8 %v461
    %v463 = vlaneseq
    %v464 = vshrl.u32 %v463, 7
    %v465 = vsub.s32 %v462, %v464
    %v466 = vrot.slane %v423, %v465
    %v468 = vunpack.c.l.s4 1983009808
    %v469 = vunpack.c.0.s8 %v468
    %v470 = vlaneseq
    %v471 = vshrl.u32 %v470, 7
    %v472 = vsub.s32 %v469, %v471
    %v473 = vrot.slane %v459, %v472
    %v474 = vcombine.high %v466, %v466
    %v475 = vcombine.high %v473, %v473
    %v476 = vcombine.high %v424, %v424
    %v478 = vunpack.c.l.s4 1983009808
    %v479 = vunpack.c.0.s8 %v478
    %v480 = vlaneseq
    %v481 = vshrl.u32 %v480, 7
    %v482 = vsub.s32 %v479, %v481
    %v483 = vrot.slane %v424, %v482
    %v485 = vunpack.c.l.s4 1983009808
    %v486 = vunpack.c.0.s8 %v485
    %v487 = vlaneseq
    %v488 = vshrl.u32 %v487, 7
    %v489 = vsub.s32 %v486, %v488
    %v490 = vrot.slane %v476, %v489
    %v491 = vcombine.high %v483, %v483
    %v492 = vcombine.high %v490, %v490
    %v493 = vcombine.high %v425, %v425
    %v495 = vunpack.c.l.s4 1983009808
    %v496 = vunpack.c.0.s8 %v495
    %v497 = vlaneseq
    %v498 = vshrl.u32 %v497, 7
    %v499 = vsub.s32 %v496, %v498
    %v500 = vrot.slane %v425, %v499
    %v502 = vunpack.c.l.s4 1983009808
    %v503 = vunpack.c.0.s8 %v502
    %v504 = vlaneseq
    %v505 = vshrl.u32 %v504, 7
    %v506 = vsub.s32 %v503, %v505
    %v507 = vrot.slane %v493, %v506
    %v508 = vcombine.high %v500, %v500
    %v509 = vcombine.high %v507, %v507
    %v510 = vcombine.high %v426, %v426
    %v512 = vunpack.c.l.s4 1983009808
    %v513 = vunpack.c.0.s8 %v512
    %v514 = vlaneseq
    %v515 = vshrl.u32 %v514, 7
    %v516 = vsub.s32 %v513, %v515
    %v517 = vrot.slane %v426, %v516
    %v519 = vunpack.c.l.s4 1983009808
    %v520 = vunpack.c.0.s8 %v519
    %v521 = vlaneseq
    %v522 = vshrl.u32 %v521, 7
    %v523 = vsub.s32 %v520, %v522
    %v524 = vrot.slane %v510, %v523
    %v525 = vcombine.high %v517, %v517
    %v526 = vcombine.high %v524, %v524
    %v527 = vcombine.high %v427, %v427
    %v529 = vunpack.c.l.s4 1983009808
    %v530 = vunpack.c.0.s8 %v529
    %v531 = vlaneseq
    %v532 = vshrl.u32 %v531, 7
    %v533 = vsub.s32 %v530, %v532
    %v534 = vrot.slane %v427, %v533
    %v536 = vunpack.c.l.s4 1983009808
    %v537 = vunpack.c.0.s8 %v536
    %v538 = vlaneseq
    %v539 = vshrl.u32 %v538, 7
    %v540 = vsub.s32 %v537, %v539
    %v541 = vrot.slane %v527, %v540
    %v542 = vcombine.high %v534, %v534
    %v543 = vcombine.high %v541, %v541
    %v545 = vunpack.c.l.s4 1983009808
    %v546 = vunpack.c.0.s8 %v545
    %v547 = vlaneseq
    %v548 = vshrl.u32 %v547, 7
    %v549 = vsub.s32 %v546, %v548
    %v550 = vrot.slane %v428, %v549
    %576 = vmatprep.subr.mxu0 0.0
    %577 = vmatpush1.msra.mxu0 %v36
    %578 = vmatprep.subr.mxu0 0.0
    %579 = vmatpush1.msra.mxu0 %v35
    %580 = vmatprep.subr.mxu0 0.0
    %581 = vmatpush1.msra.mxu0 %v34
    %582 = vmatprep.subr.mxu0 0.0
    %583 = vmatpush1.msra.mxu0 %v33
    %584 = vmatprep.subr.mxu0 0.0
    %585 = vmatpush1.msra.mxu0 %v32
    %586 = vmatprep.subr.mxu0 0.0
    %587 = vmatpush1.msra.mxu0 %v31
    %588 = vmatprep.subr.mxu0 0.0
    %589 = vmatpush1.msra.mxu0 %v30
    %590 = vmatprep.subr.mxu0 0.0
    %591 = vmatpush1.msra.mxu0 %v29
    %592 = vmatprep.subr.mxu0 0.0
    %593 = vmatpush1.msra.mxu0 %v28
    %594 = vmatprep.subr.mxu0 0.0
    %595 = vmatpush1.msra.mxu0 %v27
    %596 = vmatprep.subr.mxu0 0.0
    %597 = vmatpush1.msra.mxu0 %v26
    %598 = vmatprep.subr.mxu0 0.0
    %599 = vmatpush1.msra.mxu0 %v25
    %600 = vmatprep.subr.mxu0 0.0
    %601 = vmatpush1.msra.mxu0 %v24
    %602 = vmatprep.subr.mxu0 0.0
    %603 = vmatpush1.msra.mxu0 %v23
    %604 = vmatprep.subr.mxu0 0.0
    %605 = vmatpush1.msra.mxu0 %v22
    %606 = vmatprep.subr.mxu0 0.0
    %607 = vmatpush1.msra.mxu0 %v21
    %608 = vmatprep.subr.mxu0 0.0
    %609 = vmatpush2.msra.mxu0 %v52
    %610 = vmatprep.subr.mxu0 0.0
    %611 = vmatpush2.msra.mxu0 %v51
    %612 = vmatprep.subr.mxu0 0.0
    %613 = vmatpush2.msra.mxu0 %v50
    %614 = vmatprep.subr.mxu0 0.0
    %615 = vmatpush2.msra.mxu0 %v49
    %616 = vmatprep.subr.mxu0 0.0
    %617 = vmatpush2.msra.mxu0 %v48
    %618 = vmatprep.subr.mxu0 0.0
    %619 = vmatpush2.msra.mxu0 %v47
    %620 = vmatprep.subr.mxu0 0.0
    %621 = vmatpush2.msra.mxu0 %v46
    %622 = vmatprep.subr.mxu0 0.0
    %623 = vmatpush2.msra.mxu0 %v45
    %624 = vmatprep.subr.mxu0 0.0
    %625 = vmatpush2.msra.mxu0 %v44
    %626 = vmatprep.subr.mxu0 0.0
    %627 = vmatpush2.msra.mxu0 %v43
    %628 = vmatprep.subr.mxu0 0.0
    %629 = vmatpush2.msra.mxu0 %v42
    %630 = vmatprep.subr.mxu0 0.0
    %631 = vmatpush2.msra.mxu0 %v41
    %632 = vmatprep.subr.mxu0 0.0
    %633 = vmatpush2.msra.mxu0 %v40
    %634 = vmatprep.subr.mxu0 0.0
    %635 = vmatpush2.msra.mxu0 %v39
    %636 = vmatprep.subr.mxu0 0.0
    %637 = vmatpush2.msra.mxu0 %v38
    %638 = vmatprep.subr.mxu0 0.0
    %639 = vmatpush2.msra.mxu0 %v37
    %640 = vmatprep.mubr.f32.mxu0 %v457
    %641 = vmatmul.mubr.f32.gmra.mxu0 %v449
    %v642 = vpop.f32.mrf.mxu0
    %v643 = vadd.f32 %v433, %v642
    %v644 = vpop.f32.mrf.mxu0
    %645 = vdwg.mxu0
    %646 = vmatprep.subr.mxu0 0.0
    %647 = vmatpush1.msra.mxu0 %v68
    %648 = vmatprep.subr.mxu0 0.0
    %649 = vmatpush1.msra.mxu0 %v67
    %650 = vmatprep.subr.mxu0 0.0
    %651 = vmatpush1.msra.mxu0 %v66
    %652 = vmatprep.subr.mxu0 0.0
    %653 = vmatpush1.msra.mxu0 %v65
    %654 = vmatprep.subr.mxu0 0.0
    %655 = vmatpush1.msra.mxu0 %v64
    %656 = vmatprep.subr.mxu0 0.0
    %657 = vmatpush1.msra.mxu0 %v63
    %658 = vmatprep.subr.mxu0 0.0
    %659 = vmatpush1.msra.mxu0 %v62
    %660 = vmatprep.subr.mxu0 0.0
    %661 = vmatpush1.msra.mxu0 %v61
    %662 = vmatprep.subr.mxu0 0.0
    %663 = vmatpush1.msra.mxu0 %v60
    %664 = vmatprep.subr.mxu0 0.0
    %665 = vmatpush1.msra.mxu0 %v59
    %666 = vmatprep.subr.mxu0 0.0
    %667 = vmatpush1.msra.mxu0 %v58
    %668 = vmatprep.subr.mxu0 0.0
    %669 = vmatpush1.msra.mxu0 %v57
    %670 = vmatprep.subr.mxu0 0.0
    %671 = vmatpush1.msra.mxu0 %v56
    %672 = vmatprep.subr.mxu0 0.0
    %673 = vmatpush1.msra.mxu0 %v55
    %674 = vmatprep.subr.mxu0 0.0
    %675 = vmatpush1.msra.mxu0 %v54
    %676 = vmatprep.subr.mxu0 0.0
    %677 = vmatpush1.msra.mxu0 %v53
    %678 = vmatprep.subr.mxu0 0.0
    %679 = vmatpush2.msra.mxu0 %v84
    %680 = vmatprep.subr.mxu0 0.0
    %681 = vmatpush2.msra.mxu0 %v83
    %682 = vmatprep.subr.mxu0 0.0
    %683 = vmatpush2.msra.mxu0 %v82
    %684 = vmatprep.subr.mxu0 0.0
    %685 = vmatpush2.msra.mxu0 %v81
    %686 = vmatprep.subr.mxu0 0.0
    %687 = vmatpush2.msra.mxu0 %v80
    %688 = vmatprep.subr.mxu0 0.0
    %689 = vmatpush2.msra.mxu0 %v79
    %690 = vmatprep.subr.mxu0 0.0
    %691 = vmatpush2.msra.mxu0 %v78
    %692 = vmatprep.subr.mxu0 0.0
    %693 = vmatpush2.msra.mxu0 %v77
    %694 = vmatprep.subr.mxu0 0.0
    %695 = vmatpush2.msra.mxu0 %v76
    %696 = vmatprep.subr.mxu0 0.0
    %697 = vmatpush2.msra.mxu0 %v75
    %698 = vmatprep.subr.mxu0 0.0
    %699 = vmatpush2.msra.mxu0 %v74
    %700 = vmatprep.subr.mxu0 0.0
    %701 = vmatpush2.msra.mxu0 %v73
    %702 = vmatprep.subr.mxu0 0.0
    %703 = vmatpush2.msra.mxu0 %v72
    %704 = vmatprep.subr.mxu0 0.0
    %705 = vmatpush2.msra.mxu0 %v71
    %706 = vmatprep.subr.mxu0 0.0
    %707 = vmatpush2.msra.mxu0 %v70
    %708 = vmatprep.subr.mxu0 0.0
    %709 = vmatpush2.msra.mxu0 %v69
    %710 = vmatprep.mubr.f32.mxu0 %v458
    %711 = vmatmul.mubr.f32.gmra.mxu0 %v456
    %v712 = vpop.f32.mrf.mxu0
    %v713 = vadd.f32 %v643, %v712
    %v714 = vpop.f32.mrf.mxu0
    %715 = vdwg.mxu0
    %716 = vmatprep.subr.mxu0 0.0
    %717 = vmatpush1.msra.mxu0 %v100
    %718 = vmatprep.subr.mxu0 0.0
    %719 = vmatpush1.msra.mxu0 %v99
    %720 = vmatprep.subr.mxu0 0.0
    %721 = vmatpush1.msra.mxu0 %v98
    %722 = vmatprep.subr.mxu0 0.0
    %723 = vmatpush1.msra.mxu0 %v97
    %724 = vmatprep.subr.mxu0 0.0
    %725 = vmatpush1.msra.mxu0 %v96
    %726 = vmatprep.subr.mxu0 0.0
    %727 = vmatpush1.msra.mxu0 %v95
    %728 = vmatprep.subr.mxu0 0.0
    %729 = vmatpush1.msra.mxu0 %v94
    %730 = vmatprep.subr.mxu0 0.0
    %731 = vmatpush1.msra.mxu0 %v93
    %732 = vmatprep.subr.mxu0 0.0
    %733 = vmatpush1.msra.mxu0 %v92
    %734 = vmatprep.subr.mxu0 0.0
    %735 = vmatpush1.msra.mxu0 %v91
    %736 = vmatprep.subr.mxu0 0.0
    %737 = vmatpush1.msra.mxu0 %v90
    %738 = vmatprep.subr.mxu0 0.0
    %739 = vmatpush1.msra.mxu0 %v89
    %740 = vmatprep.subr.mxu0 0.0
    %741 = vmatpush1.msra.mxu0 %v88
    %742 = vmatprep.subr.mxu0 0.0
    %743 = vmatpush1.msra.mxu0 %v87
    %744 = vmatprep.subr.mxu0 0.0
    %745 = vmatpush1.msra.mxu0 %v86
    %746 = vmatprep.subr.mxu0 0.0
    %747 = vmatpush1.msra.mxu0 %v85
    %748 = vmatprep.subr.mxu0 0.0
    %749 = vmatpush2.msra.mxu0 %v116
    %750 = vmatprep.subr.mxu0 0.0
    %751 = vmatpush2.msra.mxu0 %v115
    %752 = vmatprep.subr.mxu0 0.0
    %753 = vmatpush2.msra.mxu0 %v114
    %754 = vmatprep.subr.mxu0 0.0
    %755 = vmatpush2.msra.mxu0 %v113
    %756 = vmatprep.subr.mxu0 0.0
    %757 = vmatpush2.msra.mxu0 %v112
    %758 = vmatprep.subr.mxu0 0.0
    %759 = vmatpush2.msra.mxu0 %v111
    %760 = vmatprep.subr.mxu0 0.0
    %761 = vmatpush2.msra.mxu0 %v110
    %762 = vmatprep.subr.mxu0 0.0
    %763 = vmatpush2.msra.mxu0 %v109
    %764 = vmatprep.subr.mxu0 0.0
    %765 = vmatpush2.msra.mxu0 %v108
    %766 = vmatprep.subr.mxu0 0.0
    %767 = vmatpush2.msra.mxu0 %v107
    %768 = vmatprep.subr.mxu0 0.0
    %769 = vmatpush2.msra.mxu0 %v106
    %770 = vmatprep.subr.mxu0 0.0
    %771 = vmatpush2.msra.mxu0 %v105
    %772 = vmatprep.subr.mxu0 0.0
    %773 = vmatpush2.msra.mxu0 %v104
    %774 = vmatprep.subr.mxu0 0.0
    %775 = vmatpush2.msra.mxu0 %v103
    %776 = vmatprep.subr.mxu0 0.0
    %777 = vmatpush2.msra.mxu0 %v102
    %778 = vmatprep.subr.mxu0 0.0
    %779 = vmatpush2.msra.mxu0 %v101
    %780 = vmatprep.mubr.f32.mxu0 %v474
    %781 = vmatmul.mubr.f32.gmra.mxu0 %v466
    %v782 = vpop.f32.mrf.mxu0
    %v783 = vadd.f32 %v713, %v782
    %v784 = vpop.f32.mrf.mxu0
    %785 = vdwg.mxu0
    %786 = vmatprep.subr.mxu0 0.0
    %787 = vmatpush1.msra.mxu0 %v132
    %788 = vmatprep.subr.mxu0 0.0
    %789 = vmatpush1.msra.mxu0 %v131
    %790 = vmatprep.subr.mxu0 0.0
    %791 = vmatpush1.msra.mxu0 %v130
    %792 = vmatprep.subr.mxu0 0.0
    %793 = vmatpush1.msra.mxu0 %v129
    %794 = vmatprep.subr.mxu0 0.0
    %795 = vmatpush1.msra.mxu0 %v128
    %796 = vmatprep.subr.mxu0 0.0
    %797 = vmatpush1.msra.mxu0 %v127
    %798 = vmatprep.subr.mxu0 0.0
    %799 = vmatpush1.msra.mxu0 %v126
    %800 = vmatprep.subr.mxu0 0.0
    %801 = vmatpush1.msra.mxu0 %v125
    %802 = vmatprep.subr.mxu0 0.0
    %803 = vmatpush1.msra.mxu0 %v124
    %804 = vmatprep.subr.mxu0 0.0
    %805 = vmatpush1.msra.mxu0 %v123
    %806 = vmatprep.subr.mxu0 0.0
    %807 = vmatpush1.msra.mxu0 %v122
    %808 = vmatprep.subr.mxu0 0.0
    %809 = vmatpush1.msra.mxu0 %v121
    %810 = vmatprep.subr.mxu0 0.0
    %811 = vmatpush1.msra.mxu0 %v120
    %812 = vmatprep.subr.mxu0 0.0
    %813 = vmatpush1.msra.mxu0 %v119
    %814 = vmatprep.subr.mxu0 0.0
    %815 = vmatpush1.msra.mxu0 %v118
    %816 = vmatprep.subr.mxu0 0.0
    %817 = vmatpush1.msra.mxu0 %v117
    %818 = vmatprep.subr.mxu0 0.0
    %819 = vmatpush2.msra.mxu0 %v148
    %820 = vmatprep.subr.mxu0 0.0
    %821 = vmatpush2.msra.mxu0 %v147
    %822 = vmatprep.subr.mxu0 0.0
    %823 = vmatpush2.msra.mxu0 %v146
    %824 = vmatprep.subr.mxu0 0.0
    %825 = vmatpush2.msra.mxu0 %v145
    %826 = vmatprep.subr.mxu0 0.0
    %827 = vmatpush2.msra.mxu0 %v144
    %828 = vmatprep.subr.mxu0 0.0
    %829 = vmatpush2.msra.mxu0 %v143
    %830 = vmatprep.subr.mxu0 0.0
    %831 = vmatpush2.msra.mxu0 %v142
    %832 = vmatprep.subr.mxu0 0.0
    %833 = vmatpush2.msra.mxu0 %v141
    %834 = vmatprep.subr.mxu0 0.0
    %835 = vmatpush2.msra.mxu0 %v140
    %836 = vmatprep.subr.mxu0 0.0
    %837 = vmatpush2.msra.mxu0 %v139
    %838 = vmatprep.subr.mxu0 0.0
    %839 = vmatpush2.msra.mxu0 %v138
    %840 = vmatprep.subr.mxu0 0.0
    %841 = vmatpush2.msra.mxu0 %v137
    %842 = vmatprep.subr.mxu0 0.0
    %843 = vmatpush2.msra.mxu0 %v136
    %844 = vmatprep.subr.mxu0 0.0
    %845 = vmatpush2.msra.mxu0 %v135
    %846 = vmatprep.subr.mxu0 0.0
    %847 = vmatpush2.msra.mxu0 %v134
    %848 = vmatprep.subr.mxu0 0.0
    %849 = vmatpush2.msra.mxu0 %v133
    %850 = vmatprep.mubr.f32.mxu0 %v475
    %851 = vmatmul.mubr.f32.gmra.mxu0 %v473
    %v852 = vpop.f32.mrf.mxu0
    %v853 = vadd.f32 %v783, %v852
    %v854 = vpop.f32.mrf.mxu0
    %855 = vdwg.mxu0
    %856 = vmatprep.subr.mxu0 0.0
    %857 = vmatpush1.msra.mxu0 %v164
    %858 = vmatprep.subr.mxu0 0.0
    %859 = vmatpush1.msra.mxu0 %v163
    %860 = vmatprep.subr.mxu0 0.0
    %861 = vmatpush1.msra.mxu0 %v162
    %862 = vmatprep.subr.mxu0 0.0
    %863 = vmatpush1.msra.mxu0 %v161
    %864 = vmatprep.subr.mxu0 0.0
    %865 = vmatpush1.msra.mxu0 %v160
    %866 = vmatprep.subr.mxu0 0.0
    %867 = vmatpush1.msra.mxu0 %v159
    %868 = vmatprep.subr.mxu0 0.0
    %869 = vmatpush1.msra.mxu0 %v158
    %870 = vmatprep.subr.mxu0 0.0
    %871 = vmatpush1.msra.mxu0 %v157
    %872 = vmatprep.subr.mxu0 0.0
    %873 = vmatpush1.msra.mxu0 %v156
    %874 = vmatprep.subr.mxu0 0.0
    %875 = vmatpush1.msra.mxu0 %v155
    %876 = vmatprep.subr.mxu0 0.0
    %877 = vmatpush1.msra.mxu0 %v154
    %878 = vmatprep.subr.mxu0 0.0
    %879 = vmatpush1.msra.mxu0 %v153
    %880 = vmatprep.subr.mxu0 0.0
    %881 = vmatpush1.msra.mxu0 %v152
    %882 = vmatprep.subr.mxu0 0.0
    %883 = vmatpush1.msra.mxu0 %v151
    %884 = vmatprep.subr.mxu0 0.0
    %885 = vmatpush1.msra.mxu0 %v150
    %886 = vmatprep.subr.mxu0 0.0
    %887 = vmatpush1.msra.mxu0 %v149
    %888 = vmatprep.subr.mxu0 0.0
    %889 = vmatpush2.msra.mxu0 %v180
    %890 = vmatprep.subr.mxu0 0.0
    %891 = vmatpush2.msra.mxu0 %v179
    %892 = vmatprep.subr.mxu0 0.0
    %893 = vmatpush2.msra.mxu0 %v178
    %894 = vmatprep.subr.mxu0 0.0
    %895 = vmatpush2.msra.mxu0 %v177
    %896 = vmatprep.subr.mxu0 0.0
    %897 = vmatpush2.msra.mxu0 %v176
    %898 = vmatprep.subr.mxu0 0.0
    %899 = vmatpush2.msra.mxu0 %v175
    %900 = vmatprep.subr.mxu0 0.0
    %901 = vmatpush2.msra.mxu0 %v174
    %902 = vmatprep.subr.mxu0 0.0
    %903 = vmatpush2.msra.mxu0 %v173
    %904 = vmatprep.subr.mxu0 0.0
    %905 = vmatpush2.msra.mxu0 %v172
    %906 = vmatprep.subr.mxu0 0.0
    %907 = vmatpush2.msra.mxu0 %v171
    %908 = vmatprep.subr.mxu0 0.0
    %909 = vmatpush2.msra.mxu0 %v170
    %910 = vmatprep.subr.mxu0 0.0
    %911 = vmatpush2.msra.mxu0 %v169
    %912 = vmatprep.subr.mxu0 0.0
    %913 = vmatpush2.msra.mxu0 %v168
    %914 = vmatprep.subr.mxu0 0.0
    %915 = vmatpush2.msra.mxu0 %v167
    %916 = vmatprep.subr.mxu0 0.0
    %917 = vmatpush2.msra.mxu0 %v166
    %918 = vmatprep.subr.mxu0 0.0
    %919 = vmatpush2.msra.mxu0 %v165
    %920 = vmatprep.mubr.f32.mxu0 %v491
    %921 = vmatmul.mubr.f32.gmra.mxu0 %v483
    %v922 = vpop.f32.mrf.mxu0
    %v923 = vadd.f32 %v853, %v922
    %v924 = vpop.f32.mrf.mxu0
    %925 = vdwg.mxu0
    %926 = vmatprep.subr.mxu0 0.0
    %927 = vmatpush1.msra.mxu0 %v196
    %928 = vmatprep.subr.mxu0 0.0
    %929 = vmatpush1.msra.mxu0 %v195
    %930 = vmatprep.subr.mxu0 0.0
    %931 = vmatpush1.msra.mxu0 %v194
    %932 = vmatprep.subr.mxu0 0.0
    %933 = vmatpush1.msra.mxu0 %v193
    %934 = vmatprep.subr.mxu0 0.0
    %935 = vmatpush1.msra.mxu0 %v192
    %936 = vmatprep.subr.mxu0 0.0
    %937 = vmatpush1.msra.mxu0 %v191
    %938 = vmatprep.subr.mxu0 0.0
    %939 = vmatpush1.msra.mxu0 %v190
    %940 = vmatprep.subr.mxu0 0.0
    %941 = vmatpush1.msra.mxu0 %v189
    %942 = vmatprep.subr.mxu0 0.0
    %943 = vmatpush1.msra.mxu0 %v188
    %944 = vmatprep.subr.mxu0 0.0
    %945 = vmatpush1.msra.mxu0 %v187
    %946 = vmatprep.subr.mxu0 0.0
    %947 = vmatpush1.msra.mxu0 %v186
    %948 = vmatprep.subr.mxu0 0.0
    %949 = vmatpush1.msra.mxu0 %v185
    %950 = vmatprep.subr.mxu0 0.0
    %951 = vmatpush1.msra.mxu0 %v184
    %952 = vmatprep.subr.mxu0 0.0
    %953 = vmatpush1.msra.mxu0 %v183
    %954 = vmatprep.subr.mxu0 0.0
    %955 = vmatpush1.msra.mxu0 %v182
    %956 = vmatprep.subr.mxu0 0.0
    %957 = vmatpush1.msra.mxu0 %v181
    %958 = vmatprep.subr.mxu0 0.0
    %959 = vmatpush2.msra.mxu0 %v212
    %960 = vmatprep.subr.mxu0 0.0
    %961 = vmatpush2.msra.mxu0 %v211
    %962 = vmatprep.subr.mxu0 0.0
    %963 = vmatpush2.msra.mxu0 %v210
    %964 = vmatprep.subr.mxu0 0.0
    %965 = vmatpush2.msra.mxu0 %v209
    %966 = vmatprep.subr.mxu0 0.0
    %967 = vmatpush2.msra.mxu0 %v208
    %968 = vmatprep.subr.mxu0 0.0
    %969 = vmatpush2.msra.mxu0 %v207
    %970 = vmatprep.subr.mxu0 0.0
    %971 = vmatpush2.msra.mxu0 %v206
    %972 = vmatprep.subr.mxu0 0.0
    %973 = vmatpush2.msra.mxu0 %v205
    %974 = vmatprep.subr.mxu0 0.0
    %975 = vmatpush2.msra.mxu0 %v204
    %976 = vmatprep.subr.mxu0 0.0
    %977 = vmatpush2.msra.mxu0 %v203
    %978 = vmatprep.subr.mxu0 0.0
    %979 = vmatpush2.msra.mxu0 %v202
    %980 = vmatprep.subr.mxu0 0.0
    %981 = vmatpush2.msra.mxu0 %v201
    %982 = vmatprep.subr.mxu0 0.0
    %983 = vmatpush2.msra.mxu0 %v200
    %984 = vmatprep.subr.mxu0 0.0
    %985 = vmatpush2.msra.mxu0 %v199
    %986 = vmatprep.subr.mxu0 0.0
    %987 = vmatpush2.msra.mxu0 %v198
    %988 = vmatprep.subr.mxu0 0.0
    %989 = vmatpush2.msra.mxu0 %v197
    %990 = vmatprep.mubr.f32.mxu0 %v492
    %991 = vmatmul.mubr.f32.gmra.mxu0 %v490
    %v992 = vpop.f32.mrf.mxu0
    %v993 = vadd.f32 %v923, %v992
    %v994 = vpop.f32.mrf.mxu0
    %995 = vdwg.mxu0
    %996 = vmatprep.subr.mxu0 0.0
    %997 = vmatpush1.msra.mxu0 %v228
    %998 = vmatprep.subr.mxu0 0.0
    %999 = vmatpush1.msra.mxu0 %v227
    %1000 = vmatprep.subr.mxu0 0.0
    %1001 = vmatpush1.msra.mxu0 %v226
    %1002 = vmatprep.subr.mxu0 0.0
    %1003 = vmatpush1.msra.mxu0 %v225
    %1004 = vmatprep.subr.mxu0 0.0
    %1005 = vmatpush1.msra.mxu0 %v224
    %1006 = vmatprep.subr.mxu0 0.0
    %1007 = vmatpush1.msra.mxu0 %v223
    %1008 = vmatprep.subr.mxu0 0.0
    %1009 = vmatpush1.msra.mxu0 %v222
    %1010 = vmatprep.subr.mxu0 0.0
    %1011 = vmatpush1.msra.mxu0 %v221
    %1012 = vmatprep.subr.mxu0 0.0
    %1013 = vmatpush1.msra.mxu0 %v220
    %1014 = vmatprep.subr.mxu0 0.0
    %1015 = vmatpush1.msra.mxu0 %v219
    %1016 = vmatprep.subr.mxu0 0.0
    %1017 = vmatpush1.msra.mxu0 %v218
    %1018 = vmatprep.subr.mxu0 0.0
    %1019 = vmatpush1.msra.mxu0 %v217
    %1020 = vmatprep.subr.mxu0 0.0
    %1021 = vmatpush1.msra.mxu0 %v216
    %1022 = vmatprep.subr.mxu0 0.0
    %1023 = vmatpush1.msra.mxu0 %v215
    %1024 = vmatprep.subr.mxu0 0.0
    %1025 = vmatpush1.msra.mxu0 %v214
    %1026 = vmatprep.subr.mxu0 0.0
    %1027 = vmatpush1.msra.mxu0 %v213
    %1028 = vmatprep.subr.mxu0 0.0
    %1029 = vmatpush2.msra.mxu0 %v244
    %1030 = vmatprep.subr.mxu0 0.0
    %1031 = vmatpush2.msra.mxu0 %v243
    %1032 = vmatprep.subr.mxu0 0.0
    %1033 = vmatpush2.msra.mxu0 %v242
    %1034 = vmatprep.subr.mxu0 0.0
    %1035 = vmatpush2.msra.mxu0 %v241
    %1036 = vmatprep.subr.mxu0 0.0
    %1037 = vmatpush2.msra.mxu0 %v240
    %1038 = vmatprep.subr.mxu0 0.0
    %1039 = vmatpush2.msra.mxu0 %v239
    %1040 = vmatprep.subr.mxu0 0.0
    %1041 = vmatpush2.msra.mxu0 %v238
    %1042 = vmatprep.subr.mxu0 0.0
    %1043 = vmatpush2.msra.mxu0 %v237
    %1044 = vmatprep.subr.mxu0 0.0
    %1045 = vmatpush2.msra.mxu0 %v236
    %1046 = vmatprep.subr.mxu0 0.0
    %1047 = vmatpush2.msra.mxu0 %v235
    %1048 = vmatprep.subr.mxu0 0.0
    %1049 = vmatpush2.msra.mxu0 %v234
    %1050 = vmatprep.subr.mxu0 0.0
    %1051 = vmatpush2.msra.mxu0 %v233
    %1052 = vmatprep.subr.mxu0 0.0
    %1053 = vmatpush2.msra.mxu0 %v232
    %1054 = vmatprep.subr.mxu0 0.0
    %1055 = vmatpush2.msra.mxu0 %v231
    %1056 = vmatprep.subr.mxu0 0.0
    %1057 = vmatpush2.msra.mxu0 %v230
    %1058 = vmatprep.subr.mxu0 0.0
    %1059 = vmatpush2.msra.mxu0 %v229
    %1060 = vmatprep.mubr.f32.mxu0 %v508
    %1061 = vmatmul.mubr.f32.gmra.mxu0 %v500
    %v1062 = vpop.f32.mrf.mxu0
    %v1063 = vadd.f32 %v993, %v1062
    %v1064 = vpop.f32.mrf.mxu0
    %1065 = vdwg.mxu0
    %1066 = vmatprep.subr.mxu0 0.0
    %1067 = vmatpush1.msra.mxu0 %v260
    %1068 = vmatprep.subr.mxu0 0.0
    %1069 = vmatpush1.msra.mxu0 %v259
    %1070 = vmatprep.subr.mxu0 0.0
    %1071 = vmatpush1.msra.mxu0 %v258
    %1072 = vmatprep.subr.mxu0 0.0
    %1073 = vmatpush1.msra.mxu0 %v257
    %1074 = vmatprep.subr.mxu0 0.0
    %1075 = vmatpush1.msra.mxu0 %v256
    %1076 = vmatprep.subr.mxu0 0.0
    %1077 = vmatpush1.msra.mxu0 %v255
    %1078 = vmatprep.subr.mxu0 0.0
    %1079 = vmatpush1.msra.mxu0 %v254
    %1080 = vmatprep.subr.mxu0 0.0
    %1081 = vmatpush1.msra.mxu0 %v253
    %1082 = vmatprep.subr.mxu0 0.0
    %1083 = vmatpush1.msra.mxu0 %v252
    %1084 = vmatprep.subr.mxu0 0.0
    %1085 = vmatpush1.msra.mxu0 %v251
    %1086 = vmatprep.subr.mxu0 0.0
    %1087 = vmatpush1.msra.mxu0 %v250
    %1088 = vmatprep.subr.mxu0 0.0
    %1089 = vmatpush1.msra.mxu0 %v249
    %1090 = vmatprep.subr.mxu0 0.0
    %1091 = vmatpush1.msra.mxu0 %v248
    %1092 = vmatprep.subr.mxu0 0.0
    %1093 = vmatpush1.msra.mxu0 %v247
    %1094 = vmatprep.subr.mxu0 0.0
    %1095 = vmatpush1.msra.mxu0 %v246
    %1096 = vmatprep.subr.mxu0 0.0
    %1097 = vmatpush1.msra.mxu0 %v245
    %1098 = vmatprep.subr.mxu0 0.0
    %1099 = vmatpush2.msra.mxu0 %v276
    %1100 = vmatprep.subr.mxu0 0.0
    %1101 = vmatpush2.msra.mxu0 %v275
    %1102 = vmatprep.subr.mxu0 0.0
    %1103 = vmatpush2.msra.mxu0 %v274
    %1104 = vmatprep.subr.mxu0 0.0
    %1105 = vmatpush2.msra.mxu0 %v273
    %1106 = vmatprep.subr.mxu0 0.0
    %1107 = vmatpush2.msra.mxu0 %v272
    %1108 = vmatprep.subr.mxu0 0.0
    %1109 = vmatpush2.msra.mxu0 %v271
    %1110 = vmatprep.subr.mxu0 0.0
    %1111 = vmatpush2.msra.mxu0 %v270
    %1112 = vmatprep.subr.mxu0 0.0
    %1113 = vmatpush2.msra.mxu0 %v269
    %1114 = vmatprep.subr.mxu0 0.0
    %1115 = vmatpush2.msra.mxu0 %v268
    %1116 = vmatprep.subr.mxu0 0.0
    %1117 = vmatpush2.msra.mxu0 %v267
    %1118 = vmatprep.subr.mxu0 0.0
    %1119 = vmatpush2.msra.mxu0 %v266
    %1120 = vmatprep.subr.mxu0 0.0
    %1121 = vmatpush2.msra.mxu0 %v265
    %1122 = vmatprep.subr.mxu0 0.0
    %1123 = vmatpush2.msra.mxu0 %v264
    %1124 = vmatprep.subr.mxu0 0.0
    %1125 = vmatpush2.msra.mxu0 %v263
    %1126 = vmatprep.subr.mxu0 0.0
    %1127 = vmatpush2.msra.mxu0 %v262
    %1128 = vmatprep.subr.mxu0 0.0
    %1129 = vmatpush2.msra.mxu0 %v261
    %1130 = vmatprep.mubr.f32.mxu0 %v509
    %1131 = vmatmul.mubr.f32.gmra.mxu0 %v507
    %v1132 = vpop.f32.mrf.mxu0
    %v1133 = vadd.f32 %v1063, %v1132
    %v1134 = vpop.f32.mrf.mxu0
    %1135 = vdwg.mxu0
    %1136 = vmatprep.subr.mxu0 0.0
    %1137 = vmatpush1.msra.mxu0 %v292
    %1138 = vmatprep.subr.mxu0 0.0
    %1139 = vmatpush1.msra.mxu0 %v291
    %1140 = vmatprep.subr.mxu0 0.0
    %1141 = vmatpush1.msra.mxu0 %v290
    %1142 = vmatprep.subr.mxu0 0.0
    %1143 = vmatpush1.msra.mxu0 %v289
    %1144 = vmatprep.subr.mxu0 0.0
    %1145 = vmatpush1.msra.mxu0 %v288
    %1146 = vmatprep.subr.mxu0 0.0
    %1147 = vmatpush1.msra.mxu0 %v287
    %1148 = vmatprep.subr.mxu0 0.0
    %1149 = vmatpush1.msra.mxu0 %v286
    %1150 = vmatprep.subr.mxu0 0.0
    %1151 = vmatpush1.msra.mxu0 %v285
    %1152 = vmatprep.subr.mxu0 0.0
    %1153 = vmatpush1.msra.mxu0 %v284
    %1154 = vmatprep.subr.mxu0 0.0
    %1155 = vmatpush1.msra.mxu0 %v283
    %1156 = vmatprep.subr.mxu0 0.0
    %1157 = vmatpush1.msra.mxu0 %v282
    %1158 = vmatprep.subr.mxu0 0.0
    %1159 = vmatpush1.msra.mxu0 %v281
    %1160 = vmatprep.subr.mxu0 0.0
    %1161 = vmatpush1.msra.mxu0 %v280
    %1162 = vmatprep.subr.mxu0 0.0
    %1163 = vmatpush1.msra.mxu0 %v279
    %1164 = vmatprep.subr.mxu0 0.0
    %1165 = vmatpush1.msra.mxu0 %v278
    %1166 = vmatprep.subr.mxu0 0.0
    %1167 = vmatpush1.msra.mxu0 %v277
    %1168 = vmatprep.subr.mxu0 0.0
    %1169 = vmatpush2.msra.mxu0 %v308
    %1170 = vmatprep.subr.mxu0 0.0
    %1171 = vmatpush2.msra.mxu0 %v307
    %1172 = vmatprep.subr.mxu0 0.0
    %1173 = vmatpush2.msra.mxu0 %v306
    %1174 = vmatprep.subr.mxu0 0.0
    %1175 = vmatpush2.msra.mxu0 %v305
    %1176 = vmatprep.subr.mxu0 0.0
    %1177 = vmatpush2.msra.mxu0 %v304
    %1178 = vmatprep.subr.mxu0 0.0
    %1179 = vmatpush2.msra.mxu0 %v303
    %1180 = vmatprep.subr.mxu0 0.0
    %1181 = vmatpush2.msra.mxu0 %v302
    %1182 = vmatprep.subr.mxu0 0.0
    %1183 = vmatpush2.msra.mxu0 %v301
    %1184 = vmatprep.subr.mxu0 0.0
    %1185 = vmatpush2.msra.mxu0 %v300
    %1186 = vmatprep.subr.mxu0 0.0
    %1187 = vmatpush2.msra.mxu0 %v299
    %1188 = vmatprep.subr.mxu0 0.0
    %1189 = vmatpush2.msra.mxu0 %v298
    %1190 = vmatprep.subr.mxu0 0.0
    %1191 = vmatpush2.msra.mxu0 %v297
    %1192 = vmatprep.subr.mxu0 0.0
    %1193 = vmatpush2.msra.mxu0 %v296
    %1194 = vmatprep.subr.mxu0 0.0
    %1195 = vmatpush2.msra.mxu0 %v295
    %1196 = vmatprep.subr.mxu0 0.0
    %1197 = vmatpush2.msra.mxu0 %v294
    %1198 = vmatprep.subr.mxu0 0.0
    %1199 = vmatpush2.msra.mxu0 %v293
    %1200 = vmatprep.mubr.f32.mxu0 %v525
    %1201 = vmatmul.mubr.f32.gmra.mxu0 %v517
    %v1202 = vpop.f32.mrf.mxu0
    %v1203 = vadd.f32 %v1133, %v1202
    %v1204 = vpop.f32.mrf.mxu0
    %1205 = vdwg.mxu0
    %1206 = vmatprep.subr.mxu0 0.0
    %1207 = vmatpush1.msra.mxu0 %v324
    %1208 = vmatprep.subr.mxu0 0.0
    %1209 = vmatpush1.msra.mxu0 %v323
    %1210 = vmatprep.subr.mxu0 0.0
    %1211 = vmatpush1.msra.mxu0 %v322
    %1212 = vmatprep.subr.mxu0 0.0
    %1213 = vmatpush1.msra.mxu0 %v321
    %1214 = vmatprep.subr.mxu0 0.0
    %1215 = vmatpush1.msra.mxu0 %v320
    %1216 = vmatprep.subr.mxu0 0.0
    %1217 = vmatpush1.msra.mxu0 %v319
    %1218 = vmatprep.subr.mxu0 0.0
    %1219 = vmatpush1.msra.mxu0 %v318
    %1220 = vmatprep.subr.mxu0 0.0
    %1221 = vmatpush1.msra.mxu0 %v317
    %1222 = vmatprep.subr.mxu0 0.0
    %1223 = vmatpush1.msra.mxu0 %v316
    %1224 = vmatprep.subr.mxu0 0.0
    %1225 = vmatpush1.msra.mxu0 %v315
    %1226 = vmatprep.subr.mxu0 0.0
    %1227 = vmatpush1.msra.mxu0 %v314
    %1228 = vmatprep.subr.mxu0 0.0
    %1229 = vmatpush1.msra.mxu0 %v313
    %1230 = vmatprep.subr.mxu0 0.0
    %1231 = vmatpush1.msra.mxu0 %v312
    %1232 = vmatprep.subr.mxu0 0.0
    %1233 = vmatpush1.msra.mxu0 %v311
    %1234 = vmatprep.subr.mxu0 0.0
    %1235 = vmatpush1.msra.mxu0 %v310
    %1236 = vmatprep.subr.mxu0 0.0
    %1237 = vmatpush1.msra.mxu0 %v309
    %1238 = vmatprep.subr.mxu0 0.0
    %1239 = vmatpush2.msra.mxu0 %v340
    %1240 = vmatprep.subr.mxu0 0.0
    %1241 = vmatpush2.msra.mxu0 %v339
    %1242 = vmatprep.subr.mxu0 0.0
    %1243 = vmatpush2.msra.mxu0 %v338
    %1244 = vmatprep.subr.mxu0 0.0
    %1245 = vmatpush2.msra.mxu0 %v337
    %1246 = vmatprep.subr.mxu0 0.0
    %1247 = vmatpush2.msra.mxu0 %v336
    %1248 = vmatprep.subr.mxu0 0.0
    %1249 = vmatpush2.msra.mxu0 %v335
    %1250 = vmatprep.subr.mxu0 0.0
    %1251 = vmatpush2.msra.mxu0 %v334
    %1252 = vmatprep.subr.mxu0 0.0
    %1253 = vmatpush2.msra.mxu0 %v333
    %1254 = vmatprep.subr.mxu0 0.0
    %1255 = vmatpush2.msra.mxu0 %v332
    %1256 = vmatprep.subr.mxu0 0.0
    %1257 = vmatpush2.msra.mxu0 %v331
    %1258 = vmatprep.subr.mxu0 0.0
    %1259 = vmatpush2.msra.mxu0 %v330
    %1260 = vmatprep.subr.mxu0 0.0
    %1261 = vmatpush2.msra.mxu0 %v329
    %1262 = vmatprep.subr.mxu0 0.0
    %1263 = vmatpush2.msra.mxu0 %v328
    %1264 = vmatprep.subr.mxu0 0.0
    %1265 = vmatpush2.msra.mxu0 %v327
    %1266 = vmatprep.subr.mxu0 0.0
    %1267 = vmatpush2.msra.mxu0 %v326
    %1268 = vmatprep.subr.mxu0 0.0
    %1269 = vmatpush2.msra.mxu0 %v325
    %1270 = vmatprep.mubr.f32.mxu0 %v526
    %1271 = vmatmul.mubr.f32.gmra.mxu0 %v524
    %v1272 = vpop.f32.mrf.mxu0
    %v1273 = vadd.f32 %v1203, %v1272
    %v1274 = vpop.f32.mrf.mxu0
    %1275 = vdwg.mxu0
    %1276 = vmatprep.subr.mxu0 0.0
    %1277 = vmatpush1.msra.mxu0 %v356
    %1278 = vmatprep.subr.mxu0 0.0
    %1279 = vmatpush1.msra.mxu0 %v355
    %1280 = vmatprep.subr.mxu0 0.0
    %1281 = vmatpush1.msra.mxu0 %v354
    %1282 = vmatprep.subr.mxu0 0.0
    %1283 = vmatpush1.msra.mxu0 %v353
    %1284 = vmatprep.subr.mxu0 0.0
    %1285 = vmatpush1.msra.mxu0 %v352
    %1286 = vmatprep.subr.mxu0 0.0
    %1287 = vmatpush1.msra.mxu0 %v351
    %1288 = vmatprep.subr.mxu0 0.0
    %1289 = vmatpush1.msra.mxu0 %v350
    %1290 = vmatprep.subr.mxu0 0.0
    %1291 = vmatpush1.msra.mxu0 %v349
    %1292 = vmatprep.subr.mxu0 0.0
    %1293 = vmatpush1.msra.mxu0 %v348
    %1294 = vmatprep.subr.mxu0 0.0
    %1295 = vmatpush1.msra.mxu0 %v347
    %1296 = vmatprep.subr.mxu0 0.0
    %1297 = vmatpush1.msra.mxu0 %v346
    %1298 = vmatprep.subr.mxu0 0.0
    %1299 = vmatpush1.msra.mxu0 %v345
    %1300 = vmatprep.subr.mxu0 0.0
    %1301 = vmatpush1.msra.mxu0 %v344
    %1302 = vmatprep.subr.mxu0 0.0
    %1303 = vmatpush1.msra.mxu0 %v343
    %1304 = vmatprep.subr.mxu0 0.0
    %1305 = vmatpush1.msra.mxu0 %v342
    %1306 = vmatprep.subr.mxu0 0.0
    %1307 = vmatpush1.msra.mxu0 %v341
    %1308 = vmatprep.subr.mxu0 0.0
    %1309 = vmatpush2.msra.mxu0 %v372
    %1310 = vmatprep.subr.mxu0 0.0
    %1311 = vmatpush2.msra.mxu0 %v371
    %1312 = vmatprep.subr.mxu0 0.0
    %1313 = vmatpush2.msra.mxu0 %v370
    %1314 = vmatprep.subr.mxu0 0.0
    %1315 = vmatpush2.msra.mxu0 %v369
    %1316 = vmatprep.subr.mxu0 0.0
    %1317 = vmatpush2.msra.mxu0 %v368
    %1318 = vmatprep.subr.mxu0 0.0
    %1319 = vmatpush2.msra.mxu0 %v367
    %1320 = vmatprep.subr.mxu0 0.0
    %1321 = vmatpush2.msra.mxu0 %v366
    %1322 = vmatprep.subr.mxu0 0.0
    %1323 = vmatpush2.msra.mxu0 %v365
    %1324 = vmatprep.subr.mxu0 0.0
    %1325 = vmatpush2.msra.mxu0 %v364
    %1326 = vmatprep.subr.mxu0 0.0
    %1327 = vmatpush2.msra.mxu0 %v363
    %1328 = vmatprep.subr.mxu0 0.0
    %1329 = vmatpush2.msra.mxu0 %v362
    %1330 = vmatprep.subr.mxu0 0.0
    %1331 = vmatpush2.msra.mxu0 %v361
    %1332 = vmatprep.subr.mxu0 0.0
    %1333 = vmatpush2.msra.mxu0 %v360
    %1334 = vmatprep.subr.mxu0 0.0
    %1335 = vmatpush2.msra.mxu0 %v359
    %1336 = vmatprep.subr.mxu0 0.0
    %1337 = vmatpush2.msra.mxu0 %v358
    %1338 = vmatprep.subr.mxu0 0.0
    %1339 = vmatpush2.msra.mxu0 %v357
    %1340 = vmatprep.mubr.f32.mxu0 %v542
    %1341 = vmatmul.mubr.f32.gmra.mxu0 %v534
    %v1342 = vpop.f32.mrf.mxu0
    %v1343 = vadd.f32 %v1273, %v1342
    %v1344 = vpop.f32.mrf.mxu0
    %1345 = vdwg.mxu0
    %1346 = vmatprep.subr.mxu0 0.0
    %1347 = vmatpush1.msra.mxu0 %v388
    %1348 = vmatprep.subr.mxu0 0.0
    %1349 = vmatpush1.msra.mxu0 %v387
    %1350 = vmatprep.subr.mxu0 0.0
    %1351 = vmatpush1.msra.mxu0 %v386
    %1352 = vmatprep.subr.mxu0 0.0
    %1353 = vmatpush1.msra.mxu0 %v385
    %1354 = vmatprep.subr.mxu0 0.0
    %1355 = vmatpush1.msra.mxu0 %v384
    %1356 = vmatprep.subr.mxu0 0.0
    %1357 = vmatpush1.msra.mxu0 %v383
    %1358 = vmatprep.subr.mxu0 0.0
    %1359 = vmatpush1.msra.mxu0 %v382
    %1360 = vmatprep.subr.mxu0 0.0
    %1361 = vmatpush1.msra.mxu0 %v381
    %1362 = vmatprep.subr.mxu0 0.0
    %1363 = vmatpush1.msra.mxu0 %v380
    %1364 = vmatprep.subr.mxu0 0.0
    %1365 = vmatpush1.msra.mxu0 %v379
    %1366 = vmatprep.subr.mxu0 0.0
    %1367 = vmatpush1.msra.mxu0 %v378
    %1368 = vmatprep.subr.mxu0 0.0
    %1369 = vmatpush1.msra.mxu0 %v377
    %1370 = vmatprep.subr.mxu0 0.0
    %1371 = vmatpush1.msra.mxu0 %v376
    %1372 = vmatprep.subr.mxu0 0.0
    %1373 = vmatpush1.msra.mxu0 %v375
    %1374 = vmatprep.subr.mxu0 0.0
    %1375 = vmatpush1.msra.mxu0 %v374
    %1376 = vmatprep.subr.mxu0 0.0
    %1377 = vmatpush1.msra.mxu0 %v373
    %1378 = vmatprep.subr.mxu0 0.0
    %1379 = vmatpush2.msra.mxu0 %v404
    %1380 = vmatprep.subr.mxu0 0.0
    %1381 = vmatpush2.msra.mxu0 %v403
    %1382 = vmatprep.subr.mxu0 0.0
    %1383 = vmatpush2.msra.mxu0 %v402
    %1384 = vmatprep.subr.mxu0 0.0
    %1385 = vmatpush2.msra.mxu0 %v401
    %1386 = vmatprep.subr.mxu0 0.0
    %1387 = vmatpush2.msra.mxu0 %v400
    %1388 = vmatprep.subr.mxu0 0.0
    %1389 = vmatpush2.msra.mxu0 %v399
    %1390 = vmatprep.subr.mxu0 0.0
    %1391 = vmatpush2.msra.mxu0 %v398
    %1392 = vmatprep.subr.mxu0 0.0
    %1393 = vmatpush2.msra.mxu0 %v397
    %1394 = vmatprep.subr.mxu0 0.0
    %1395 = vmatpush2.msra.mxu0 %v396
    %1396 = vmatprep.subr.mxu0 0.0
    %1397 = vmatpush2.msra.mxu0 %v395
    %1398 = vmatprep.subr.mxu0 0.0
    %1399 = vmatpush2.msra.mxu0 %v394
    %1400 = vmatprep.subr.mxu0 0.0
    %1401 = vmatpush2.msra.mxu0 %v393
    %1402 = vmatprep.subr.mxu0 0.0
    %1403 = vmatpush2.msra.mxu0 %v392
    %1404 = vmatprep.subr.mxu0 0.0
    %1405 = vmatpush2.msra.mxu0 %v391
    %1406 = vmatprep.subr.mxu0 0.0
    %1407 = vmatpush2.msra.mxu0 %v390
    %1408 = vmatprep.subr.mxu0 0.0
    %1409 = vmatpush2.msra.mxu0 %v389
    %1410 = vmatprep.mubr.f32.mxu0 %v543
    %1411 = vmatmul.mubr.f32.gmra.mxu0 %v541
    %v1412 = vpop.f32.mrf.mxu0
    %v1413 = vadd.f32 %v1343, %v1412
    %v1414 = vpop.f32.mrf.mxu0
    %1415 = vdwg.mxu0
    %1416 = vmatprep.subr.mxu0 0.0
    %1417 = vmatpush1.msra.mxu0 %v420
    %1418 = vmatprep.subr.mxu0 0.0
    %1419 = vmatpush1.msra.mxu0 %v419
    %1420 = vmatprep.subr.mxu0 0.0
    %1421 = vmatpush1.msra.mxu0 %v418
    %1422 = vmatprep.subr.mxu0 0.0
    %1423 = vmatpush1.msra.mxu0 %v417
    %1424 = vmatprep.subr.mxu0 0.0
    %1425 = vmatpush1.msra.mxu0 %v416
    %1426 = vmatprep.subr.mxu0 0.0
    %1427 = vmatpush1.msra.mxu0 %v415
    %1428 = vmatprep.subr.mxu0 0.0
    %1429 = vmatpush1.msra.mxu0 %v414
    %1430 = vmatprep.subr.mxu0 0.0
    %1431 = vmatpush1.msra.mxu0 %v413
    %1432 = vmatprep.subr.mxu0 0.0
    %1433 = vmatpush1.msra.mxu0 %v412
    %1434 = vmatprep.subr.mxu0 0.0
    %1435 = vmatpush1.msra.mxu0 %v411
    %1436 = vmatprep.subr.mxu0 0.0
    %1437 = vmatpush1.msra.mxu0 %v410
    %1438 = vmatprep.subr.mxu0 0.0
    %1439 = vmatpush1.msra.mxu0 %v409
    %1440 = vmatprep.subr.mxu0 0.0
    %1441 = vmatpush1.msra.mxu0 %v408
    %1442 = vmatprep.subr.mxu0 0.0
    %1443 = vmatpush1.msra.mxu0 %v407
    %1444 = vmatprep.subr.mxu0 0.0
    %1445 = vmatpush1.msra.mxu0 %v406
    %1446 = vmatprep.subr.mxu0 0.0
    %1447 = vmatpush1.msra.mxu0 %v405
    %1448 = vmatprep.subr.mxu0 0.0
    %1449 = vmatpush2.msra.mxu0 0.0
    %1450 = vmatprep.subr.mxu0 0.0
    %1451 = vmatpush2.msra.mxu0 0.0
    %1452 = vmatprep.subr.mxu0 0.0
    %1453 = vmatpush2.msra.mxu0 0.0
    %1454 = vmatprep.subr.mxu0 0.0
    %1455 = vmatpush2.msra.mxu0 0.0
    %1456 = vmatprep.subr.mxu0 0.0
    %1457 = vmatpush2.msra.mxu0 0.0
    %1458 = vmatprep.subr.mxu0 0.0
    %1459 = vmatpush2.msra.mxu0 0.0
    %1460 = vmatprep.subr.mxu0 0.0
    %1461 = vmatpush2.msra.mxu0 0.0
    %1462 = vmatprep.subr.mxu0 0.0
    %1463 = vmatpush2.msra.mxu0 0.0
    %1464 = vmatprep.subr.mxu0 0.0
    %1465 = vmatpush2.msra.mxu0 0.0
    %1466 = vmatprep.subr.mxu0 0.0
    %1467 = vmatpush2.msra.mxu0 0.0
    %1468 = vmatprep.subr.mxu0 0.0
    %1469 = vmatpush2.msra.mxu0 0.0
    %1470 = vmatprep.subr.mxu0 0.0
    %1471 = vmatpush2.msra.mxu0 0.0
    %1472 = vmatprep.subr.mxu0 0.0
    %1473 = vmatpush2.msra.mxu0 0.0
    %1474 = vmatprep.subr.mxu0 0.0
    %1475 = vmatpush2.msra.mxu0 0.0
    %1476 = vmatprep.subr.mxu0 0.0
    %1477 = vmatpush2.msra.mxu0 0.0
    %1478 = vmatprep.subr.mxu0 0.0
    %1479 = vmatpush2.msra.mxu0 0.0
    %1480 = vmatprep.mubr.f32.mxu0 0.0
    %1481 = vmatmul.mubr.f32.gmra.mxu0 %v550
    %v1482 = vpop.f32.mrf.mxu0
    %v1483 = vadd.f32 %v1413, %v1482
    %v1484 = vpop.f32.mrf.mxu0
    %1485 = vdwg.mxu0
    %v1486 = vld [vmem:[%s1] sm:$0xff]
    %v1487 = vld [vmem:[%s1 + $0x8] sm:$0xff]
    %v1488 = vld [vmem:[%s1 + $0x10] sm:$0xff]
    %v1489 = vld [vmem:[%s1 + $0x18] sm:$0xff]
    %v1490 = vld [vmem:[%s1 + $0x20] sm:$0xff]
    %v1491 = vld [vmem:[%s1 + $0x28] sm:$0xff]
    %v1492 = vld [vmem:[%s1 + $0x30] sm:$0x3]
    %v1500 = vcombine.high %v1486, %v1486
    %v1502 = vunpack.c.l.s4 1983009808
    %v1503 = vunpack.c.0.s8 %v1502
    %v1504 = vlaneseq
    %v1505 = vshrl.u32 %v1504, 7
    %v1506 = vsub.s32 %v1503, %v1505
    %v1507 = vrot.slane %v1486, %v1506
    %v1509 = vunpack.c.l.s4 1983009808
    %v1510 = vunpack.c.0.s8 %v1509
    %v1511 = vlaneseq
    %v1512 = vshrl.u32 %v1511, 7
    %v1513 = vsub.s32 %v1510, %v1512
    %v1514 = vrot.slane %v1500, %v1513
    %v1515 = vcombine.high %v1507, %v1507
    %v1516 = vcombine.high %v1514, %v1514
    %v1517 = vcombine.high %v1487, %v1487
    %v1519 = vunpack.c.l.s4 1983009808
    %v1520 = vunpack.c.0.s8 %v1519
    %v1521 = vlaneseq
    %v1522 = vshrl.u32 %v1521, 7
    %v1523 = vsub.s32 %v1520, %v1522
    %v1524 = vrot.slane %v1487, %v1523
    %v1526 = vunpack.c.l.s4 1983009808
    %v1527 = vunpack.c.0.s8 %v1526
    %v1528 = vlaneseq
    %v1529 = vshrl.u32 %v1528, 7
    %v1530 = vsub.s32 %v1527, %v1529
    %v1531 = vrot.slane %v1517, %v1530
    %v1532 = vcombine.high %v1524, %v1524
    %v1533 = vcombine.high %v1531, %v1531
    %v1534 = vcombine.high %v1488, %v1488
    %v1536 = vunpack.c.l.s4 1983009808
    %v1537 = vunpack.c.0.s8 %v1536
    %v1538 = vlaneseq
    %v1539 = vshrl.u32 %v1538, 7
    %v1540 = vsub.s32 %v1537, %v1539
    %v1541 = vrot.slane %v1488, %v1540
    %v1543 = vunpack.c.l.s4 1983009808
    %v1544 = vunpack.c.0.s8 %v1543
    %v1545 = vlaneseq
    %v1546 = vshrl.u32 %v1545, 7
    %v1547 = vsub.s32 %v1544, %v1546
    %v1548 = vrot.slane %v1534, %v1547
    %v1549 = vcombine.high %v1541, %v1541
    %v1550 = vcombine.high %v1548, %v1548
    %v1551 = vcombine.high %v1489, %v1489
    %v1553 = vunpack.c.l.s4 1983009808
    %v1554 = vunpack.c.0.s8 %v1553
    %v1555 = vlaneseq
    %v1556 = vshrl.u32 %v1555, 7
    %v1557 = vsub.s32 %v1554, %v1556
    %v1558 = vrot.slane %v1489, %v1557
    %v1560 = vunpack.c.l.s4 1983009808
    %v1561 = vunpack.c.0.s8 %v1560
    %v1562 = vlaneseq
    %v1563 = vshrl.u32 %v1562, 7
    %v1564 = vsub.s32 %v1561, %v1563
    %v1565 = vrot.slane %v1551, %v1564
    %v1566 = vcombine.high %v1558, %v1558
    %v1567 = vcombine.high %v1565, %v1565
    %v1568 = vcombine.high %v1490, %v1490
    %v1570 = vunpack.c.l.s4 1983009808
    %v1571 = vunpack.c.0.s8 %v1570
    %v1572 = vlaneseq
    %v1573 = vshrl.u32 %v1572, 7
    %v1574 = vsub.s32 %v1571, %v1573
    %v1575 = vrot.slane %v1490, %v1574
    %v1577 = vunpack.c.l.s4 1983009808
    %v1578 = vunpack.c.0.s8 %v1577
    %v1579 = vlaneseq
    %v1580 = vshrl.u32 %v1579, 7
    %v1581 = vsub.s32 %v1578, %v1580
    %v1582 = vrot.slane %v1568, %v1581
    %v1583 = vcombine.high %v1575, %v1575
    %v1584 = vcombine.high %v1582, %v1582
    %v1585 = vcombine.high %v1491, %v1491
    %v1587 = vunpack.c.l.s4 1983009808
    %v1588 = vunpack.c.0.s8 %v1587
    %v1589 = vlaneseq
    %v1590 = vshrl.u32 %v1589, 7
    %v1591 = vsub.s32 %v1588, %v1590
    %v1592 = vrot.slane %v1491, %v1591
    %v1594 = vunpack.c.l.s4 1983009808
    %v1595 = vunpack.c.0.s8 %v1594
    %v1596 = vlaneseq
    %v1597 = vshrl.u32 %v1596, 7
    %v1598 = vsub.s32 %v1595, %v1597
    %v1599 = vrot.slane %v1585, %v1598
    %v1600 = vcombine.high %v1592, %v1592
    %v1601 = vcombine.high %v1599, %v1599
    %v1603 = vunpack.c.l.s4 1983009808
    %v1604 = vunpack.c.0.s8 %v1603
    %v1605 = vlaneseq
    %v1606 = vshrl.u32 %v1605, 7
    %v1607 = vsub.s32 %v1604, %v1606
    %v1608 = vrot.slane %v1492, %v1607
    %1634 = vmatprep.subr.mxu0 0.0
    %1635 = vmatpush1.msra.mxu0 %v36
    %1636 = vmatprep.subr.mxu0 0.0
    %1637 = vmatpush1.msra.mxu0 %v35
    %1638 = vmatprep.subr.mxu0 0.0
    %1639 = vmatpush1.msra.mxu0 %v34
    %1640 = vmatprep.subr.mxu0 0.0
    %1641 = vmatpush1.msra.mxu0 %v33
    %1642 = vmatprep.subr.mxu0 0.0
    %1643 = vmatpush1.msra.mxu0 %v32
    %1644 = vmatprep.subr.mxu0 0.0
    %1645 = vmatpush1.msra.mxu0 %v31
    %1646 = vmatprep.subr.mxu0 0.0
    %1647 = vmatpush1.msra.mxu0 %v30
    %1648 = vmatprep.subr.mxu0 0.0
    %1649 = vmatpush1.msra.mxu0 %v29
    %1650 = vmatprep.subr.mxu0 0.0
    %1651 = vmatpush1.msra.mxu0 %v28
    %1652 = vmatprep.subr.mxu0 0.0
    %1653 = vmatpush1.msra.mxu0 %v27
    %1654 = vmatprep.subr.mxu0 0.0
    %1655 = vmatpush1.msra.mxu0 %v26
    %1656 = vmatprep.subr.mxu0 0.0
    %1657 = vmatpush1.msra.mxu0 %v25
    %1658 = vmatprep.subr.mxu0 0.0
    %1659 = vmatpush1.msra.mxu0 %v24
    %1660 = vmatprep.subr.mxu0 0.0
    %1661 = vmatpush1.msra.mxu0 %v23
    %1662 = vmatprep.subr.mxu0 0.0
    %1663 = vmatpush1.msra.mxu0 %v22
    %1664 = vmatprep.subr.mxu0 0.0
    %1665 = vmatpush1.msra.mxu0 %v21
    %1666 = vmatprep.subr.mxu0 0.0
    %1667 = vmatpush2.msra.mxu0 %v52
    %1668 = vmatprep.subr.mxu0 0.0
    %1669 = vmatpush2.msra.mxu0 %v51
    %1670 = vmatprep.subr.mxu0 0.0
    %1671 = vmatpush2.msra.mxu0 %v50
    %1672 = vmatprep.subr.mxu0 0.0
    %1673 = vmatpush2.msra.mxu0 %v49
    %1674 = vmatprep.subr.mxu0 0.0
    %1675 = vmatpush2.msra.mxu0 %v48
    %1676 = vmatprep.subr.mxu0 0.0
    %1677 = vmatpush2.msra.mxu0 %v47
    %1678 = vmatprep.subr.mxu0 0.0
    %1679 = vmatpush2.msra.mxu0 %v46
    %1680 = vmatprep.subr.mxu0 0.0
    %1681 = vmatpush2.msra.mxu0 %v45
    %1682 = vmatprep.subr.mxu0 0.0
    %1683 = vmatpush2.msra.mxu0 %v44
    %1684 = vmatprep.subr.mxu0 0.0
    %1685 = vmatpush2.msra.mxu0 %v43
    %1686 = vmatprep.subr.mxu0 0.0
    %1687 = vmatpush2.msra.mxu0 %v42
    %1688 = vmatprep.subr.mxu0 0.0
    %1689 = vmatpush2.msra.mxu0 %v41
    %1690 = vmatprep.subr.mxu0 0.0
    %1691 = vmatpush2.msra.mxu0 %v40
    %1692 = vmatprep.subr.mxu0 0.0
    %1693 = vmatpush2.msra.mxu0 %v39
    %1694 = vmatprep.subr.mxu0 0.0
    %1695 = vmatpush2.msra.mxu0 %v38
    %1696 = vmatprep.subr.mxu0 0.0
    %1697 = vmatpush2.msra.mxu0 %v37
    %1698 = vmatprep.mubr.f32.mxu0 %v1515
    %1699 = vmatmul.mubr.f32.gmra.mxu0 %v1507
    %v1700 = vpop.f32.mrf.mxu0
    %v1701 = vadd.f32 %v433, %v1700
    %v1702 = vpop.f32.mrf.mxu0
    %1703 = vdwg.mxu0
    %1704 = vmatprep.subr.mxu0 0.0
    %1705 = vmatpush1.msra.mxu0 %v68
    %1706 = vmatprep.subr.mxu0 0.0
    %1707 = vmatpush1.msra.mxu0 %v67
    %1708 = vmatprep.subr.mxu0 0.0
    %1709 = vmatpush1.msra.mxu0 %v66
    %1710 = vmatprep.subr.mxu0 0.0
    %1711 = vmatpush1.msra.mxu0 %v65
    %1712 = vmatprep.subr.mxu0 0.0
    %1713 = vmatpush1.msra.mxu0 %v64
    %1714 = vmatprep.subr.mxu0 0.0
    %1715 = vmatpush1.msra.mxu0 %v63
    %1716 = vmatprep.subr.mxu0 0.0
    %1717 = vmatpush1.msra.mxu0 %v62
    %1718 = vmatprep.subr.mxu0 0.0
    %1719 = vmatpush1.msra.mxu0 %v61
    %1720 = vmatprep.subr.mxu0 0.0
    %1721 = vmatpush1.msra.mxu0 %v60
    %1722 = vmatprep.subr.mxu0 0.0
    %1723 = vmatpush1.msra.mxu0 %v59
    %1724 = vmatprep.subr.mxu0 0.0
    %1725 = vmatpush1.msra.mxu0 %v58
    %1726 = vmatprep.subr.mxu0 0.0
    %1727 = vmatpush1.msra.mxu0 %v57
    %1728 = vmatprep.subr.mxu0 0.0
    %1729 = vmatpush1.msra.mxu0 %v56
    %1730 = vmatprep.subr.mxu0 0.0
    %1731 = vmatpush1.msra.mxu0 %v55
    %1732 = vmatprep.subr.mxu0 0.0
    %1733 = vmatpush1.msra.mxu0 %v54
    %1734 = vmatprep.subr.mxu0 0.0
    %1735 = vmatpush1.msra.mxu0 %v53
    %1736 = vmatprep.subr.mxu0 0.0
    %1737 = vmatpush2.msra.mxu0 %v84
    %1738 = vmatprep.subr.mxu0 0.0
    %1739 = vmatpush2.msra.mxu0 %v83
    %1740 = vmatprep.subr.mxu0 0.0
    %1741 = vmatpush2.msra.mxu0 %v82
    %1742 = vmatprep.subr.mxu0 0.0
    %1743 = vmatpush2.msra.mxu0 %v81
    %1744 = vmatprep.subr.mxu0 0.0
    %1745 = vmatpush2.msra.mxu0 %v80
    %1746 = vmatprep.subr.mxu0 0.0
    %1747 = vmatpush2.msra.mxu0 %v79
    %1748 = vmatprep.subr.mxu0 0.0
    %1749 = vmatpush2.msra.mxu0 %v78
    %1750 = vmatprep.subr.mxu0 0.0
    %1751 = vmatpush2.msra.mxu0 %v77
    %1752 = vmatprep.subr.mxu0 0.0
    %1753 = vmatpush2.msra.mxu0 %v76
    %1754 = vmatprep.subr.mxu0 0.0
    %1755 = vmatpush2.msra.mxu0 %v75
    %1756 = vmatprep.subr.mxu0 0.0
    %1757 = vmatpush2.msra.mxu0 %v74
    %1758 = vmatprep.subr.mxu0 0.0
    %1759 = vmatpush2.msra.mxu0 %v73
    %1760 = vmatprep.subr.mxu0 0.0
    %1761 = vmatpush2.msra.mxu0 %v72
    %1762 = vmatprep.subr.mxu0 0.0
    %1763 = vmatpush2.msra.mxu0 %v71
    %1764 = vmatprep.subr.mxu0 0.0
    %1765 = vmatpush2.msra.mxu0 %v70
    %1766 = vmatprep.subr.mxu0 0.0
    %1767 = vmatpush2.msra.mxu0 %v69
    %1768 = vmatprep.mubr.f32.mxu0 %v1516
    %1769 = vmatmul.mubr.f32.gmra.mxu0 %v1514
    %v1770 = vpop.f32.mrf.mxu0
    %v1771 = vadd.f32 %v1701, %v1770
    %v1772 = vpop.f32.mrf.mxu0
    %1773 = vdwg.mxu0
    %1774 = vmatprep.subr.mxu0 0.0
    %1775 = vmatpush1.msra.mxu0 %v100
    %1776 = vmatprep.subr.mxu0 0.0
    %1777 = vmatpush1.msra.mxu0 %v99
    %1778 = vmatprep.subr.mxu0 0.0
    %1779 = vmatpush1.msra.mxu0 %v98
    %1780 = vmatprep.subr.mxu0 0.0
    %1781 = vmatpush1.msra.mxu0 %v97
    %1782 = vmatprep.subr.mxu0 0.0
    %1783 = vmatpush1.msra.mxu0 %v96
    %1784 = vmatprep.subr.mxu0 0.0
    %1785 = vmatpush1.msra.mxu0 %v95
    %1786 = vmatprep.subr.mxu0 0.0
    %1787 = vmatpush1.msra.mxu0 %v94
    %1788 = vmatprep.subr.mxu0 0.0
    %1789 = vmatpush1.msra.mxu0 %v93
    %1790 = vmatprep.subr.mxu0 0.0
    %1791 = vmatpush1.msra.mxu0 %v92
    %1792 = vmatprep.subr.mxu0 0.0
    %1793 = vmatpush1.msra.mxu0 %v91
    %1794 = vmatprep.subr.mxu0 0.0
    %1795 = vmatpush1.msra.mxu0 %v90
    %1796 = vmatprep.subr.mxu0 0.0
    %1797 = vmatpush1.msra.mxu0 %v89
    %1798 = vmatprep.subr.mxu0 0.0
    %1799 = vmatpush1.msra.mxu0 %v88
    %1800 = vmatprep.subr.mxu0 0.0
    %1801 = vmatpush1.msra.mxu0 %v87
    %1802 = vmatprep.subr.mxu0 0.0
    %1803 = vmatpush1.msra.mxu0 %v86
    %1804 = vmatprep.subr.mxu0 0.0
    %1805 = vmatpush1.msra.mxu0 %v85
    %1806 = vmatprep.subr.mxu0 0.0
    %1807 = vmatpush2.msra.mxu0 %v116
    %1808 = vmatprep.subr.mxu0 0.0
    %1809 = vmatpush2.msra.mxu0 %v115
    %1810 = vmatprep.subr.mxu0 0.0
    %1811 = vmatpush2.msra.mxu0 %v114
    %1812 = vmatprep.subr.mxu0 0.0
    %1813 = vmatpush2.msra.mxu0 %v113
    %1814 = vmatprep.subr.mxu0 0.0
    %1815 = vmatpush2.msra.mxu0 %v112
    %1816 = vmatprep.subr.mxu0 0.0
    %1817 = vmatpush2.msra.mxu0 %v111
    %1818 = vmatprep.subr.mxu0 0.0
    %1819 = vmatpush2.msra.mxu0 %v110
    %1820 = vmatprep.subr.mxu0 0.0
    %1821 = vmatpush2.msra.mxu0 %v109
    %1822 = vmatprep.subr.mxu0 0.0
    %1823 = vmatpush2.msra.mxu0 %v108
    %1824 = vmatprep.subr.mxu0 0.0
    %1825 = vmatpush2.msra.mxu0 %v107
    %1826 = vmatprep.subr.mxu0 0.0
    %1827 = vmatpush2.msra.mxu0 %v106
    %1828 = vmatprep.subr.mxu0 0.0
    %1829 = vmatpush2.msra.mxu0 %v105
    %1830 = vmatprep.subr.mxu0 0.0
    %1831 = vmatpush2.msra.mxu0 %v104
    %1832 = vmatprep.subr.mxu0 0.0
    %1833 = vmatpush2.msra.mxu0 %v103
    %1834 = vmatprep.subr.mxu0 0.0
    %1835 = vmatpush2.msra.mxu0 %v102
    %1836 = vmatprep.subr.mxu0 0.0
    %1837 = vmatpush2.msra.mxu0 %v101
    %1838 = vmatprep.mubr.f32.mxu0 %v1532
    %1839 = vmatmul.mubr.f32.gmra.mxu0 %v1524
    %v1840 = vpop.f32.mrf.mxu0
    %v1841 = vadd.f32 %v1771, %v1840
    %v1842 = vpop.f32.mrf.mxu0
    %1843 = vdwg.mxu0
    %1844 = vmatprep.subr.mxu0 0.0
    %1845 = vmatpush1.msra.mxu0 %v132
    %1846 = vmatprep.subr.mxu0 0.0
    %1847 = vmatpush1.msra.mxu0 %v131
    %1848 = vmatprep.subr.mxu0 0.0
    %1849 = vmatpush1.msra.mxu0 %v130
    %1850 = vmatprep.subr.mxu0 0.0
    %1851 = vmatpush1.msra.mxu0 %v129
    %1852 = vmatprep.subr.mxu0 0.0
    %1853 = vmatpush1.msra.mxu0 %v128
    %1854 = vmatprep.subr.mxu0 0.0
    %1855 = vmatpush1.msra.mxu0 %v127
    %1856 = vmatprep.subr.mxu0 0.0
    %1857 = vmatpush1.msra.mxu0 %v126
    %1858 = vmatprep.subr.mxu0 0.0
    %1859 = vmatpush1.msra.mxu0 %v125
    %1860 = vmatprep.subr.mxu0 0.0
    %1861 = vmatpush1.msra.mxu0 %v124
    %1862 = vmatprep.subr.mxu0 0.0
    %1863 = vmatpush1.msra.mxu0 %v123
    %1864 = vmatprep.subr.mxu0 0.0
    %1865 = vmatpush1.msra.mxu0 %v122
    %1866 = vmatprep.subr.mxu0 0.0
    %1867 = vmatpush1.msra.mxu0 %v121
    %1868 = vmatprep.subr.mxu0 0.0
    %1869 = vmatpush1.msra.mxu0 %v120
    %1870 = vmatprep.subr.mxu0 0.0
    %1871 = vmatpush1.msra.mxu0 %v119
    %1872 = vmatprep.subr.mxu0 0.0
    %1873 = vmatpush1.msra.mxu0 %v118
    %1874 = vmatprep.subr.mxu0 0.0
    %1875 = vmatpush1.msra.mxu0 %v117
    %1876 = vmatprep.subr.mxu0 0.0
    %1877 = vmatpush2.msra.mxu0 %v148
    %1878 = vmatprep.subr.mxu0 0.0
    %1879 = vmatpush2.msra.mxu0 %v147
    %1880 = vmatprep.subr.mxu0 0.0
    %1881 = vmatpush2.msra.mxu0 %v146
    %1882 = vmatprep.subr.mxu0 0.0
    %1883 = vmatpush2.msra.mxu0 %v145
    %1884 = vmatprep.subr.mxu0 0.0
    %1885 = vmatpush2.msra.mxu0 %v144
    %1886 = vmatprep.subr.mxu0 0.0
    %1887 = vmatpush2.msra.mxu0 %v143
    %1888 = vmatprep.subr.mxu0 0.0
    %1889 = vmatpush2.msra.mxu0 %v142
    %1890 = vmatprep.subr.mxu0 0.0
    %1891 = vmatpush2.msra.mxu0 %v141
    %1892 = vmatprep.subr.mxu0 0.0
    %1893 = vmatpush2.msra.mxu0 %v140
    %1894 = vmatprep.subr.mxu0 0.0
    %1895 = vmatpush2.msra.mxu0 %v139
    %1896 = vmatprep.subr.mxu0 0.0
    %1897 = vmatpush2.msra.mxu0 %v138
    %1898 = vmatprep.subr.mxu0 0.0
    %1899 = vmatpush2.msra.mxu0 %v137
    %1900 = vmatprep.subr.mxu0 0.0
    %1901 = vmatpush2.msra.mxu0 %v136
    %1902 = vmatprep.subr.mxu0 0.0
    %1903 = vmatpush2.msra.mxu0 %v135
    %1904 = vmatprep.subr.mxu0 0.0
    %1905 = vmatpush2.msra.mxu0 %v134
    %1906 = vmatprep.subr.mxu0 0.0
    %1907 = vmatpush2.msra.mxu0 %v133
    %1908 = vmatprep.mubr.f32.mxu0 %v1533
    %1909 = vmatmul.mubr.f32.gmra.mxu0 %v1531
    %v1910 = vpop.f32.mrf.mxu0
    %v1911 = vadd.f32 %v1841, %v1910
    %v1912 = vpop.f32.mrf.mxu0
    %1913 = vdwg.mxu0
    %1914 = vmatprep.subr.mxu0 0.0
    %1915 = vmatpush1.msra.mxu0 %v164
    %1916 = vmatprep.subr.mxu0 0.0
    %1917 = vmatpush1.msra.mxu0 %v163
    %1918 = vmatprep.subr.mxu0 0.0
    %1919 = vmatpush1.msra.mxu0 %v162
    %1920 = vmatprep.subr.mxu0 0.0
    %1921 = vmatpush1.msra.mxu0 %v161
    %1922 = vmatprep.subr.mxu0 0.0
    %1923 = vmatpush1.msra.mxu0 %v160
    %1924 = vmatprep.subr.mxu0 0.0
    %1925 = vmatpush1.msra.mxu0 %v159
    %1926 = vmatprep.subr.mxu0 0.0
    %1927 = vmatpush1.msra.mxu0 %v158
    %1928 = vmatprep.subr.mxu0 0.0
    %1929 = vmatpush1.msra.mxu0 %v157
    %1930 = vmatprep.subr.mxu0 0.0
    %1931 = vmatpush1.msra.mxu0 %v156
    %1932 = vmatprep.subr.mxu0 0.0
    %1933 = vmatpush1.msra.mxu0 %v155
    %1934 = vmatprep.subr.mxu0 0.0
    %1935 = vmatpush1.msra.mxu0 %v154
    %1936 = vmatprep.subr.mxu0 0.0
    %1937 = vmatpush1.msra.mxu0 %v153
    %1938 = vmatprep.subr.mxu0 0.0
    %1939 = vmatpush1.msra.mxu0 %v152
    %1940 = vmatprep.subr.mxu0 0.0
    %1941 = vmatpush1.msra.mxu0 %v151
    %1942 = vmatprep.subr.mxu0 0.0
    %1943 = vmatpush1.msra.mxu0 %v150
    %1944 = vmatprep.subr.mxu0 0.0
    %1945 = vmatpush1.msra.mxu0 %v149
    %1946 = vmatprep.subr.mxu0 0.0
    %1947 = vmatpush2.msra.mxu0 %v180
    %1948 = vmatprep.subr.mxu0 0.0
    %1949 = vmatpush2.msra.mxu0 %v179
    %1950 = vmatprep.subr.mxu0 0.0
    %1951 = vmatpush2.msra.mxu0 %v178
    %1952 = vmatprep.subr.mxu0 0.0
    %1953 = vmatpush2.msra.mxu0 %v177
    %1954 = vmatprep.subr.mxu0 0.0
    %1955 = vmatpush2.msra.mxu0 %v176
    %1956 = vmatprep.subr.mxu0 0.0
    %1957 = vmatpush2.msra.mxu0 %v175
    %1958 = vmatprep.subr.mxu0 0.0
    %1959 = vmatpush2.msra.mxu0 %v174
    %1960 = vmatprep.subr.mxu0 0.0
    %1961 = vmatpush2.msra.mxu0 %v173
    %1962 = vmatprep.subr.mxu0 0.0
    %1963 = vmatpush2.msra.mxu0 %v172
    %1964 = vmatprep.subr.mxu0 0.0
    %1965 = vmatpush2.msra.mxu0 %v171
    %1966 = vmatprep.subr.mxu0 0.0
    %1967 = vmatpush2.msra.mxu0 %v170
    %1968 = vmatprep.subr.mxu0 0.0
    %1969 = vmatpush2.msra.mxu0 %v169
    %1970 = vmatprep.subr.mxu0 0.0
    %1971 = vmatpush2.msra.mxu0 %v168
    %1972 = vmatprep.subr.mxu0 0.0
    %1973 = vmatpush2.msra.mxu0 %v167
    %1974 = vmatprep.subr.mxu0 0.0
    %1975 = vmatpush2.msra.mxu0 %v166
    %1976 = vmatprep.subr.mxu0 0.0
    %1977 = vmatpush2.msra.mxu0 %v165
    %1978 = vmatprep.mubr.f32.mxu0 %v1549
    %1979 = vmatmul.mubr.f32.gmra.mxu0 %v1541
    %v1980 = vpop.f32.mrf.mxu0
    %v1981 = vadd.f32 %v1911, %v1980
    %v1982 = vpop.f32.mrf.mxu0
    %1983 = vdwg.mxu0
    %1984 = vmatprep.subr.mxu0 0.0
    %1985 = vmatpush1.msra.mxu0 %v196
    %1986 = vmatprep.subr.mxu0 0.0
    %1987 = vmatpush1.msra.mxu0 %v195
    %1988 = vmatprep.subr.mxu0 0.0
    %1989 = vmatpush1.msra.mxu0 %v194
    %1990 = vmatprep.subr.mxu0 0.0
    %1991 = vmatpush1.msra.mxu0 %v193
    %1992 = vmatprep.subr.mxu0 0.0
    %1993 = vmatpush1.msra.mxu0 %v192
    %1994 = vmatprep.subr.mxu0 0.0
    %1995 = vmatpush1.msra.mxu0 %v191
    %1996 = vmatprep.subr.mxu0 0.0
    %1997 = vmatpush1.msra.mxu0 %v190
    %1998 = vmatprep.subr.mxu0 0.0
    %1999 = vmatpush1.msra.mxu0 %v189
    %2000 = vmatprep.subr.mxu0 0.0
    %2001 = vmatpush1.msra.mxu0 %v188
    %2002 = vmatprep.subr.mxu0 0.0
    %2003 = vmatpush1.msra.mxu0 %v187
    %2004 = vmatprep.subr.mxu0 0.0
    %2005 = vmatpush1.msra.mxu0 %v186
    %2006 = vmatprep.subr.mxu0 0.0
    %2007 = vmatpush1.msra.mxu0 %v185
    %2008 = vmatprep.subr.mxu0 0.0
    %2009 = vmatpush1.msra.mxu0 %v184
    %2010 = vmatprep.subr.mxu0 0.0
    %2011 = vmatpush1.msra.mxu0 %v183
    %2012 = vmatprep.subr.mxu0 0.0
    %2013 = vmatpush1.msra.mxu0 %v182
    %2014 = vmatprep.subr.mxu0 0.0
    %2015 = vmatpush1.msra.mxu0 %v181
    %2016 = vmatprep.subr.mxu0 0.0
    %2017 = vmatpush2.msra.mxu0 %v212
    %2018 = vmatprep.subr.mxu0 0.0
    %2019 = vmatpush2.msra.mxu0 %v211
    %2020 = vmatprep.subr.mxu0 0.0
    %2021 = vmatpush2.msra.mxu0 %v210
    %2022 = vmatprep.subr.mxu0 0.0
    %2023 = vmatpush2.msra.mxu0 %v209
    %2024 = vmatprep.subr.mxu0 0.0
    %2025 = vmatpush2.msra.mxu0 %v208
    %2026 = vmatprep.subr.mxu0 0.0
    %2027 = vmatpush2.msra.mxu0 %v207
    %2028 = vmatprep.subr.mxu0 0.0
    %2029 = vmatpush2.msra.mxu0 %v206
    %2030 = vmatprep.subr.mxu0 0.0
    %2031 = vmatpush2.msra.mxu0 %v205
    %2032 = vmatprep.subr.mxu0 0.0
    %2033 = vmatpush2.msra.mxu0 %v204
    %2034 = vmatprep.subr.mxu0 0.0
    %2035 = vmatpush2.msra.mxu0 %v203
    %2036 = vmatprep.subr.mxu0 0.0
    %2037 = vmatpush2.msra.mxu0 %v202
    %2038 = vmatprep.subr.mxu0 0.0
    %2039 = vmatpush2.msra.mxu0 %v201
    %2040 = vmatprep.subr.mxu0 0.0
    %2041 = vmatpush2.msra.mxu0 %v200
    %2042 = vmatprep.subr.mxu0 0.0
    %2043 = vmatpush2.msra.mxu0 %v199
    %2044 = vmatprep.subr.mxu0 0.0
    %2045 = vmatpush2.msra.mxu0 %v198
    %2046 = vmatprep.subr.mxu0 0.0
    %2047 = vmatpush2.msra.mxu0 %v197
    %2048 = vmatprep.mubr.f32.mxu0 %v1550
    %2049 = vmatmul.mubr.f32.gmra.mxu0 %v1548
    %v2050 = vpop.f32.mrf.mxu0
    %v2051 = vadd.f32 %v1981, %v2050
    %v2052 = vpop.f32.mrf.mxu0
    %2053 = vdwg.mxu0
    %2054 = vmatprep.subr.mxu0 0.0
    %2055 = vmatpush1.msra.mxu0 %v228
    %2056 = vmatprep.subr.mxu0 0.0
    %2057 = vmatpush1.msra.mxu0 %v227
    %2058 = vmatprep.subr.mxu0 0.0
    %2059 = vmatpush1.msra.mxu0 %v226
    %2060 = vmatprep.subr.mxu0 0.0
    %2061 = vmatpush1.msra.mxu0 %v225
    %2062 = vmatprep.subr.mxu0 0.0
    %2063 = vmatpush1.msra.mxu0 %v224
    %2064 = vmatprep.subr.mxu0 0.0
    %2065 = vmatpush1.msra.mxu0 %v223
    %2066 = vmatprep.subr.mxu0 0.0
    %2067 = vmatpush1.msra.mxu0 %v222
    %2068 = vmatprep.subr.mxu0 0.0
    %2069 = vmatpush1.msra.mxu0 %v221
    %2070 = vmatprep.subr.mxu0 0.0
    %2071 = vmatpush1.msra.mxu0 %v220
    %2072 = vmatprep.subr.mxu0 0.0
    %2073 = vmatpush1.msra.mxu0 %v219
    %2074 = vmatprep.subr.mxu0 0.0
    %2075 = vmatpush1.msra.mxu0 %v218
    %2076 = vmatprep.subr.mxu0 0.0
    %2077 = vmatpush1.msra.mxu0 %v217
    %2078 = vmatprep.subr.mxu0 0.0
    %2079 = vmatpush1.msra.mxu0 %v216
    %2080 = vmatprep.subr.mxu0 0.0
    %2081 = vmatpush1.msra.mxu0 %v215
    %2082 = vmatprep.subr.mxu0 0.0
    %2083 = vmatpush1.msra.mxu0 %v214
    %2084 = vmatprep.subr.mxu0 0.0
    %2085 = vmatpush1.msra.mxu0 %v213
    %2086 = vmatprep.subr.mxu0 0.0
    %2087 = vmatpush2.msra.mxu0 %v244
    %2088 = vmatprep.subr.mxu0 0.0
    %2089 = vmatpush2.msra.mxu0 %v243
    %2090 = vmatprep.subr.mxu0 0.0
    %2091 = vmatpush2.msra.mxu0 %v242
    %2092 = vmatprep.subr.mxu0 0.0
    %2093 = vmatpush2.msra.mxu0 %v241
    %2094 = vmatprep.subr.mxu0 0.0
    %2095 = vmatpush2.msra.mxu0 %v240
    %2096 = vmatprep.subr.mxu0 0.0
    %2097 = vmatpush2.msra.mxu0 %v239
    %2098 = vmatprep.subr.mxu0 0.0
    %2099 = vmatpush2.msra.mxu0 %v238
    %2100 = vmatprep.subr.mxu0 0.0
    %2101 = vmatpush2.msra.mxu0 %v237
    %2102 = vmatprep.subr.mxu0 0.0
    %2103 = vmatpush2.msra.mxu0 %v236
    %2104 = vmatprep.subr.mxu0 0.0
    %2105 = vmatpush2.msra.mxu0 %v235
    %2106 = vmatprep.subr.mxu0 0.0
    %2107 = vmatpush2.msra.mxu0 %v234
    %2108 = vmatprep.subr.mxu0 0.0
    %2109 = vmatpush2.msra.mxu0 %v233
    %2110 = vmatprep.subr.mxu0 0.0
    %2111 = vmatpush2.msra.mxu0 %v232
    %2112 = vmatprep.subr.mxu0 0.0
    %2113 = vmatpush2.msra.mxu0 %v231
    %2114 = vmatprep.subr.mxu0 0.0
    %2115 = vmatpush2.msra.mxu0 %v230
    %2116 = vmatprep.subr.mxu0 0.0
    %2117 = vmatpush2.msra.mxu0 %v229
    %2118 = vmatprep.mubr.f32.mxu0 %v1566
    %2119 = vmatmul.mubr.f32.gmra.mxu0 %v1558
    %v2120 = vpop.f32.mrf.mxu0
    %v2121 = vadd.f32 %v2051, %v2120
    %v2122 = vpop.f32.mrf.mxu0
    %2123 = vdwg.mxu0
    %2124 = vmatprep.subr.mxu0 0.0
    %2125 = vmatpush1.msra.mxu0 %v260
    %2126 = vmatprep.subr.mxu0 0.0
    %2127 = vmatpush1.msra.mxu0 %v259
    %2128 = vmatprep.subr.mxu0 0.0
    %2129 = vmatpush1.msra.mxu0 %v258
    %2130 = vmatprep.subr.mxu0 0.0
    %2131 = vmatpush1.msra.mxu0 %v257
    %2132 = vmatprep.subr.mxu0 0.0
    %2133 = vmatpush1.msra.mxu0 %v256
    %2134 = vmatprep.subr.mxu0 0.0
    %2135 = vmatpush1.msra.mxu0 %v255
    %2136 = vmatprep.subr.mxu0 0.0
    %2137 = vmatpush1.msra.mxu0 %v254
    %2138 = vmatprep.subr.mxu0 0.0
    %2139 = vmatpush1.msra.mxu0 %v253
    %2140 = vmatprep.subr.mxu0 0.0
    %2141 = vmatpush1.msra.mxu0 %v252
    %2142 = vmatprep.subr.mxu0 0.0
    %2143 = vmatpush1.msra.mxu0 %v251
    %2144 = vmatprep.subr.mxu0 0.0
    %2145 = vmatpush1.msra.mxu0 %v250
    %2146 = vmatprep.subr.mxu0 0.0
    %2147 = vmatpush1.msra.mxu0 %v249
    %2148 = vmatprep.subr.mxu0 0.0
    %2149 = vmatpush1.msra.mxu0 %v248
    %2150 = vmatprep.subr.mxu0 0.0
    %2151 = vmatpush1.msra.mxu0 %v247
    %2152 = vmatprep.subr.mxu0 0.0
    %2153 = vmatpush1.msra.mxu0 %v246
    %2154 = vmatprep.subr.mxu0 0.0
    %2155 = vmatpush1.msra.mxu0 %v245
    %2156 = vmatprep.subr.mxu0 0.0
    %2157 = vmatpush2.msra.mxu0 %v276
    %2158 = vmatprep.subr.mxu0 0.0
    %2159 = vmatpush2.msra.mxu0 %v275
    %2160 = vmatprep.subr.mxu0 0.0
    %2161 = vmatpush2.msra.mxu0 %v274
    %2162 = vmatprep.subr.mxu0 0.0
    %2163 = vmatpush2.msra.mxu0 %v273
    %2164 = vmatprep.subr.mxu0 0.0
    %2165 = vmatpush2.msra.mxu0 %v272
    %2166 = vmatprep.subr.mxu0 0.0
    %2167 = vmatpush2.msra.mxu0 %v271
    %2168 = vmatprep.subr.mxu0 0.0
    %2169 = vmatpush2.msra.mxu0 %v270
    %2170 = vmatprep.subr.mxu0 0.0
    %2171 = vmatpush2.msra.mxu0 %v269
    %2172 = vmatprep.subr.mxu0 0.0
    %2173 = vmatpush2.msra.mxu0 %v268
    %2174 = vmatprep.subr.mxu0 0.0
    %2175 = vmatpush2.msra.mxu0 %v267
    %2176 = vmatprep.subr.mxu0 0.0
    %2177 = vmatpush2.msra.mxu0 %v266
    %2178 = vmatprep.subr.mxu0 0.0
    %2179 = vmatpush2.msra.mxu0 %v265
    %2180 = vmatprep.subr.mxu0 0.0
    %2181 = vmatpush2.msra.mxu0 %v264
    %2182 = vmatprep.subr.mxu0 0.0
    %2183 = vmatpush2.msra.mxu0 %v263
    %2184 = vmatprep.subr.mxu0 0.0
    %2185 = vmatpush2.msra.mxu0 %v262
    %2186 = vmatprep.subr.mxu0 0.0
    %2187 = vmatpush2.msra.mxu0 %v261
    %2188 = vmatprep.mubr.f32.mxu0 %v1567
    %2189 = vmatmul.mubr.f32.gmra.mxu0 %v1565
    %v2190 = vpop.f32.mrf.mxu0
    %v2191 = vadd.f32 %v2121, %v2190
    %v2192 = vpop.f32.mrf.mxu0
    %2193 = vdwg.mxu0
    %2194 = vmatprep.subr.mxu0 0.0
    %2195 = vmatpush1.msra.mxu0 %v292
    %2196 = vmatprep.subr.mxu0 0.0
    %2197 = vmatpush1.msra.mxu0 %v291
    %2198 = vmatprep.subr.mxu0 0.0
    %2199 = vmatpush1.msra.mxu0 %v290
    %2200 = vmatprep.subr.mxu0 0.0
    %2201 = vmatpush1.msra.mxu0 %v289
    %2202 = vmatprep.subr.mxu0 0.0
    %2203 = vmatpush1.msra.mxu0 %v288
    %2204 = vmatprep.subr.mxu0 0.0
    %2205 = vmatpush1.msra.mxu0 %v287
    %2206 = vmatprep.subr.mxu0 0.0
    %2207 = vmatpush1.msra.mxu0 %v286
    %2208 = vmatprep.subr.mxu0 0.0
    %2209 = vmatpush1.msra.mxu0 %v285
    %2210 = vmatprep.subr.mxu0 0.0
    %2211 = vmatpush1.msra.mxu0 %v284
    %2212 = vmatprep.subr.mxu0 0.0
    %2213 = vmatpush1.msra.mxu0 %v283
    %2214 = vmatprep.subr.mxu0 0.0
    %2215 = vmatpush1.msra.mxu0 %v282
    %2216 = vmatprep.subr.mxu0 0.0
    %2217 = vmatpush1.msra.mxu0 %v281
    %2218 = vmatprep.subr.mxu0 0.0
    %2219 = vmatpush1.msra.mxu0 %v280
    %2220 = vmatprep.subr.mxu0 0.0
    %2221 = vmatpush1.msra.mxu0 %v279
    %2222 = vmatprep.subr.mxu0 0.0
    %2223 = vmatpush1.msra.mxu0 %v278
    %2224 = vmatprep.subr.mxu0 0.0
    %2225 = vmatpush1.msra.mxu0 %v277
    %2226 = vmatprep.subr.mxu0 0.0
    %2227 = vmatpush2.msra.mxu0 %v308
    %2228 = vmatprep.subr.mxu0 0.0
    %2229 = vmatpush2.msra.mxu0 %v307
    %2230 = vmatprep.subr.mxu0 0.0
    %2231 = vmatpush2.msra.mxu0 %v306
    %2232 = vmatprep.subr.mxu0 0.0
    %2233 = vmatpush2.msra.mxu0 %v305
    %2234 = vmatprep.subr.mxu0 0.0
    %2235 = vmatpush2.msra.mxu0 %v304
    %2236 = vmatprep.subr.mxu0 0.0
    %2237 = vmatpush2.msra.mxu0 %v303
    %2238 = vmatprep.subr.mxu0 0.0
    %2239 = vmatpush2.msra.mxu0 %v302
    %2240 = vmatprep.subr.mxu0 0.0
    %2241 = vmatpush2.msra.mxu0 %v301
    %2242 = vmatprep.subr.mxu0 0.0
    %2243 = vmatpush2.msra.mxu0 %v300
    %2244 = vmatprep.subr.mxu0 0.0
    %2245 = vmatpush2.msra.mxu0 %v299
    %2246 = vmatprep.subr.mxu0 0.0
    %2247 = vmatpush2.msra.mxu0 %v298
    %2248 = vmatprep.subr.mxu0 0.0
    %2249 = vmatpush2.msra.mxu0 %v297
    %2250 = vmatprep.subr.mxu0 0.0
    %2251 = vmatpush2.msra.mxu0 %v296
    %2252 = vmatprep.subr.mxu0 0.0
    %2253 = vmatpush2.msra.mxu0 %v295
    %2254 = vmatprep.subr.mxu0 0.0
    %2255 = vmatpush2.msra.mxu0 %v294
    %2256 = vmatprep.subr.mxu0 0.0
    %2257 = vmatpush2.msra.mxu0 %v293
    %2258 = vmatprep.mubr.f32.mxu0 %v1583
    %2259 = vmatmul.mubr.f32.gmra.mxu0 %v1575
    %v2260 = vpop.f32.mrf.mxu0
    %v2261 = vadd.f32 %v2191, %v2260
    %v2262 = vpop.f32.mrf.mxu0
    %2263 = vdwg.mxu0
    %2264 = vmatprep.subr.mxu0 0.0
    %2265 = vmatpush1.msra.mxu0 %v324
    %2266 = vmatprep.subr.mxu0 0.0
    %2267 = vmatpush1.msra.mxu0 %v323
    %2268 = vmatprep.subr.mxu0 0.0
    %2269 = vmatpush1.msra.mxu0 %v322
    %2270 = vmatprep.subr.mxu0 0.0
    %2271 = vmatpush1.msra.mxu0 %v321
    %2272 = vmatprep.subr.mxu0 0.0
    %2273 = vmatpush1.msra.mxu0 %v320
    %2274 = vmatprep.subr.mxu0 0.0
    %2275 = vmatpush1.msra.mxu0 %v319
    %2276 = vmatprep.subr.mxu0 0.0
    %2277 = vmatpush1.msra.mxu0 %v318
    %2278 = vmatprep.subr.mxu0 0.0
    %2279 = vmatpush1.msra.mxu0 %v317
    %2280 = vmatprep.subr.mxu0 0.0
    %2281 = vmatpush1.msra.mxu0 %v316
    %2282 = vmatprep.subr.mxu0 0.0
    %2283 = vmatpush1.msra.mxu0 %v315
    %2284 = vmatprep.subr.mxu0 0.0
    %2285 = vmatpush1.msra.mxu0 %v314
    %2286 = vmatprep.subr.mxu0 0.0
    %2287 = vmatpush1.msra.mxu0 %v313
    %2288 = vmatprep.subr.mxu0 0.0
    %2289 = vmatpush1.msra.mxu0 %v312
    %2290 = vmatprep.subr.mxu0 0.0
    %2291 = vmatpush1.msra.mxu0 %v311
    %2292 = vmatprep.subr.mxu0 0.0
    %2293 = vmatpush1.msra.mxu0 %v310
    %2294 = vmatprep.subr.mxu0 0.0
    %2295 = vmatpush1.msra.mxu0 %v309
    %2296 = vmatprep.subr.mxu0 0.0
    %2297 = vmatpush2.msra.mxu0 %v340
    %2298 = vmatprep.subr.mxu0 0.0
    %2299 = vmatpush2.msra.mxu0 %v339
    %2300 = vmatprep.subr.mxu0 0.0
    %2301 = vmatpush2.msra.mxu0 %v338
    %2302 = vmatprep.subr.mxu0 0.0
    %2303 = vmatpush2.msra.mxu0 %v337
    %2304 = vmatprep.subr.mxu0 0.0
    %2305 = vmatpush2.msra.mxu0 %v336
    %2306 = vmatprep.subr.mxu0 0.0
    %2307 = vmatpush2.msra.mxu0 %v335
    %2308 = vmatprep.subr.mxu0 0.0
    %2309 = vmatpush2.msra.mxu0 %v334
    %2310 = vmatprep.subr.mxu0 0.0
    %2311 = vmatpush2.msra.mxu0 %v333
    %2312 = vmatprep.subr.mxu0 0.0
    %2313 = vmatpush2.msra.mxu0 %v332
    %2314 = vmatprep.subr.mxu0 0.0
    %2315 = vmatpush2.msra.mxu0 %v331
    %2316 = vmatprep.subr.mxu0 0.0
    %2317 = vmatpush2.msra.mxu0 %v330
    %2318 = vmatprep.subr.mxu0 0.0
    %2319 = vmatpush2.msra.mxu0 %v329
    %2320 = vmatprep.subr.mxu0 0.0
    %2321 = vmatpush2.msra.mxu0 %v328
    %2322 = vmatprep.subr.mxu0 0.0
    %2323 = vmatpush2.msra.mxu0 %v327
    %2324 = vmatprep.subr.mxu0 0.0
    %2325 = vmatpush2.msra.mxu0 %v326
    %2326 = vmatprep.subr.mxu0 0.0
    %2327 = vmatpush2.msra.mxu0 %v325
    %2328 = vmatprep.mubr.f32.mxu0 %v1584
    %2329 = vmatmul.mubr.f32.gmra.mxu0 %v1582
    %v2330 = vpop.f32.mrf.mxu0
    %v2331 = vadd.f32 %v2261, %v2330
    %v2332 = vpop.f32.mrf.mxu0
    %2333 = vdwg.mxu0
    %2334 = vmatprep.subr.mxu0 0.0
    %2335 = vmatpush1.msra.mxu0 %v356
    %2336 = vmatprep.subr.mxu0 0.0
    %2337 = vmatpush1.msra.mxu0 %v355
    %2338 = vmatprep.subr.mxu0 0.0
    %2339 = vmatpush1.msra.mxu0 %v354
    %2340 = vmatprep.subr.mxu0 0.0
    %2341 = vmatpush1.msra.mxu0 %v353
    %2342 = vmatprep.subr.mxu0 0.0
    %2343 = vmatpush1.msra.mxu0 %v352
    %2344 = vmatprep.subr.mxu0 0.0
    %2345 = vmatpush1.msra.mxu0 %v351
    %2346 = vmatprep.subr.mxu0 0.0
    %2347 = vmatpush1.msra.mxu0 %v350
    %2348 = vmatprep.subr.mxu0 0.0
    %2349 = vmatpush1.msra.mxu0 %v349
    %2350 = vmatprep.subr.mxu0 0.0
    %2351 = vmatpush1.msra.mxu0 %v348
    %2352 = vmatprep.subr.mxu0 0.0
    %2353 = vmatpush1.msra.mxu0 %v347
    %2354 = vmatprep.subr.mxu0 0.0
    %2355 = vmatpush1.msra.mxu0 %v346
    %2356 = vmatprep.subr.mxu0 0.0
    %2357 = vmatpush1.msra.mxu0 %v345
    %2358 = vmatprep.subr.mxu0 0.0
    %2359 = vmatpush1.msra.mxu0 %v344
    %2360 = vmatprep.subr.mxu0 0.0
    %2361 = vmatpush1.msra.mxu0 %v343
    %2362 = vmatprep.subr.mxu0 0.0
    %2363 = vmatpush1.msra.mxu0 %v342
    %2364 = vmatprep.subr.mxu0 0.0
    %2365 = vmatpush1.msra.mxu0 %v341
    %2366 = vmatprep.subr.mxu0 0.0
    %2367 = vmatpush2.msra.mxu0 %v372
    %2368 = vmatprep.subr.mxu0 0.0
    %2369 = vmatpush2.msra.mxu0 %v371
    %2370 = vmatprep.subr.mxu0 0.0
    %2371 = vmatpush2.msra.mxu0 %v370
    %2372 = vmatprep.subr.mxu0 0.0
    %2373 = vmatpush2.msra.mxu0 %v369
    %2374 = vmatprep.subr.mxu0 0.0
    %2375 = vmatpush2.msra.mxu0 %v368
    %2376 = vmatprep.subr.mxu0 0.0
    %2377 = vmatpush2.msra.mxu0 %v367
    %2378 = vmatprep.subr.mxu0 0.0
    %2379 = vmatpush2.msra.mxu0 %v366
    %2380 = vmatprep.subr.mxu0 0.0
    %2381 = vmatpush2.msra.mxu0 %v365
    %2382 = vmatprep.subr.mxu0 0.0
    %2383 = vmatpush2.msra.mxu0 %v364
    %2384 = vmatprep.subr.mxu0 0.0
    %2385 = vmatpush2.msra.mxu0 %v363
    %2386 = vmatprep.subr.mxu0 0.0
    %2387 = vmatpush2.msra.mxu0 %v362
    %2388 = vmatprep.subr.mxu0 0.0
    %2389 = vmatpush2.msra.mxu0 %v361
    %2390 = vmatprep.subr.mxu0 0.0
    %2391 = vmatpush2.msra.mxu0 %v360
    %2392 = vmatprep.subr.mxu0 0.0
    %2393 = vmatpush2.msra.mxu0 %v359
    %2394 = vmatprep.subr.mxu0 0.0
    %2395 = vmatpush2.msra.mxu0 %v358
    %2396 = vmatprep.subr.mxu0 0.0
    %2397 = vmatpush2.msra.mxu0 %v357
    %2398 = vmatprep.mubr.f32.mxu0 %v1600
    %2399 = vmatmul.mubr.f32.gmra.mxu0 %v1592
    %v2400 = vpop.f32.mrf.mxu0
    %v2401 = vadd.f32 %v2331, %v2400
    %v2402 = vpop.f32.mrf.mxu0
    %2403 = vdwg.mxu0
    %2404 = vmatprep.subr.mxu0 0.0
    %2405 = vmatpush1.msra.mxu0 %v388
    %2406 = vmatprep.subr.mxu0 0.0
    %2407 = vmatpush1.msra.mxu0 %v387
    %2408 = vmatprep.subr.mxu0 0.0
    %2409 = vmatpush1.msra.mxu0 %v386
    %2410 = vmatprep.subr.mxu0 0.0
    %2411 = vmatpush1.msra.mxu0 %v385
    %2412 = vmatprep.subr.mxu0 0.0
    %2413 = vmatpush1.msra.mxu0 %v384
    %2414 = vmatprep.subr.mxu0 0.0
    %2415 = vmatpush1.msra.mxu0 %v383
    %2416 = vmatprep.subr.mxu0 0.0
    %2417 = vmatpush1.msra.mxu0 %v382
    %2418 = vmatprep.subr.mxu0 0.0
    %2419 = vmatpush1.msra.mxu0 %v381
    %2420 = vmatprep.subr.mxu0 0.0
    %2421 = vmatpush1.msra.mxu0 %v380
    %2422 = vmatprep.subr.mxu0 0.0
    %2423 = vmatpush1.msra.mxu0 %v379
    %2424 = vmatprep.subr.mxu0 0.0
    %2425 = vmatpush1.msra.mxu0 %v378
    %2426 = vmatprep.subr.mxu0 0.0
    %2427 = vmatpush1.msra.mxu0 %v377
    %2428 = vmatprep.subr.mxu0 0.0
    %2429 = vmatpush1.msra.mxu0 %v376
    %2430 = vmatprep.subr.mxu0 0.0
    %2431 = vmatpush1.msra.mxu0 %v375
    %2432 = vmatprep.subr.mxu0 0.0
    %2433 = vmatpush1.msra.mxu0 %v374
    %2434 = vmatprep.subr.mxu0 0.0
    %2435 = vmatpush1.msra.mxu0 %v373
    %2436 = vmatprep.subr.mxu0 0.0
    %2437 = vmatpush2.msra.mxu0 %v404
    %2438 = vmatprep.subr.mxu0 0.0
    %2439 = vmatpush2.msra.mxu0 %v403
    %2440 = vmatprep.subr.mxu0 0.0
    %2441 = vmatpush2.msra.mxu0 %v402
    %2442 = vmatprep.subr.mxu0 0.0
    %2443 = vmatpush2.msra.mxu0 %v401
    %2444 = vmatprep.subr.mxu0 0.0
    %2445 = vmatpush2.msra.mxu0 %v400
    %2446 = vmatprep.subr.mxu0 0.0
    %2447 = vmatpush2.msra.mxu0 %v399
    %2448 = vmatprep.subr.mxu0 0.0
    %2449 = vmatpush2.msra.mxu0 %v398
    %2450 = vmatprep.subr.mxu0 0.0
    %2451 = vmatpush2.msra.mxu0 %v397
    %2452 = vmatprep.subr.mxu0 0.0
    %2453 = vmatpush2.msra.mxu0 %v396
    %2454 = vmatprep.subr.mxu0 0.0
    %2455 = vmatpush2.msra.mxu0 %v395
    %2456 = vmatprep.subr.mxu0 0.0
    %2457 = vmatpush2.msra.mxu0 %v394
    %2458 = vmatprep.subr.mxu0 0.0
    %2459 = vmatpush2.msra.mxu0 %v393
    %2460 = vmatprep.subr.mxu0 0.0
    %2461 = vmatpush2.msra.mxu0 %v392
    %2462 = vmatprep.subr.mxu0 0.0
    %2463 = vmatpush2.msra.mxu0 %v391
    %2464 = vmatprep.subr.mxu0 0.0
    %2465 = vmatpush2.msra.mxu0 %v390
    %2466 = vmatprep.subr.mxu0 0.0
    %2467 = vmatpush2.msra.mxu0 %v389
    %2468 = vmatprep.mubr.f32.mxu0 %v1601
    %2469 = vmatmul.mubr.f32.gmra.mxu0 %v1599
    %v2470 = vpop.f32.mrf.mxu0
    %v2471 = vadd.f32 %v2401, %v2470
    %v2472 = vpop.f32.mrf.mxu0
    %2473 = vdwg.mxu0
    %2474 = vmatprep.subr.mxu0 0.0
    %2475 = vmatpush1.msra.mxu0 %v420
    %2476 = vmatprep.subr.mxu0 0.0
    %2477 = vmatpush1.msra.mxu0 %v419
    %2478 = vmatprep.subr.mxu0 0.0
    %2479 = vmatpush1.msra.mxu0 %v418
    %2480 = vmatprep.subr.mxu0 0.0
    %2481 = vmatpush1.msra.mxu0 %v417
    %2482 = vmatprep.subr.mxu0 0.0
    %2483 = vmatpush1.msra.mxu0 %v416
    %2484 = vmatprep.subr.mxu0 0.0
    %2485 = vmatpush1.msra.mxu0 %v415
    %2486 = vmatprep.subr.mxu0 0.0
    %2487 = vmatpush1.msra.mxu0 %v414
    %2488 = vmatprep.subr.mxu0 0.0
    %2489 = vmatpush1.msra.mxu0 %v413
    %2490 = vmatprep.subr.mxu0 0.0
    %2491 = vmatpush1.msra.mxu0 %v412
    %2492 = vmatprep.subr.mxu0 0.0
    %2493 = vmatpush1.msra.mxu0 %v411
    %2494 = vmatprep.subr.mxu0 0.0
    %2495 = vmatpush1.msra.mxu0 %v410
    %2496 = vmatprep.subr.mxu0 0.0
    %2497 = vmatpush1.msra.mxu0 %v409
    %2498 = vmatprep.subr.mxu0 0.0
    %2499 = vmatpush1.msra.mxu0 %v408
    %2500 = vmatprep.subr.mxu0 0.0
    %2501 = vmatpush1.msra.mxu0 %v407
    %2502 = vmatprep.subr.mxu0 0.0
    %2503 = vmatpush1.msra.mxu0 %v406
    %2504 = vmatprep.subr.mxu0 0.0
    %2505 = vmatpush1.msra.mxu0 %v405
    %2506 = vmatprep.subr.mxu0 0.0
    %2507 = vmatpush2.msra.mxu0 0.0
    %2508 = vmatprep.subr.mxu0 0.0
    %2509 = vmatpush2.msra.mxu0 0.0
    %2510 = vmatprep.subr.mxu0 0.0
    %2511 = vmatpush2.msra.mxu0 0.0
    %2512 = vmatprep.subr.mxu0 0.0
    %2513 = vmatpush2.msra.mxu0 0.0
    %2514 = vmatprep.subr.mxu0 0.0
    %2515 = vmatpush2.msra.mxu0 0.0
    %2516 = vmatprep.subr.mxu0 0.0
    %2517 = vmatpush2.msra.mxu0 0.0
    %2518 = vmatprep.subr.mxu0 0.0
    %2519 = vmatpush2.msra.mxu0 0.0
    %2520 = vmatprep.subr.mxu0 0.0
    %2521 = vmatpush2.msra.mxu0 0.0
    %2522 = vmatprep.subr.mxu0 0.0
    %2523 = vmatpush2.msra.mxu0 0.0
    %2524 = vmatprep.subr.mxu0 0.0
    %2525 = vmatpush2.msra.mxu0 0.0
    %2526 = vmatprep.subr.mxu0 0.0
    %2527 = vmatpush2.msra.mxu0 0.0
    %2528 = vmatprep.subr.mxu0 0.0
    %2529 = vmatpush2.msra.mxu0 0.0
    %2530 = vmatprep.subr.mxu0 0.0
    %2531 = vmatpush2.msra.mxu0 0.0
    %2532 = vmatprep.subr.mxu0 0.0
    %2533 = vmatpush2.msra.mxu0 0.0
    %2534 = vmatprep.subr.mxu0 0.0
    %2535 = vmatpush2.msra.mxu0 0.0
    %2536 = vmatprep.subr.mxu0 0.0
    %2537 = vmatpush2.msra.mxu0 0.0
    %2538 = vmatprep.mubr.f32.mxu0 0.0
    %2539 = vmatmul.mubr.f32.gmra.mxu0 %v1608
    %v2540 = vpop.f32.mrf.mxu0
    %v2541 = vadd.f32 %v2471, %v2540
    %v2542 = vpop.f32.mrf.mxu0
    %2543 = vdwg.mxu0
    %v2544 = vld [vmem:[%s2] sm:$0xff]
    %v2545 = vld [vmem:[%s2 + $0x8] sm:$0xff]
    %v2546 = vld [vmem:[%s2 + $0x10] sm:$0xff]
    %v2547 = vld [vmem:[%s2 + $0x18] sm:$0xff]
    %v2548 = vld [vmem:[%s2 + $0x20] sm:$0xff]
    %v2549 = vld [vmem:[%s2 + $0x28] sm:$0xff]
    %v2550 = vld [vmem:[%s2 + $0x30] sm:$0x3]
    %v2558 = vcombine.high %v2544, %v2544
    %v2560 = vunpack.c.l.s4 1983009808
    %v2561 = vunpack.c.0.s8 %v2560
    %v2562 = vlaneseq
    %v2563 = vshrl.u32 %v2562, 7
    %v2564 = vsub.s32 %v2561, %v2563
    %v2565 = vrot.slane %v2544, %v2564
    %v2567 = vunpack.c.l.s4 1983009808
    %v2568 = vunpack.c.0.s8 %v2567
    %v2569 = vlaneseq
    %v2570 = vshrl.u32 %v2569, 7
    %v2571 = vsub.s32 %v2568, %v2570
    %v2572 = vrot.slane %v2558, %v2571
    %v2573 = vcombine.high %v2565, %v2565
    %v2574 = vcombine.high %v2572, %v2572
    %v2575 = vcombine.high %v2545, %v2545
    %v2577 = vunpack.c.l.s4 1983009808
    %v2578 = vunpack.c.0.s8 %v2577
    %v2579 = vlaneseq
    %v2580 = vshrl.u32 %v2579, 7
    %v2581 = vsub.s32 %v2578, %v2580
    %v2582 = vrot.slane %v2545, %v2581
    %v2584 = vunpack.c.l.s4 1983009808
    %v2585 = vunpack.c.0.s8 %v2584
    %v2586 = vlaneseq
    %v2587 = vshrl.u32 %v2586, 7
    %v2588 = vsub.s32 %v2585, %v2587
    %v2589 = vrot.slane %v2575, %v2588
    %v2590 = vcombine.high %v2582, %v2582
    %v2591 = vcombine.high %v2589, %v2589
    %v2592 = vcombine.high %v2546, %v2546
    %v2594 = vunpack.c.l.s4 1983009808
    %v2595 = vunpack.c.0.s8 %v2594
    %v2596 = vlaneseq
    %v2597 = vshrl.u32 %v2596, 7
    %v2598 = vsub.s32 %v2595, %v2597
    %v2599 = vrot.slane %v2546, %v2598
    %v2601 = vunpack.c.l.s4 1983009808
    %v2602 = vunpack.c.0.s8 %v2601
    %v2603 = vlaneseq
    %v2604 = vshrl.u32 %v2603, 7
    %v2605 = vsub.s32 %v2602, %v2604
    %v2606 = vrot.slane %v2592, %v2605
    %v2607 = vcombine.high %v2599, %v2599
    %v2608 = vcombine.high %v2606, %v2606
    %v2609 = vcombine.high %v2547, %v2547
    %v2611 = vunpack.c.l.s4 1983009808
    %v2612 = vunpack.c.0.s8 %v2611
    %v2613 = vlaneseq
    %v2614 = vshrl.u32 %v2613, 7
    %v2615 = vsub.s32 %v2612, %v2614
    %v2616 = vrot.slane %v2547, %v2615
    %v2618 = vunpack.c.l.s4 1983009808
    %v2619 = vunpack.c.0.s8 %v2618
    %v2620 = vlaneseq
    %v2621 = vshrl.u32 %v2620, 7
    %v2622 = vsub.s32 %v2619, %v2621
    %v2623 = vrot.slane %v2609, %v2622
    %v2624 = vcombine.high %v2616, %v2616
    %v2625 = vcombine.high %v2623, %v2623
    %v2626 = vcombine.high %v2548, %v2548
    %v2628 = vunpack.c.l.s4 1983009808
    %v2629 = vunpack.c.0.s8 %v2628
    %v2630 = vlaneseq
    %v2631 = vshrl.u32 %v2630, 7
    %v2632 = vsub.s32 %v2629, %v2631
    %v2633 = vrot.slane %v2548, %v2632
    %v2635 = vunpack.c.l.s4 1983009808
    %v2636 = vunpack.c.0.s8 %v2635
    %v2637 = vlaneseq
    %v2638 = vshrl.u32 %v2637, 7
    %v2639 = vsub.s32 %v2636, %v2638
    %v2640 = vrot.slane %v2626, %v2639
    %v2641 = vcombine.high %v2633, %v2633
    %v2642 = vcombine.high %v2640, %v2640
    %v2643 = vcombine.high %v2549, %v2549
    %v2645 = vunpack.c.l.s4 1983009808
    %v2646 = vunpack.c.0.s8 %v2645
    %v2647 = vlaneseq
    %v2648 = vshrl.u32 %v2647, 7
    %v2649 = vsub.s32 %v2646, %v2648
    %v2650 = vrot.slane %v2549, %v2649
    %v2652 = vunpack.c.l.s4 1983009808
    %v2653 = vunpack.c.0.s8 %v2652
    %v2654 = vlaneseq
    %v2655 = vshrl.u32 %v2654, 7
    %v2656 = vsub.s32 %v2653, %v2655
    %v2657 = vrot.slane %v2643, %v2656
    %v2658 = vcombine.high %v2650, %v2650
    %v2659 = vcombine.high %v2657, %v2657
    %v2661 = vunpack.c.l.s4 1983009808
    %v2662 = vunpack.c.0.s8 %v2661
    %v2663 = vlaneseq
    %v2664 = vshrl.u32 %v2663, 7
    %v2665 = vsub.s32 %v2662, %v2664
    %v2666 = vrot.slane %v2550, %v2665
    %2692 = vmatprep.subr.mxu0 0.0
    %2693 = vmatpush1.msra.mxu0 %v36
    %2694 = vmatprep.subr.mxu0 0.0
    %2695 = vmatpush1.msra.mxu0 %v35
    %2696 = vmatprep.subr.mxu0 0.0
    %2697 = vmatpush1.msra.mxu0 %v34
    %2698 = vmatprep.subr.mxu0 0.0
    %2699 = vmatpush1.msra.mxu0 %v33
    %2700 = vmatprep.subr.mxu0 0.0
    %2701 = vmatpush1.msra.mxu0 %v32
    %2702 = vmatprep.subr.mxu0 0.0
    %2703 = vmatpush1.msra.mxu0 %v31
    %2704 = vmatprep.subr.mxu0 0.0
    %2705 = vmatpush1.msra.mxu0 %v30
    %2706 = vmatprep.subr.mxu0 0.0
    %2707 = vmatpush1.msra.mxu0 %v29
    %2708 = vmatprep.subr.mxu0 0.0
    %2709 = vmatpush1.msra.mxu0 %v28
    %2710 = vmatprep.subr.mxu0 0.0
    %2711 = vmatpush1.msra.mxu0 %v27
    %2712 = vmatprep.subr.mxu0 0.0
    %2713 = vmatpush1.msra.mxu0 %v26
    %2714 = vmatprep.subr.mxu0 0.0
    %2715 = vmatpush1.msra.mxu0 %v25
    %2716 = vmatprep.subr.mxu0 0.0
    %2717 = vmatpush1.msra.mxu0 %v24
    %2718 = vmatprep.subr.mxu0 0.0
    %2719 = vmatpush1.msra.mxu0 %v23
    %2720 = vmatprep.subr.mxu0 0.0
    %2721 = vmatpush1.msra.mxu0 %v22
    %2722 = vmatprep.subr.mxu0 0.0
    %2723 = vmatpush1.msra.mxu0 %v21
    %2724 = vmatprep.subr.mxu0 0.0
    %2725 = vmatpush2.msra.mxu0 %v52
    %2726 = vmatprep.subr.mxu0 0.0
    %2727 = vmatpush2.msra.mxu0 %v51
    %2728 = vmatprep.subr.mxu0 0.0
    %2729 = vmatpush2.msra.mxu0 %v50
    %2730 = vmatprep.subr.mxu0 0.0
    %2731 = vmatpush2.msra.mxu0 %v49
    %2732 = vmatprep.subr.mxu0 0.0
    %2733 = vmatpush2.msra.mxu0 %v48
    %2734 = vmatprep.subr.mxu0 0.0
    %2735 = vmatpush2.msra.mxu0 %v47
    %2736 = vmatprep.subr.mxu0 0.0
    %2737 = vmatpush2.msra.mxu0 %v46
    %2738 = vmatprep.subr.mxu0 0.0
    %2739 = vmatpush2.msra.mxu0 %v45
    %2740 = vmatprep.subr.mxu0 0.0
    %2741 = vmatpush2.msra.mxu0 %v44
    %2742 = vmatprep.subr.mxu0 0.0
    %2743 = vmatpush2.msra.mxu0 %v43
    %2744 = vmatprep.subr.mxu0 0.0
    %2745 = vmatpush2.msra.mxu0 %v42
    %2746 = vmatprep.subr.mxu0 0.0
    %2747 = vmatpush2.msra.mxu0 %v41
    %2748 = vmatprep.subr.mxu0 0.0
    %2749 = vmatpush2.msra.mxu0 %v40
    %2750 = vmatprep.subr.mxu0 0.0
    %2751 = vmatpush2.msra.mxu0 %v39
    %2752 = vmatprep.subr.mxu0 0.0
    %2753 = vmatpush2.msra.mxu0 %v38
    %2754 = vmatprep.subr.mxu0 0.0
    %2755 = vmatpush2.msra.mxu0 %v37
    %2756 = vmatprep.mubr.f32.mxu0 %v2573
    %2757 = vmatmul.mubr.f32.gmra.mxu0 %v2565
    %v2758 = vpop.f32.mrf.mxu0
    %v2759 = vadd.f32 %v433, %v2758
    %v2760 = vpop.f32.mrf.mxu0
    %2761 = vdwg.mxu0
    %2762 = vmatprep.subr.mxu0 0.0
    %2763 = vmatpush1.msra.mxu0 %v68
    %2764 = vmatprep.subr.mxu0 0.0
    %2765 = vmatpush1.msra.mxu0 %v67
    %2766 = vmatprep.subr.mxu0 0.0
    %2767 = vmatpush1.msra.mxu0 %v66
    %2768 = vmatprep.subr.mxu0 0.0
    %2769 = vmatpush1.msra.mxu0 %v65
    %2770 = vmatprep.subr.mxu0 0.0
    %2771 = vmatpush1.msra.mxu0 %v64
    %2772 = vmatprep.subr.mxu0 0.0
    %2773 = vmatpush1.msra.mxu0 %v63
    %2774 = vmatprep.subr.mxu0 0.0
    %2775 = vmatpush1.msra.mxu0 %v62
    %2776 = vmatprep.subr.mxu0 0.0
    %2777 = vmatpush1.msra.mxu0 %v61
    %2778 = vmatprep.subr.mxu0 0.0
    %2779 = vmatpush1.msra.mxu0 %v60
    %2780 = vmatprep.subr.mxu0 0.0
    %2781 = vmatpush1.msra.mxu0 %v59
    %2782 = vmatprep.subr.mxu0 0.0
    %2783 = vmatpush1.msra.mxu0 %v58
    %2784 = vmatprep.subr.mxu0 0.0
    %2785 = vmatpush1.msra.mxu0 %v57
    %2786 = vmatprep.subr.mxu0 0.0
    %2787 = vmatpush1.msra.mxu0 %v56
    %2788 = vmatprep.subr.mxu0 0.0
    %2789 = vmatpush1.msra.mxu0 %v55
    %2790 = vmatprep.subr.mxu0 0.0
    %2791 = vmatpush1.msra.mxu0 %v54
    %2792 = vmatprep.subr.mxu0 0.0
    %2793 = vmatpush1.msra.mxu0 %v53
    %2794 = vmatprep.subr.mxu0 0.0
    %2795 = vmatpush2.msra.mxu0 %v84
    %2796 = vmatprep.subr.mxu0 0.0
    %2797 = vmatpush2.msra.mxu0 %v83
    %2798 = vmatprep.subr.mxu0 0.0
    %2799 = vmatpush2.msra.mxu0 %v82
    %2800 = vmatprep.subr.mxu0 0.0
    %2801 = vmatpush2.msra.mxu0 %v81
    %2802 = vmatprep.subr.mxu0 0.0
    %2803 = vmatpush2.msra.mxu0 %v80
    %2804 = vmatprep.subr.mxu0 0.0
    %2805 = vmatpush2.msra.mxu0 %v79
    %2806 = vmatprep.subr.mxu0 0.0
    %2807 = vmatpush2.msra.mxu0 %v78
    %2808 = vmatprep.subr.mxu0 0.0
    %2809 = vmatpush2.msra.mxu0 %v77
    %2810 = vmatprep.subr.mxu0 0.0
    %2811 = vmatpush2.msra.mxu0 %v76
    %2812 = vmatprep.subr.mxu0 0.0
    %2813 = vmatpush2.msra.mxu0 %v75
    %2814 = vmatprep.subr.mxu0 0.0
    %2815 = vmatpush2.msra.mxu0 %v74
    %2816 = vmatprep.subr.mxu0 0.0
    %2817 = vmatpush2.msra.mxu0 %v73
    %2818 = vmatprep.subr.mxu0 0.0
    %2819 = vmatpush2.msra.mxu0 %v72
    %2820 = vmatprep.subr.mxu0 0.0
    %2821 = vmatpush2.msra.mxu0 %v71
    %2822 = vmatprep.subr.mxu0 0.0
    %2823 = vmatpush2.msra.mxu0 %v70
    %2824 = vmatprep.subr.mxu0 0.0
    %2825 = vmatpush2.msra.mxu0 %v69
    %2826 = vmatprep.mubr.f32.mxu0 %v2574
    %2827 = vmatmul.mubr.f32.gmra.mxu0 %v2572
    %v2828 = vpop.f32.mrf.mxu0
    %v2829 = vadd.f32 %v2759, %v2828
    %v2830 = vpop.f32.mrf.mxu0
    %2831 = vdwg.mxu0
    %2832 = vmatprep.subr.mxu0 0.0
    %2833 = vmatpush1.msra.mxu0 %v100
    %2834 = vmatprep.subr.mxu0 0.0
    %2835 = vmatpush1.msra.mxu0 %v99
    %2836 = vmatprep.subr.mxu0 0.0
    %2837 = vmatpush1.msra.mxu0 %v98
    %2838 = vmatprep.subr.mxu0 0.0
    %2839 = vmatpush1.msra.mxu0 %v97
    %2840 = vmatprep.subr.mxu0 0.0
    %2841 = vmatpush1.msra.mxu0 %v96
    %2842 = vmatprep.subr.mxu0 0.0
    %2843 = vmatpush1.msra.mxu0 %v95
    %2844 = vmatprep.subr.mxu0 0.0
    %2845 = vmatpush1.msra.mxu0 %v94
    %2846 = vmatprep.subr.mxu0 0.0
    %2847 = vmatpush1.msra.mxu0 %v93
    %2848 = vmatprep.subr.mxu0 0.0
    %2849 = vmatpush1.msra.mxu0 %v92
    %2850 = vmatprep.subr.mxu0 0.0
    %2851 = vmatpush1.msra.mxu0 %v91
    %2852 = vmatprep.subr.mxu0 0.0
    %2853 = vmatpush1.msra.mxu0 %v90
    %2854 = vmatprep.subr.mxu0 0.0
    %2855 = vmatpush1.msra.mxu0 %v89
    %2856 = vmatprep.subr.mxu0 0.0
    %2857 = vmatpush1.msra.mxu0 %v88
    %2858 = vmatprep.subr.mxu0 0.0
    %2859 = vmatpush1.msra.mxu0 %v87
    %2860 = vmatprep.subr.mxu0 0.0
    %2861 = vmatpush1.msra.mxu0 %v86
    %2862 = vmatprep.subr.mxu0 0.0
    %2863 = vmatpush1.msra.mxu0 %v85
    %2864 = vmatprep.subr.mxu0 0.0
    %2865 = vmatpush2.msra.mxu0 %v116
    %2866 = vmatprep.subr.mxu0 0.0
    %2867 = vmatpush2.msra.mxu0 %v115
    %2868 = vmatprep.subr.mxu0 0.0
    %2869 = vmatpush2.msra.mxu0 %v114
    %2870 = vmatprep.subr.mxu0 0.0
    %2871 = vmatpush2.msra.mxu0 %v113
    %2872 = vmatprep.subr.mxu0 0.0
    %2873 = vmatpush2.msra.mxu0 %v112
    %2874 = vmatprep.subr.mxu0 0.0
    %2875 = vmatpush2.msra.mxu0 %v111
    %2876 = vmatprep.subr.mxu0 0.0
    %2877 = vmatpush2.msra.mxu0 %v110
    %2878 = vmatprep.subr.mxu0 0.0
    %2879 = vmatpush2.msra.mxu0 %v109
    %2880 = vmatprep.subr.mxu0 0.0
    %2881 = vmatpush2.msra.mxu0 %v108
    %2882 = vmatprep.subr.mxu0 0.0
    %2883 = vmatpush2.msra.mxu0 %v107
    %2884 = vmatprep.subr.mxu0 0.0
    %2885 = vmatpush2.msra.mxu0 %v106
    %2886 = vmatprep.subr.mxu0 0.0
    %2887 = vmatpush2.msra.mxu0 %v105
    %2888 = vmatprep.subr.mxu0 0.0
    %2889 = vmatpush2.msra.mxu0 %v104
    %2890 = vmatprep.subr.mxu0 0.0
    %2891 = vmatpush2.msra.mxu0 %v103
    %2892 = vmatprep.subr.mxu0 0.0
    %2893 = vmatpush2.msra.mxu0 %v102
    %2894 = vmatprep.subr.mxu0 0.0
    %2895 = vmatpush2.msra.mxu0 %v101
    %2896 = vmatprep.mubr.f32.mxu0 %v2590
    %2897 = vmatmul.mubr.f32.gmra.mxu0 %v2582
    %v2898 = vpop.f32.mrf.mxu0
    %v2899 = vadd.f32 %v2829, %v2898
    %v2900 = vpop.f32.mrf.mxu0
    %2901 = vdwg.mxu0
    %2902 = vmatprep.subr.mxu0 0.0
    %2903 = vmatpush1.msra.mxu0 %v132
    %2904 = vmatprep.subr.mxu0 0.0
    %2905 = vmatpush1.msra.mxu0 %v131
    %2906 = vmatprep.subr.mxu0 0.0
    %2907 = vmatpush1.msra.mxu0 %v130
    %2908 = vmatprep.subr.mxu0 0.0
    %2909 = vmatpush1.msra.mxu0 %v129
    %2910 = vmatprep.subr.mxu0 0.0
    %2911 = vmatpush1.msra.mxu0 %v128
    %2912 = vmatprep.subr.mxu0 0.0
    %2913 = vmatpush1.msra.mxu0 %v127
    %2914 = vmatprep.subr.mxu0 0.0
    %2915 = vmatpush1.msra.mxu0 %v126
    %2916 = vmatprep.subr.mxu0 0.0
    %2917 = vmatpush1.msra.mxu0 %v125
    %2918 = vmatprep.subr.mxu0 0.0
    %2919 = vmatpush1.msra.mxu0 %v124
    %2920 = vmatprep.subr.mxu0 0.0
    %2921 = vmatpush1.msra.mxu0 %v123
    %2922 = vmatprep.subr.mxu0 0.0
    %2923 = vmatpush1.msra.mxu0 %v122
    %2924 = vmatprep.subr.mxu0 0.0
    %2925 = vmatpush1.msra.mxu0 %v121
    %2926 = vmatprep.subr.mxu0 0.0
    %2927 = vmatpush1.msra.mxu0 %v120
    %2928 = vmatprep.subr.mxu0 0.0
    %2929 = vmatpush1.msra.mxu0 %v119
    %2930 = vmatprep.subr.mxu0 0.0
    %2931 = vmatpush1.msra.mxu0 %v118
    %2932 = vmatprep.subr.mxu0 0.0
    %2933 = vmatpush1.msra.mxu0 %v117
    %2934 = vmatprep.subr.mxu0 0.0
    %2935 = vmatpush2.msra.mxu0 %v148
    %2936 = vmatprep.subr.mxu0 0.0
    %2937 = vmatpush2.msra.mxu0 %v147
    %2938 = vmatprep.subr.mxu0 0.0
    %2939 = vmatpush2.msra.mxu0 %v146
    %2940 = vmatprep.subr.mxu0 0.0
    %2941 = vmatpush2.msra.mxu0 %v145
    %2942 = vmatprep.subr.mxu0 0.0
    %2943 = vmatpush2.msra.mxu0 %v144
    %2944 = vmatprep.subr.mxu0 0.0
    %2945 = vmatpush2.msra.mxu0 %v143
    %2946 = vmatprep.subr.mxu0 0.0
    %2947 = vmatpush2.msra.mxu0 %v142
    %2948 = vmatprep.subr.mxu0 0.0
    %2949 = vmatpush2.msra.mxu0 %v141
    %2950 = vmatprep.subr.mxu0 0.0
    %2951 = vmatpush2.msra.mxu0 %v140
    %2952 = vmatprep.subr.mxu0 0.0
    %2953 = vmatpush2.msra.mxu0 %v139
    %2954 = vmatprep.subr.mxu0 0.0
    %2955 = vmatpush2.msra.mxu0 %v138
    %2956 = vmatprep.subr.mxu0 0.0
    %2957 = vmatpush2.msra.mxu0 %v137
    %2958 = vmatprep.subr.mxu0 0.0
    %2959 = vmatpush2.msra.mxu0 %v136
    %2960 = vmatprep.subr.mxu0 0.0
    %2961 = vmatpush2.msra.mxu0 %v135
    %2962 = vmatprep.subr.mxu0 0.0
    %2963 = vmatpush2.msra.mxu0 %v134
    %2964 = vmatprep.subr.mxu0 0.0
    %2965 = vmatpush2.msra.mxu0 %v133
    %2966 = vmatprep.mubr.f32.mxu0 %v2591
    %2967 = vmatmul.mubr.f32.gmra.mxu0 %v2589
    %v2968 = vpop.f32.mrf.mxu0
    %v2969 = vadd.f32 %v2899, %v2968
    %v2970 = vpop.f32.mrf.mxu0
    %2971 = vdwg.mxu0
    %2972 = vmatprep.subr.mxu0 0.0
    %2973 = vmatpush1.msra.mxu0 %v164
    %2974 = vmatprep.subr.mxu0 0.0
    %2975 = vmatpush1.msra.mxu0 %v163
    %2976 = vmatprep.subr.mxu0 0.0
    %2977 = vmatpush1.msra.mxu0 %v162
    %2978 = vmatprep.subr.mxu0 0.0
    %2979 = vmatpush1.msra.mxu0 %v161
    %2980 = vmatprep.subr.mxu0 0.0
    %2981 = vmatpush1.msra.mxu0 %v160
    %2982 = vmatprep.subr.mxu0 0.0
    %2983 = vmatpush1.msra.mxu0 %v159
    %2984 = vmatprep.subr.mxu0 0.0
    %2985 = vmatpush1.msra.mxu0 %v158
    %2986 = vmatprep.subr.mxu0 0.0
    %2987 = vmatpush1.msra.mxu0 %v157
    %2988 = vmatprep.subr.mxu0 0.0
    %2989 = vmatpush1.msra.mxu0 %v156
    %2990 = vmatprep.subr.mxu0 0.0
    %2991 = vmatpush1.msra.mxu0 %v155
    %2992 = vmatprep.subr.mxu0 0.0
    %2993 = vmatpush1.msra.mxu0 %v154
    %2994 = vmatprep.subr.mxu0 0.0
    %2995 = vmatpush1.msra.mxu0 %v153
    %2996 = vmatprep.subr.mxu0 0.0
    %2997 = vmatpush1.msra.mxu0 %v152
    %2998 = vmatprep.subr.mxu0 0.0
    %2999 = vmatpush1.msra.mxu0 %v151
    %3000 = vmatprep.subr.mxu0 0.0
    %3001 = vmatpush1.msra.mxu0 %v150
    %3002 = vmatprep.subr.mxu0 0.0
    %3003 = vmatpush1.msra.mxu0 %v149
    %3004 = vmatprep.subr.mxu0 0.0
    %3005 = vmatpush2.msra.mxu0 %v180
    %3006 = vmatprep.subr.mxu0 0.0
    %3007 = vmatpush2.msra.mxu0 %v179
    %3008 = vmatprep.subr.mxu0 0.0
    %3009 = vmatpush2.msra.mxu0 %v178
    %3010 = vmatprep.subr.mxu0 0.0
    %3011 = vmatpush2.msra.mxu0 %v177
    %3012 = vmatprep.subr.mxu0 0.0
    %3013 = vmatpush2.msra.mxu0 %v176
    %3014 = vmatprep.subr.mxu0 0.0
    %3015 = vmatpush2.msra.mxu0 %v175
    %3016 = vmatprep.subr.mxu0 0.0
    %3017 = vmatpush2.msra.mxu0 %v174
    %3018 = vmatprep.subr.mxu0 0.0
    %3019 = vmatpush2.msra.mxu0 %v173
    %3020 = vmatprep.subr.mxu0 0.0
    %3021 = vmatpush2.msra.mxu0 %v172
    %3022 = vmatprep.subr.mxu0 0.0
    %3023 = vmatpush2.msra.mxu0 %v171
    %3024 = vmatprep.subr.mxu0 0.0
    %3025 = vmatpush2.msra.mxu0 %v170
    %3026 = vmatprep.subr.mxu0 0.0
    %3027 = vmatpush2.msra.mxu0 %v169
    %3028 = vmatprep.subr.mxu0 0.0
    %3029 = vmatpush2.msra.mxu0 %v168
    %3030 = vmatprep.subr.mxu0 0.0
    %3031 = vmatpush2.msra.mxu0 %v167
    %3032 = vmatprep.subr.mxu0 0.0
    %3033 = vmatpush2.msra.mxu0 %v166
    %3034 = vmatprep.subr.mxu0 0.0
    %3035 = vmatpush2.msra.mxu0 %v165
    %3036 = vmatprep.mubr.f32.mxu0 %v2607
    %3037 = vmatmul.mubr.f32.gmra.mxu0 %v2599
    %v3038 = vpop.f32.mrf.mxu0
    %v3039 = vadd.f32 %v2969, %v3038
    %v3040 = vpop.f32.mrf.mxu0
    %3041 = vdwg.mxu0
    %3042 = vmatprep.subr.mxu0 0.0
    %3043 = vmatpush1.msra.mxu0 %v196
    %3044 = vmatprep.subr.mxu0 0.0
    %3045 = vmatpush1.msra.mxu0 %v195
    %3046 = vmatprep.subr.mxu0 0.0
    %3047 = vmatpush1.msra.mxu0 %v194
    %3048 = vmatprep.subr.mxu0 0.0
    %3049 = vmatpush1.msra.mxu0 %v193
    %3050 = vmatprep.subr.mxu0 0.0
    %3051 = vmatpush1.msra.mxu0 %v192
    %3052 = vmatprep.subr.mxu0 0.0
    %3053 = vmatpush1.msra.mxu0 %v191
    %3054 = vmatprep.subr.mxu0 0.0
    %3055 = vmatpush1.msra.mxu0 %v190
    %3056 = vmatprep.subr.mxu0 0.0
    %3057 = vmatpush1.msra.mxu0 %v189
    %3058 = vmatprep.subr.mxu0 0.0
    %3059 = vmatpush1.msra.mxu0 %v188
    %3060 = vmatprep.subr.mxu0 0.0
    %3061 = vmatpush1.msra.mxu0 %v187
    %3062 = vmatprep.subr.mxu0 0.0
    %3063 = vmatpush1.msra.mxu0 %v186
    %3064 = vmatprep.subr.mxu0 0.0
    %3065 = vmatpush1.msra.mxu0 %v185
    %3066 = vmatprep.subr.mxu0 0.0
    %3067 = vmatpush1.msra.mxu0 %v184
    %3068 = vmatprep.subr.mxu0 0.0
    %3069 = vmatpush1.msra.mxu0 %v183
    %3070 = vmatprep.subr.mxu0 0.0
    %3071 = vmatpush1.msra.mxu0 %v182
    %3072 = vmatprep.subr.mxu0 0.0
    %3073 = vmatpush1.msra.mxu0 %v181
    %3074 = vmatprep.subr.mxu0 0.0
    %3075 = vmatpush2.msra.mxu0 %v212
    %3076 = vmatprep.subr.mxu0 0.0
    %3077 = vmatpush2.msra.mxu0 %v211
    %3078 = vmatprep.subr.mxu0 0.0
    %3079 = vmatpush2.msra.mxu0 %v210
    %3080 = vmatprep.subr.mxu0 0.0
    %3081 = vmatpush2.msra.mxu0 %v209
    %3082 = vmatprep.subr.mxu0 0.0
    %3083 = vmatpush2.msra.mxu0 %v208
    %3084 = vmatprep.subr.mxu0 0.0
    %3085 = vmatpush2.msra.mxu0 %v207
    %3086 = vmatprep.subr.mxu0 0.0
    %3087 = vmatpush2.msra.mxu0 %v206
    %3088 = vmatprep.subr.mxu0 0.0
    %3089 = vmatpush2.msra.mxu0 %v205
    %3090 = vmatprep.subr.mxu0 0.0
    %3091 = vmatpush2.msra.mxu0 %v204
    %3092 = vmatprep.subr.mxu0 0.0
    %3093 = vmatpush2.msra.mxu0 %v203
    %3094 = vmatprep.subr.mxu0 0.0
    %3095 = vmatpush2.msra.mxu0 %v202
    %3096 = vmatprep.subr.mxu0 0.0
    %3097 = vmatpush2.msra.mxu0 %v201
    %3098 = vmatprep.subr.mxu0 0.0
    %3099 = vmatpush2.msra.mxu0 %v200
    %3100 = vmatprep.subr.mxu0 0.0
    %3101 = vmatpush2.msra.mxu0 %v199
    %3102 = vmatprep.subr.mxu0 0.0
    %3103 = vmatpush2.msra.mxu0 %v198
    %3104 = vmatprep.subr.mxu0 0.0
    %3105 = vmatpush2.msra.mxu0 %v197
    %3106 = vmatprep.mubr.f32.mxu0 %v2608
    %3107 = vmatmul.mubr.f32.gmra.mxu0 %v2606
    %v3108 = vpop.f32.mrf.mxu0
    %v3109 = vadd.f32 %v3039, %v3108
    %v3110 = vpop.f32.mrf.mxu0
    %3111 = vdwg.mxu0
    %3112 = vmatprep.subr.mxu0 0.0
    %3113 = vmatpush1.msra.mxu0 %v228
    %3114 = vmatprep.subr.mxu0 0.0
    %3115 = vmatpush1.msra.mxu0 %v227
    %3116 = vmatprep.subr.mxu0 0.0
    %3117 = vmatpush1.msra.mxu0 %v226
    %3118 = vmatprep.subr.mxu0 0.0
    %3119 = vmatpush1.msra.mxu0 %v225
    %3120 = vmatprep.subr.mxu0 0.0
    %3121 = vmatpush1.msra.mxu0 %v224
    %3122 = vmatprep.subr.mxu0 0.0
    %3123 = vmatpush1.msra.mxu0 %v223
    %3124 = vmatprep.subr.mxu0 0.0
    %3125 = vmatpush1.msra.mxu0 %v222
    %3126 = vmatprep.subr.mxu0 0.0
    %3127 = vmatpush1.msra.mxu0 %v221
    %3128 = vmatprep.subr.mxu0 0.0
    %3129 = vmatpush1.msra.mxu0 %v220
    %3130 = vmatprep.subr.mxu0 0.0
    %3131 = vmatpush1.msra.mxu0 %v219
    %3132 = vmatprep.subr.mxu0 0.0
    %3133 = vmatpush1.msra.mxu0 %v218
    %3134 = vmatprep.subr.mxu0 0.0
    %3135 = vmatpush1.msra.mxu0 %v217
    %3136 = vmatprep.subr.mxu0 0.0
    %3137 = vmatpush1.msra.mxu0 %v216
    %3138 = vmatprep.subr.mxu0 0.0
    %3139 = vmatpush1.msra.mxu0 %v215
    %3140 = vmatprep.subr.mxu0 0.0
    %3141 = vmatpush1.msra.mxu0 %v214
    %3142 = vmatprep.subr.mxu0 0.0
    %3143 = vmatpush1.msra.mxu0 %v213
    %3144 = vmatprep.subr.mxu0 0.0
    %3145 = vmatpush2.msra.mxu0 %v244
    %3146 = vmatprep.subr.mxu0 0.0
    %3147 = vmatpush2.msra.mxu0 %v243
    %3148 = vmatprep.subr.mxu0 0.0
    %3149 = vmatpush2.msra.mxu0 %v242
    %3150 = vmatprep.subr.mxu0 0.0
    %3151 = vmatpush2.msra.mxu0 %v241
    %3152 = vmatprep.subr.mxu0 0.0
    %3153 = vmatpush2.msra.mxu0 %v240
    %3154 = vmatprep.subr.mxu0 0.0
    %3155 = vmatpush2.msra.mxu0 %v239
    %3156 = vmatprep.subr.mxu0 0.0
    %3157 = vmatpush2.msra.mxu0 %v238
    %3158 = vmatprep.subr.mxu0 0.0
    %3159 = vmatpush2.msra.mxu0 %v237
    %3160 = vmatprep.subr.mxu0 0.0
    %3161 = vmatpush2.msra.mxu0 %v236
    %3162 = vmatprep.subr.mxu0 0.0
    %3163 = vmatpush2.msra.mxu0 %v235
    %3164 = vmatprep.subr.mxu0 0.0
    %3165 = vmatpush2.msra.mxu0 %v234
    %3166 = vmatprep.subr.mxu0 0.0
    %3167 = vmatpush2.msra.mxu0 %v233
    %3168 = vmatprep.subr.mxu0 0.0
    %3169 = vmatpush2.msra.mxu0 %v232
    %3170 = vmatprep.subr.mxu0 0.0
    %3171 = vmatpush2.msra.mxu0 %v231
    %3172 = vmatprep.subr.mxu0 0.0
    %3173 = vmatpush2.msra.mxu0 %v230
    %3174 = vmatprep.subr.mxu0 0.0
    %3175 = vmatpush2.msra.mxu0 %v229
    %3176 = vmatprep.mubr.f32.mxu0 %v2624
    %3177 = vmatmul.mubr.f32.gmra.mxu0 %v2616
    %v3178 = vpop.f32.mrf.mxu0
    %v3179 = vadd.f32 %v3109, %v3178
    %v3180 = vpop.f32.mrf.mxu0
    %3181 = vdwg.mxu0
    %3182 = vmatprep.subr.mxu0 0.0
    %3183 = vmatpush1.msra.mxu0 %v260
    %3184 = vmatprep.subr.mxu0 0.0
    %3185 = vmatpush1.msra.mxu0 %v259
    %3186 = vmatprep.subr.mxu0 0.0
    %3187 = vmatpush1.msra.mxu0 %v258
    %3188 = vmatprep.subr.mxu0 0.0
    %3189 = vmatpush1.msra.mxu0 %v257
    %3190 = vmatprep.subr.mxu0 0.0
    %3191 = vmatpush1.msra.mxu0 %v256
    %3192 = vmatprep.subr.mxu0 0.0
    %3193 = vmatpush1.msra.mxu0 %v255
    %3194 = vmatprep.subr.mxu0 0.0
    %3195 = vmatpush1.msra.mxu0 %v254
    %3196 = vmatprep.subr.mxu0 0.0
    %3197 = vmatpush1.msra.mxu0 %v253
    %3198 = vmatprep.subr.mxu0 0.0
    %3199 = vmatpush1.msra.mxu0 %v252
    %3200 = vmatprep.subr.mxu0 0.0
    %3201 = vmatpush1.msra.mxu0 %v251
    %3202 = vmatprep.subr.mxu0 0.0
    %3203 = vmatpush1.msra.mxu0 %v250
    %3204 = vmatprep.subr.mxu0 0.0
    %3205 = vmatpush1.msra.mxu0 %v249
    %3206 = vmatprep.subr.mxu0 0.0
    %3207 = vmatpush1.msra.mxu0 %v248
    %3208 = vmatprep.subr.mxu0 0.0
    %3209 = vmatpush1.msra.mxu0 %v247
    %3210 = vmatprep.subr.mxu0 0.0
    %3211 = vmatpush1.msra.mxu0 %v246
    %3212 = vmatprep.subr.mxu0 0.0
    %3213 = vmatpush1.msra.mxu0 %v245
    %3214 = vmatprep.subr.mxu0 0.0
    %3215 = vmatpush2.msra.mxu0 %v276
    %3216 = vmatprep.subr.mxu0 0.0
    %3217 = vmatpush2.msra.mxu0 %v275
    %3218 = vmatprep.subr.mxu0 0.0
    %3219 = vmatpush2.msra.mxu0 %v274
    %3220 = vmatprep.subr.mxu0 0.0
    %3221 = vmatpush2.msra.mxu0 %v273
    %3222 = vmatprep.subr.mxu0 0.0
    %3223 = vmatpush2.msra.mxu0 %v272
    %3224 = vmatprep.subr.mxu0 0.0
    %3225 = vmatpush2.msra.mxu0 %v271
    %3226 = vmatprep.subr.mxu0 0.0
    %3227 = vmatpush2.msra.mxu0 %v270
    %3228 = vmatprep.subr.mxu0 0.0
    %3229 = vmatpush2.msra.mxu0 %v269
    %3230 = vmatprep.subr.mxu0 0.0
    %3231 = vmatpush2.msra.mxu0 %v268
    %3232 = vmatprep.subr.mxu0 0.0
    %3233 = vmatpush2.msra.mxu0 %v267
    %3234 = vmatprep.subr.mxu0 0.0
    %3235 = vmatpush2.msra.mxu0 %v266
    %3236 = vmatprep.subr.mxu0 0.0
    %3237 = vmatpush2.msra.mxu0 %v265
    %3238 = vmatprep.subr.mxu0 0.0
    %3239 = vmatpush2.msra.mxu0 %v264
    %3240 = vmatprep.subr.mxu0 0.0
    %3241 = vmatpush2.msra.mxu0 %v263
    %3242 = vmatprep.subr.mxu0 0.0
    %3243 = vmatpush2.msra.mxu0 %v262
    %3244 = vmatprep.subr.mxu0 0.0
    %3245 = vmatpush2.msra.mxu0 %v261
    %3246 = vmatprep.mubr.f32.mxu0 %v2625
    %3247 = vmatmul.mubr.f32.gmra.mxu0 %v2623
    %v3248 = vpop.f32.mrf.mxu0
    %v3249 = vadd.f32 %v3179, %v3248
    %v3250 = vpop.f32.mrf.mxu0
    %3251 = vdwg.mxu0
    %3252 = vmatprep.subr.mxu0 0.0
    %3253 = vmatpush1.msra.mxu0 %v292
    %3254 = vmatprep.subr.mxu0 0.0
    %3255 = vmatpush1.msra.mxu0 %v291
    %3256 = vmatprep.subr.mxu0 0.0
    %3257 = vmatpush1.msra.mxu0 %v290
    %3258 = vmatprep.subr.mxu0 0.0
    %3259 = vmatpush1.msra.mxu0 %v289
    %3260 = vmatprep.subr.mxu0 0.0
    %3261 = vmatpush1.msra.mxu0 %v288
    %3262 = vmatprep.subr.mxu0 0.0
    %3263 = vmatpush1.msra.mxu0 %v287
    %3264 = vmatprep.subr.mxu0 0.0
    %3265 = vmatpush1.msra.mxu0 %v286
    %3266 = vmatprep.subr.mxu0 0.0
    %3267 = vmatpush1.msra.mxu0 %v285
    %3268 = vmatprep.subr.mxu0 0.0
    %3269 = vmatpush1.msra.mxu0 %v284
    %3270 = vmatprep.subr.mxu0 0.0
    %3271 = vmatpush1.msra.mxu0 %v283
    %3272 = vmatprep.subr.mxu0 0.0
    %3273 = vmatpush1.msra.mxu0 %v282
    %3274 = vmatprep.subr.mxu0 0.0
    %3275 = vmatpush1.msra.mxu0 %v281
    %3276 = vmatprep.subr.mxu0 0.0
    %3277 = vmatpush1.msra.mxu0 %v280
    %3278 = vmatprep.subr.mxu0 0.0
    %3279 = vmatpush1.msra.mxu0 %v279
    %3280 = vmatprep.subr.mxu0 0.0
    %3281 = vmatpush1.msra.mxu0 %v278
    %3282 = vmatprep.subr.mxu0 0.0
    %3283 = vmatpush1.msra.mxu0 %v277
    %3284 = vmatprep.subr.mxu0 0.0
    %3285 = vmatpush2.msra.mxu0 %v308
    %3286 = vmatprep.subr.mxu0 0.0
    %3287 = vmatpush2.msra.mxu0 %v307
    %3288 = vmatprep.subr.mxu0 0.0
    %3289 = vmatpush2.msra.mxu0 %v306
    %3290 = vmatprep.subr.mxu0 0.0
    %3291 = vmatpush2.msra.mxu0 %v305
    %3292 = vmatprep.subr.mxu0 0.0
    %3293 = vmatpush2.msra.mxu0 %v304
    %3294 = vmatprep.subr.mxu0 0.0
    %3295 = vmatpush2.msra.mxu0 %v303
    %3296 = vmatprep.subr.mxu0 0.0
    %3297 = vmatpush2.msra.mxu0 %v302
    %3298 = vmatprep.subr.mxu0 0.0
    %3299 = vmatpush2.msra.mxu0 %v301
    %3300 = vmatprep.subr.mxu0 0.0
    %3301 = vmatpush2.msra.mxu0 %v300
    %3302 = vmatprep.subr.mxu0 0.0
    %3303 = vmatpush2.msra.mxu0 %v299
    %3304 = vmatprep.subr.mxu0 0.0
    %3305 = vmatpush2.msra.mxu0 %v298
    %3306 = vmatprep.subr.mxu0 0.0
    %3307 = vmatpush2.msra.mxu0 %v297
    %3308 = vmatprep.subr.mxu0 0.0
    %3309 = vmatpush2.msra.mxu0 %v296
    %3310 = vmatprep.subr.mxu0 0.0
    %3311 = vmatpush2.msra.mxu0 %v295
    %3312 = vmatprep.subr.mxu0 0.0
    %3313 = vmatpush2.msra.mxu0 %v294
    %3314 = vmatprep.subr.mxu0 0.0
    %3315 = vmatpush2.msra.mxu0 %v293
    %3316 = vmatprep.mubr.f32.mxu0 %v2641
    %3317 = vmatmul.mubr.f32.gmra.mxu0 %v2633
    %v3318 = vpop.f32.mrf.mxu0
    %v3319 = vadd.f32 %v3249, %v3318
    %v3320 = vpop.f32.mrf.mxu0
    %3321 = vdwg.mxu0
    %3322 = vmatprep.subr.mxu0 0.0
    %3323 = vmatpush1.msra.mxu0 %v324
    %3324 = vmatprep.subr.mxu0 0.0
    %3325 = vmatpush1.msra.mxu0 %v323
    %3326 = vmatprep.subr.mxu0 0.0
    %3327 = vmatpush1.msra.mxu0 %v322
    %3328 = vmatprep.subr.mxu0 0.0
    %3329 = vmatpush1.msra.mxu0 %v321
    %3330 = vmatprep.subr.mxu0 0.0
    %3331 = vmatpush1.msra.mxu0 %v320
    %3332 = vmatprep.subr.mxu0 0.0
    %3333 = vmatpush1.msra.mxu0 %v319
    %3334 = vmatprep.subr.mxu0 0.0
    %3335 = vmatpush1.msra.mxu0 %v318
    %3336 = vmatprep.subr.mxu0 0.0
    %3337 = vmatpush1.msra.mxu0 %v317
    %3338 = vmatprep.subr.mxu0 0.0
    %3339 = vmatpush1.msra.mxu0 %v316
    %3340 = vmatprep.subr.mxu0 0.0
    %3341 = vmatpush1.msra.mxu0 %v315
    %3342 = vmatprep.subr.mxu0 0.0
    %3343 = vmatpush1.msra.mxu0 %v314
    %3344 = vmatprep.subr.mxu0 0.0
    %3345 = vmatpush1.msra.mxu0 %v313
    %3346 = vmatprep.subr.mxu0 0.0
    %3347 = vmatpush1.msra.mxu0 %v312
    %3348 = vmatprep.subr.mxu0 0.0
    %3349 = vmatpush1.msra.mxu0 %v311
    %3350 = vmatprep.subr.mxu0 0.0
    %3351 = vmatpush1.msra.mxu0 %v310
    %3352 = vmatprep.subr.mxu0 0.0
    %3353 = vmatpush1.msra.mxu0 %v309
    %3354 = vmatprep.subr.mxu0 0.0
    %3355 = vmatpush2.msra.mxu0 %v340
    %3356 = vmatprep.subr.mxu0 0.0
    %3357 = vmatpush2.msra.mxu0 %v339
    %3358 = vmatprep.subr.mxu0 0.0
    %3359 = vmatpush2.msra.mxu0 %v338
    %3360 = vmatprep.subr.mxu0 0.0
    %3361 = vmatpush2.msra.mxu0 %v337
    %3362 = vmatprep.subr.mxu0 0.0
    %3363 = vmatpush2.msra.mxu0 %v336
    %3364 = vmatprep.subr.mxu0 0.0
    %3365 = vmatpush2.msra.mxu0 %v335
    %3366 = vmatprep.subr.mxu0 0.0
    %3367 = vmatpush2.msra.mxu0 %v334
    %3368 = vmatprep.subr.mxu0 0.0
    %3369 = vmatpush2.msra.mxu0 %v333
    %3370 = vmatprep.subr.mxu0 0.0
    %3371 = vmatpush2.msra.mxu0 %v332
    %3372 = vmatprep.subr.mxu0 0.0
    %3373 = vmatpush2.msra.mxu0 %v331
    %3374 = vmatprep.subr.mxu0 0.0
    %3375 = vmatpush2.msra.mxu0 %v330
    %3376 = vmatprep.subr.mxu0 0.0
    %3377 = vmatpush2.msra.mxu0 %v329
    %3378 = vmatprep.subr.mxu0 0.0
    %3379 = vmatpush2.msra.mxu0 %v328
    %3380 = vmatprep.subr.mxu0 0.0
    %3381 = vmatpush2.msra.mxu0 %v327
    %3382 = vmatprep.subr.mxu0 0.0
    %3383 = vmatpush2.msra.mxu0 %v326
    %3384 = vmatprep.subr.mxu0 0.0
    %3385 = vmatpush2.msra.mxu0 %v325
    %3386 = vmatprep.mubr.f32.mxu0 %v2642
    %3387 = vmatmul.mubr.f32.gmra.mxu0 %v2640
    %v3388 = vpop.f32.mrf.mxu0
    %v3389 = vadd.f32 %v3319, %v3388
    %v3390 = vpop.f32.mrf.mxu0
    %3391 = vdwg.mxu0
    %3392 = vmatprep.subr.mxu0 0.0
    %3393 = vmatpush1.msra.mxu0 %v356
    %3394 = vmatprep.subr.mxu0 0.0
    %3395 = vmatpush1.msra.mxu0 %v355
    %3396 = vmatprep.subr.mxu0 0.0
    %3397 = vmatpush1.msra.mxu0 %v354
    %3398 = vmatprep.subr.mxu0 0.0
    %3399 = vmatpush1.msra.mxu0 %v353
    %3400 = vmatprep.subr.mxu0 0.0
    %3401 = vmatpush1.msra.mxu0 %v352
    %3402 = vmatprep.subr.mxu0 0.0
    %3403 = vmatpush1.msra.mxu0 %v351
    %3404 = vmatprep.subr.mxu0 0.0
    %3405 = vmatpush1.msra.mxu0 %v350
    %3406 = vmatprep.subr.mxu0 0.0
    %3407 = vmatpush1.msra.mxu0 %v349
    %3408 = vmatprep.subr.mxu0 0.0
    %3409 = vmatpush1.msra.mxu0 %v348
    %3410 = vmatprep.subr.mxu0 0.0
    %3411 = vmatpush1.msra.mxu0 %v347
    %3412 = vmatprep.subr.mxu0 0.0
    %3413 = vmatpush1.msra.mxu0 %v346
    %3414 = vmatprep.subr.mxu0 0.0
    %3415 = vmatpush1.msra.mxu0 %v345
    %3416 = vmatprep.subr.mxu0 0.0
    %3417 = vmatpush1.msra.mxu0 %v344
    %3418 = vmatprep.subr.mxu0 0.0
    %3419 = vmatpush1.msra.mxu0 %v343
    %3420 = vmatprep.subr.mxu0 0.0
    %3421 = vmatpush1.msra.mxu0 %v342
    %3422 = vmatprep.subr.mxu0 0.0
    %3423 = vmatpush1.msra.mxu0 %v341
    %3424 = vmatprep.subr.mxu0 0.0
    %3425 = vmatpush2.msra.mxu0 %v372
    %3426 = vmatprep.subr.mxu0 0.0
    %3427 = vmatpush2.msra.mxu0 %v371
    %3428 = vmatprep.subr.mxu0 0.0
    %3429 = vmatpush2.msra.mxu0 %v370
    %3430 = vmatprep.subr.mxu0 0.0
    %3431 = vmatpush2.msra.mxu0 %v369
    %3432 = vmatprep.subr.mxu0 0.0
    %3433 = vmatpush2.msra.mxu0 %v368
    %3434 = vmatprep.subr.mxu0 0.0
    %3435 = vmatpush2.msra.mxu0 %v367
    %3436 = vmatprep.subr.mxu0 0.0
    %3437 = vmatpush2.msra.mxu0 %v366
    %3438 = vmatprep.subr.mxu0 0.0
    %3439 = vmatpush2.msra.mxu0 %v365
    %3440 = vmatprep.subr.mxu0 0.0
    %3441 = vmatpush2.msra.mxu0 %v364
    %3442 = vmatprep.subr.mxu0 0.0
    %3443 = vmatpush2.msra.mxu0 %v363
    %3444 = vmatprep.subr.mxu0 0.0
    %3445 = vmatpush2.msra.mxu0 %v362
    %3446 = vmatprep.subr.mxu0 0.0
    %3447 = vmatpush2.msra.mxu0 %v361
    %3448 = vmatprep.subr.mxu0 0.0
    %3449 = vmatpush2.msra.mxu0 %v360
    %3450 = vmatprep.subr.mxu0 0.0
    %3451 = vmatpush2.msra.mxu0 %v359
    %3452 = vmatprep.subr.mxu0 0.0
    %3453 = vmatpush2.msra.mxu0 %v358
    %3454 = vmatprep.subr.mxu0 0.0
    %3455 = vmatpush2.msra.mxu0 %v357
    %3456 = vmatprep.mubr.f32.mxu0 %v2658
    %3457 = vmatmul.mubr.f32.gmra.mxu0 %v2650
    %v3458 = vpop.f32.mrf.mxu0
    %v3459 = vadd.f32 %v3389, %v3458
    %v3460 = vpop.f32.mrf.mxu0
    %3461 = vdwg.mxu0
    %3462 = vmatprep.subr.mxu0 0.0
    %3463 = vmatpush1.msra.mxu0 %v388
    %3464 = vmatprep.subr.mxu0 0.0
    %3465 = vmatpush1.msra.mxu0 %v387
    %3466 = vmatprep.subr.mxu0 0.0
    %3467 = vmatpush1.msra.mxu0 %v386
    %3468 = vmatprep.subr.mxu0 0.0
    %3469 = vmatpush1.msra.mxu0 %v385
    %3470 = vmatprep.subr.mxu0 0.0
    %3471 = vmatpush1.msra.mxu0 %v384
    %3472 = vmatprep.subr.mxu0 0.0
    %3473 = vmatpush1.msra.mxu0 %v383
    %3474 = vmatprep.subr.mxu0 0.0
    %3475 = vmatpush1.msra.mxu0 %v382
    %3476 = vmatprep.subr.mxu0 0.0
    %3477 = vmatpush1.msra.mxu0 %v381
    %3478 = vmatprep.subr.mxu0 0.0
    %3479 = vmatpush1.msra.mxu0 %v380
    %3480 = vmatprep.subr.mxu0 0.0
    %3481 = vmatpush1.msra.mxu0 %v379
    %3482 = vmatprep.subr.mxu0 0.0
    %3483 = vmatpush1.msra.mxu0 %v378
    %3484 = vmatprep.subr.mxu0 0.0
    %3485 = vmatpush1.msra.mxu0 %v377
    %3486 = vmatprep.subr.mxu0 0.0
    %3487 = vmatpush1.msra.mxu0 %v376
    %3488 = vmatprep.subr.mxu0 0.0
    %3489 = vmatpush1.msra.mxu0 %v375
    %3490 = vmatprep.subr.mxu0 0.0
    %3491 = vmatpush1.msra.mxu0 %v374
    %3492 = vmatprep.subr.mxu0 0.0
    %3493 = vmatpush1.msra.mxu0 %v373
    %3494 = vmatprep.subr.mxu0 0.0
    %3495 = vmatpush2.msra.mxu0 %v404
    %3496 = vmatprep.subr.mxu0 0.0
    %3497 = vmatpush2.msra.mxu0 %v403
    %3498 = vmatprep.subr.mxu0 0.0
    %3499 = vmatpush2.msra.mxu0 %v402
    %3500 = vmatprep.subr.mxu0 0.0
    %3501 = vmatpush2.msra.mxu0 %v401
    %3502 = vmatprep.subr.mxu0 0.0
    %3503 = vmatpush2.msra.mxu0 %v400
    %3504 = vmatprep.subr.mxu0 0.0
    %3505 = vmatpush2.msra.mxu0 %v399
    %3506 = vmatprep.subr.mxu0 0.0
    %3507 = vmatpush2.msra.mxu0 %v398
    %3508 = vmatprep.subr.mxu0 0.0
    %3509 = vmatpush2.msra.mxu0 %v397
    %3510 = vmatprep.subr.mxu0 0.0
    %3511 = vmatpush2.msra.mxu0 %v396
    %3512 = vmatprep.subr.mxu0 0.0
    %3513 = vmatpush2.msra.mxu0 %v395
    %3514 = vmatprep.subr.mxu0 0.0
    %3515 = vmatpush2.msra.mxu0 %v394
    %3516 = vmatprep.subr.mxu0 0.0
    %3517 = vmatpush2.msra.mxu0 %v393
    %3518 = vmatprep.subr.mxu0 0.0
    %3519 = vmatpush2.msra.mxu0 %v392
    %3520 = vmatprep.subr.mxu0 0.0
    %3521 = vmatpush2.msra.mxu0 %v391
    %3522 = vmatprep.subr.mxu0 0.0
    %3523 = vmatpush2.msra.mxu0 %v390
    %3524 = vmatprep.subr.mxu0 0.0
    %3525 = vmatpush2.msra.mxu0 %v389
    %3526 = vmatprep.mubr.f32.mxu0 %v2659
    %3527 = vmatmul.mubr.f32.gmra.mxu0 %v2657
    %v3528 = vpop.f32.mrf.mxu0
    %v3529 = vadd.f32 %v3459, %v3528
    %v3530 = vpop.f32.mrf.mxu0
    %3531 = vdwg.mxu0
    %3532 = vmatprep.subr.mxu0 0.0
    %3533 = vmatpush1.msra.mxu0 %v420
    %3534 = vmatprep.subr.mxu0 0.0
    %3535 = vmatpush1.msra.mxu0 %v419
    %3536 = vmatprep.subr.mxu0 0.0
    %3537 = vmatpush1.msra.mxu0 %v418
    %3538 = vmatprep.subr.mxu0 0.0
    %3539 = vmatpush1.msra.mxu0 %v417
    %3540 = vmatprep.subr.mxu0 0.0
    %3541 = vmatpush1.msra.mxu0 %v416
    %3542 = vmatprep.subr.mxu0 0.0
    %3543 = vmatpush1.msra.mxu0 %v415
    %3544 = vmatprep.subr.mxu0 0.0
    %3545 = vmatpush1.msra.mxu0 %v414
    %3546 = vmatprep.subr.mxu0 0.0
    %3547 = vmatpush1.msra.mxu0 %v413
    %3548 = vmatprep.subr.mxu0 0.0
    %3549 = vmatpush1.msra.mxu0 %v412
    %3550 = vmatprep.subr.mxu0 0.0
    %3551 = vmatpush1.msra.mxu0 %v411
    %3552 = vmatprep.subr.mxu0 0.0
    %3553 = vmatpush1.msra.mxu0 %v410
    %3554 = vmatprep.subr.mxu0 0.0
    %3555 = vmatpush1.msra.mxu0 %v409
    %3556 = vmatprep.subr.mxu0 0.0
    %3557 = vmatpush1.msra.mxu0 %v408
    %3558 = vmatprep.subr.mxu0 0.0
    %3559 = vmatpush1.msra.mxu0 %v407
    %3560 = vmatprep.subr.mxu0 0.0
    %3561 = vmatpush1.msra.mxu0 %v406
    %3562 = vmatprep.subr.mxu0 0.0
    %3563 = vmatpush1.msra.mxu0 %v405
    %3564 = vmatprep.subr.mxu0 0.0
    %3565 = vmatpush2.msra.mxu0 0.0
    %3566 = vmatprep.subr.mxu0 0.0
    %3567 = vmatpush2.msra.mxu0 0.0
    %3568 = vmatprep.subr.mxu0 0.0
    %3569 = vmatpush2.msra.mxu0 0.0
    %3570 = vmatprep.subr.mxu0 0.0
    %3571 = vmatpush2.msra.mxu0 0.0
    %3572 = vmatprep.subr.mxu0 0.0
    %3573 = vmatpush2.msra.mxu0 0.0
    %3574 = vmatprep.subr.mxu0 0.0
    %3575 = vmatpush2.msra.mxu0 0.0
    %3576 = vmatprep.subr.mxu0 0.0
    %3577 = vmatpush2.msra.mxu0 0.0
    %3578 = vmatprep.subr.mxu0 0.0
    %3579 = vmatpush2.msra.mxu0 0.0
    %3580 = vmatprep.subr.mxu0 0.0
    %3581 = vmatpush2.msra.mxu0 0.0
    %3582 = vmatprep.subr.mxu0 0.0
    %3583 = vmatpush2.msra.mxu0 0.0
    %3584 = vmatprep.subr.mxu0 0.0
    %3585 = vmatpush2.msra.mxu0 0.0
    %3586 = vmatprep.subr.mxu0 0.0
    %3587 = vmatpush2.msra.mxu0 0.0
    %3588 = vmatprep.subr.mxu0 0.0
    %3589 = vmatpush2.msra.mxu0 0.0
    %3590 = vmatprep.subr.mxu0 0.0
    %3591 = vmatpush2.msra.mxu0 0.0
    %3592 = vmatprep.subr.mxu0 0.0
    %3593 = vmatpush2.msra.mxu0 0.0
    %3594 = vmatprep.subr.mxu0 0.0
    %3595 = vmatpush2.msra.mxu0 0.0
    %3596 = vmatprep.mubr.f32.mxu0 0.0
    %3597 = vmatmul.mubr.f32.gmra.mxu0 %v2666
    %v3598 = vpop.f32.mrf.mxu0
    %v3599 = vadd.f32 %v3529, %v3598
    %v3600 = vpop.f32.mrf.mxu0
    %3601 = vdwg.mxu0
    %v3602 = vmul.f32 %v1483, %v1483
    %vm3603 = vcmask 523264
    %v3605 = vsel %vm3603, 1.0, 0
    %v3608 = vsel %vm3603, %v3602, 0
    %3610 = vmatprep.subr.mxu0 0.0
    %3611 = vmatpush1.xpose.msra.mxu0 0.0
    %3612 = vmatprep.subr.mxu0 0.0
    %3613 = vmatpush1.xpose.msra.mxu0 0.0
    %3614 = vmatprep.subr.mxu0 0.0
    %3615 = vmatpush1.xpose.msra.mxu0 0.0
    %3616 = vmatprep.subr.mxu0 0.0
    %3617 = vmatpush1.xpose.msra.mxu0 0.0
    %3618 = vmatprep.subr.mxu0 0.0
    %3619 = vmatpush1.xpose.msra.mxu0 0.0
    %3620 = vmatprep.subr.mxu0 0.0
    %3621 = vmatpush1.xpose.msra.mxu0 0.0
    %3622 = vmatprep.subr.mxu0 0.0
    %3623 = vmatpush1.xpose.msra.mxu0 0.0
    %3624 = vmatprep.subr.mxu0 0.0
    %3625 = vmatpush1.xpose.msra.mxu0 0.0
    %3626 = vmatprep.subr.mxu0 0.0
    %3627 = vmatpush1.xpose.msra.mxu0 0.0
    %3628 = vmatprep.subr.mxu0 0.0
    %3629 = vmatpush1.xpose.msra.mxu0 0.0
    %3630 = vmatprep.subr.mxu0 0.0
    %3631 = vmatpush1.xpose.msra.mxu0 0.0
    %3632 = vmatprep.subr.mxu0 0.0
    %3633 = vmatpush1.xpose.msra.mxu0 0.0
    %3634 = vmatprep.subr.mxu0 0.0
    %3635 = vmatpush1.xpose.msra.mxu0 0.0
    %3636 = vmatprep.subr.mxu0 0.0
    %3637 = vmatpush1.xpose.msra.mxu0 0.0
    %3638 = vmatprep.subr.mxu0 0.0
    %3639 = vmatpush1.xpose.msra.mxu0 0.0
    %3640 = vmatprep.subr.mxu0 0.0
    %3641 = vmatpush1.xpose.msra.mxu0 %v3608
    %3642 = vmatprep.subr.mxu0 0.0
    %3643 = vmatpush2.xpose.msra.mxu0 0.0
    %3644 = vmatprep.subr.mxu0 0.0
    %3645 = vmatpush2.xpose.msra.mxu0 0.0
    %3646 = vmatprep.subr.mxu0 0.0
    %3647 = vmatpush2.xpose.msra.mxu0 0.0
    %3648 = vmatprep.subr.mxu0 0.0
    %3649 = vmatpush2.xpose.msra.mxu0 0.0
    %3650 = vmatprep.subr.mxu0 0.0
    %3651 = vmatpush2.xpose.msra.mxu0 0.0
    %3652 = vmatprep.subr.mxu0 0.0
    %3653 = vmatpush2.xpose.msra.mxu0 0.0
    %3654 = vmatprep.subr.mxu0 0.0
    %3655 = vmatpush2.xpose.msra.mxu0 0.0
    %3656 = vmatprep.subr.mxu0 0.0
    %3657 = vmatpush2.xpose.msra.mxu0 0.0
    %3658 = vmatprep.subr.mxu0 0.0
    %3659 = vmatpush2.xpose.msra.mxu0 0.0
    %3660 = vmatprep.subr.mxu0 0.0
    %3661 = vmatpush2.xpose.msra.mxu0 0.0
    %3662 = vmatprep.subr.mxu0 0.0
    %3663 = vmatpush2.xpose.msra.mxu0 0.0
    %3664 = vmatprep.subr.mxu0 0.0
    %3665 = vmatpush2.xpose.msra.mxu0 0.0
    %3666 = vmatprep.subr.mxu0 0.0
    %3667 = vmatpush2.xpose.msra.mxu0 0.0
    %3668 = vmatprep.subr.mxu0 0.0
    %3669 = vmatpush2.xpose.msra.mxu0 0.0
    %3670 = vmatprep.subr.mxu0 0.0
    %3671 = vmatpush2.xpose.msra.mxu0 0.0
    %3672 = vmatprep.subr.mxu0 0.0
    %3673 = vmatpush2.xpose.msra.mxu0 0.0
    %3674 = vmatprep.mubr.f32.mxu0 0.0
    %3675 = vmatmul.mubr.f32.gmra.mxu0 %v3605
    %v3676 = vpop.f32.mrf.mxu0
    %v3677 = vadd.f32 0.0, %v3676
    %v3678 = vpop.f32.mrf.mxu0
    %3679 = vdwg.mxu0
    %v3680 = vmul.f32 %v2541, %v2541
    %v3682 = vsel %vm3603, %v3680, 0
    %3684 = vmatprep.subr.mxu0 0.0
    %3685 = vmatpush1.xpose.msra.mxu0 0.0
    %3686 = vmatprep.subr.mxu0 0.0
    %3687 = vmatpush1.xpose.msra.mxu0 0.0
    %3688 = vmatprep.subr.mxu0 0.0
    %3689 = vmatpush1.xpose.msra.mxu0 0.0
    %3690 = vmatprep.subr.mxu0 0.0
    %3691 = vmatpush1.xpose.msra.mxu0 0.0
    %3692 = vmatprep.subr.mxu0 0.0
    %3693 = vmatpush1.xpose.msra.mxu0 0.0
    %3694 = vmatprep.subr.mxu0 0.0
    %3695 = vmatpush1.xpose.msra.mxu0 0.0
    %3696 = vmatprep.subr.mxu0 0.0
    %3697 = vmatpush1.xpose.msra.mxu0 0.0
    %3698 = vmatprep.subr.mxu0 0.0
    %3699 = vmatpush1.xpose.msra.mxu0 0.0
    %3700 = vmatprep.subr.mxu0 0.0
    %3701 = vmatpush1.xpose.msra.mxu0 0.0
    %3702 = vmatprep.subr.mxu0 0.0
    %3703 = vmatpush1.xpose.msra.mxu0 0.0
    %3704 = vmatprep.subr.mxu0 0.0
    %3705 = vmatpush1.xpose.msra.mxu0 0.0
    %3706 = vmatprep.subr.mxu0 0.0
    %3707 = vmatpush1.xpose.msra.mxu0 0.0
    %3708 = vmatprep.subr.mxu0 0.0
    %3709 = vmatpush1.xpose.msra.mxu0 0.0
    %3710 = vmatprep.subr.mxu0 0.0
    %3711 = vmatpush1.xpose.msra.mxu0 0.0
    %3712 = vmatprep.subr.mxu0 0.0
    %3713 = vmatpush1.xpose.msra.mxu0 0.0
    %3714 = vmatprep.subr.mxu0 0.0
    %3715 = vmatpush1.xpose.msra.mxu0 %v3682
    %3716 = vmatprep.subr.mxu0 0.0
    %3717 = vmatpush2.xpose.msra.mxu0 0.0
    %3718 = vmatprep.subr.mxu0 0.0
    %3719 = vmatpush2.xpose.msra.mxu0 0.0
    %3720 = vmatprep.subr.mxu0 0.0
    %3721 = vmatpush2.xpose.msra.mxu0 0.0
    %3722 = vmatprep.subr.mxu0 0.0
    %3723 = vmatpush2.xpose.msra.mxu0 0.0
    %3724 = vmatprep.subr.mxu0 0.0
    %3725 = vmatpush2.xpose.msra.mxu0 0.0
    %3726 = vmatprep.subr.mxu0 0.0
    %3727 = vmatpush2.xpose.msra.mxu0 0.0
    %3728 = vmatprep.subr.mxu0 0.0
    %3729 = vmatpush2.xpose.msra.mxu0 0.0
    %3730 = vmatprep.subr.mxu0 0.0
    %3731 = vmatpush2.xpose.msra.mxu0 0.0
    %3732 = vmatprep.subr.mxu0 0.0
    %3733 = vmatpush2.xpose.msra.mxu0 0.0
    %3734 = vmatprep.subr.mxu0 0.0
    %3735 = vmatpush2.xpose.msra.mxu0 0.0
    %3736 = vmatprep.subr.mxu0 0.0
    %3737 = vmatpush2.xpose.msra.mxu0 0.0
    %3738 = vmatprep.subr.mxu0 0.0
    %3739 = vmatpush2.xpose.msra.mxu0 0.0
    %3740 = vmatprep.subr.mxu0 0.0
    %3741 = vmatpush2.xpose.msra.mxu0 0.0
    %3742 = vmatprep.subr.mxu0 0.0
    %3743 = vmatpush2.xpose.msra.mxu0 0.0
    %3744 = vmatprep.subr.mxu0 0.0
    %3745 = vmatpush2.xpose.msra.mxu0 0.0
    %3746 = vmatprep.subr.mxu0 0.0
    %3747 = vmatpush2.xpose.msra.mxu0 0.0
    %3748 = vmatprep.mubr.f32.mxu0 0.0
    %3749 = vmatmul.mubr.f32.gmra.mxu0 %v3605
    %v3750 = vpop.f32.mrf.mxu0
    %v3751 = vadd.f32 0.0, %v3750
    %v3752 = vpop.f32.mrf.mxu0
    %3753 = vdwg.mxu0
    %v3754 = vmul.f32 %v3599, %v3599
    %v3756 = vsel %vm3603, %v3754, 0
    %3758 = vmatprep.subr.mxu0 0.0
    %3759 = vmatpush1.xpose.msra.mxu0 0.0
    %3760 = vmatprep.subr.mxu0 0.0
    %3761 = vmatpush1.xpose.msra.mxu0 0.0
    %3762 = vmatprep.subr.mxu0 0.0
    %3763 = vmatpush1.xpose.msra.mxu0 0.0
    %3764 = vmatprep.subr.mxu0 0.0
    %3765 = vmatpush1.xpose.msra.mxu0 0.0
    %3766 = vmatprep.subr.mxu0 0.0
    %3767 = vmatpush1.xpose.msra.mxu0 0.0
    %3768 = vmatprep.subr.mxu0 0.0
    %3769 = vmatpush1.xpose.msra.mxu0 0.0
    %3770 = vmatprep.subr.mxu0 0.0
    %3771 = vmatpush1.xpose.msra.mxu0 0.0
    %3772 = vmatprep.subr.mxu0 0.0
    %3773 = vmatpush1.xpose.msra.mxu0 0.0
    %3774 = vmatprep.subr.mxu0 0.0
    %3775 = vmatpush1.xpose.msra.mxu0 0.0
    %3776 = vmatprep.subr.mxu0 0.0
    %3777 = vmatpush1.xpose.msra.mxu0 0.0
    %3778 = vmatprep.subr.mxu0 0.0
    %3779 = vmatpush1.xpose.msra.mxu0 0.0
    %3780 = vmatprep.subr.mxu0 0.0
    %3781 = vmatpush1.xpose.msra.mxu0 0.0
    %3782 = vmatprep.subr.mxu0 0.0
    %3783 = vmatpush1.xpose.msra.mxu0 0.0
    %3784 = vmatprep.subr.mxu0 0.0
    %3785 = vmatpush1.xpose.msra.mxu0 0.0
    %3786 = vmatprep.subr.mxu0 0.0
    %3787 = vmatpush1.xpose.msra.mxu0 0.0
    %3788 = vmatprep.subr.mxu0 0.0
    %3789 = vmatpush1.xpose.msra.mxu0 %v3756
    %3790 = vmatprep.subr.mxu0 0.0
    %3791 = vmatpush2.xpose.msra.mxu0 0.0
    %3792 = vmatprep.subr.mxu0 0.0
    %3793 = vmatpush2.xpose.msra.mxu0 0.0
    %3794 = vmatprep.subr.mxu0 0.0
    %3795 = vmatpush2.xpose.msra.mxu0 0.0
    %3796 = vmatprep.subr.mxu0 0.0
    %3797 = vmatpush2.xpose.msra.mxu0 0.0
    %3798 = vmatprep.subr.mxu0 0.0
    %3799 = vmatpush2.xpose.msra.mxu0 0.0
    %3800 = vmatprep.subr.mxu0 0.0
    %3801 = vmatpush2.xpose.msra.mxu0 0.0
    %3802 = vmatprep.subr.mxu0 0.0
    %3803 = vmatpush2.xpose.msra.mxu0 0.0
    %3804 = vmatprep.subr.mxu0 0.0
    %3805 = vmatpush2.xpose.msra.mxu0 0.0
    %3806 = vmatprep.subr.mxu0 0.0
    %3807 = vmatpush2.xpose.msra.mxu0 0.0
    %3808 = vmatprep.subr.mxu0 0.0
    %3809 = vmatpush2.xpose.msra.mxu0 0.0
    %3810 = vmatprep.subr.mxu0 0.0
    %3811 = vmatpush2.xpose.msra.mxu0 0.0
    %3812 = vmatprep.subr.mxu0 0.0
    %3813 = vmatpush2.xpose.msra.mxu0 0.0
    %3814 = vmatprep.subr.mxu0 0.0
    %3815 = vmatpush2.xpose.msra.mxu0 0.0
    %3816 = vmatprep.subr.mxu0 0.0
    %3817 = vmatpush2.xpose.msra.mxu0 0.0
    %3818 = vmatprep.subr.mxu0 0.0
    %3819 = vmatpush2.xpose.msra.mxu0 0.0
    %3820 = vmatprep.subr.mxu0 0.0
    %3821 = vmatpush2.xpose.msra.mxu0 0.0
    %3822 = vmatprep.mubr.f32.mxu0 0.0
    %3823 = vmatmul.mubr.f32.gmra.mxu0 %v3605
    %v3824 = vpop.f32.mrf.mxu0
    %v3825 = vadd.f32 0.0, %v3824
    %v3826 = vpop.f32.mrf.mxu0
    %3827 = vdwg.mxu0
    %v3828 = vmul.f32 %v1483, %v2541
    %v3830 = vsel %vm3603, %v3828, 0
    %3832 = vmatprep.subr.mxu0 0.0
    %3833 = vmatpush1.xpose.msra.mxu0 0.0
    %3834 = vmatprep.subr.mxu0 0.0
    %3835 = vmatpush1.xpose.msra.mxu0 0.0
    %3836 = vmatprep.subr.mxu0 0.0
    %3837 = vmatpush1.xpose.msra.mxu0 0.0
    %3838 = vmatprep.subr.mxu0 0.0
    %3839 = vmatpush1.xpose.msra.mxu0 0.0
    %3840 = vmatprep.subr.mxu0 0.0
    %3841 = vmatpush1.xpose.msra.mxu0 0.0
    %3842 = vmatprep.subr.mxu0 0.0
    %3843 = vmatpush1.xpose.msra.mxu0 0.0
    %3844 = vmatprep.subr.mxu0 0.0
    %3845 = vmatpush1.xpose.msra.mxu0 0.0
    %3846 = vmatprep.subr.mxu0 0.0
    %3847 = vmatpush1.xpose.msra.mxu0 0.0
    %3848 = vmatprep.subr.mxu0 0.0
    %3849 = vmatpush1.xpose.msra.mxu0 0.0
    %3850 = vmatprep.subr.mxu0 0.0
    %3851 = vmatpush1.xpose.msra.mxu0 0.0
    %3852 = vmatprep.subr.mxu0 0.0
    %3853 = vmatpush1.xpose.msra.mxu0 0.0
    %3854 = vmatprep.subr.mxu0 0.0
    %3855 = vmatpush1.xpose.msra.mxu0 0.0
    %3856 = vmatprep.subr.mxu0 0.0
    %3857 = vmatpush1.xpose.msra.mxu0 0.0
    %3858 = vmatprep.subr.mxu0 0.0
    %3859 = vmatpush1.xpose.msra.mxu0 0.0
    %3860 = vmatprep.subr.mxu0 0.0
    %3861 = vmatpush1.xpose.msra.mxu0 0.0
    %3862 = vmatprep.subr.mxu0 0.0
    %3863 = vmatpush1.xpose.msra.mxu0 %v3830
    %3864 = vmatprep.subr.mxu0 0.0
    %3865 = vmatpush2.xpose.msra.mxu0 0.0
    %3866 = vmatprep.subr.mxu0 0.0
    %3867 = vmatpush2.xpose.msra.mxu0 0.0
    %3868 = vmatprep.subr.mxu0 0.0
    %3869 = vmatpush2.xpose.msra.mxu0 0.0
    %3870 = vmatprep.subr.mxu0 0.0
    %3871 = vmatpush2.xpose.msra.mxu0 0.0
    %3872 = vmatprep.subr.mxu0 0.0
    %3873 = vmatpush2.xpose.msra.mxu0 0.0
    %3874 = vmatprep.subr.mxu0 0.0
    %3875 = vmatpush2.xpose.msra.mxu0 0.0
    %3876 = vmatprep.subr.mxu0 0.0
    %3877 = vmatpush2.xpose.msra.mxu0 0.0
    %3878 = vmatprep.subr.mxu0 0.0
    %3879 = vmatpush2.xpose.msra.mxu0 0.0
    %3880 = vmatprep.subr.mxu0 0.0
    %3881 = vmatpush2.xpose.msra.mxu0 0.0
    %3882 = vmatprep.subr.mxu0 0.0
    %3883 = vmatpush2.xpose.msra.mxu0 0.0
    %3884 = vmatprep.subr.mxu0 0.0
    %3885 = vmatpush2.xpose.msra.mxu0 0.0
    %3886 = vmatprep.subr.mxu0 0.0
    %3887 = vmatpush2.xpose.msra.mxu0 0.0
    %3888 = vmatprep.subr.mxu0 0.0
    %3889 = vmatpush2.xpose.msra.mxu0 0.0
    %3890 = vmatprep.subr.mxu0 0.0
    %3891 = vmatpush2.xpose.msra.mxu0 0.0
    %3892 = vmatprep.subr.mxu0 0.0
    %3893 = vmatpush2.xpose.msra.mxu0 0.0
    %3894 = vmatprep.subr.mxu0 0.0
    %3895 = vmatpush2.xpose.msra.mxu0 0.0
    %3896 = vmatprep.mubr.f32.mxu0 0.0
    %3897 = vmatmul.mubr.f32.gmra.mxu0 %v3605
    %v3898 = vpop.f32.mrf.mxu0
    %v3899 = vadd.f32 0.0, %v3898
    %v3900 = vpop.f32.mrf.mxu0
    %3901 = vdwg.mxu0
    %v3902 = vmul.f32 %v2541, %v3599
    %v3904 = vsel %vm3603, %v3902, 0
    %3906 = vmatprep.subr.mxu0 0.0
    %3907 = vmatpush1.xpose.msra.mxu0 0.0
    %3908 = vmatprep.subr.mxu0 0.0
    %3909 = vmatpush1.xpose.msra.mxu0 0.0
    %3910 = vmatprep.subr.mxu0 0.0
    %3911 = vmatpush1.xpose.msra.mxu0 0.0
    %3912 = vmatprep.subr.mxu0 0.0
    %3913 = vmatpush1.xpose.msra.mxu0 0.0
    %3914 = vmatprep.subr.mxu0 0.0
    %3915 = vmatpush1.xpose.msra.mxu0 0.0
    %3916 = vmatprep.subr.mxu0 0.0
    %3917 = vmatpush1.xpose.msra.mxu0 0.0
    %3918 = vmatprep.subr.mxu0 0.0
    %3919 = vmatpush1.xpose.msra.mxu0 0.0
    %3920 = vmatprep.subr.mxu0 0.0
    %3921 = vmatpush1.xpose.msra.mxu0 0.0
    %3922 = vmatprep.subr.mxu0 0.0
    %3923 = vmatpush1.xpose.msra.mxu0 0.0
    %3924 = vmatprep.subr.mxu0 0.0
    %3925 = vmatpush1.xpose.msra.mxu0 0.0
    %3926 = vmatprep.subr.mxu0 0.0
    %3927 = vmatpush1.xpose.msra.mxu0 0.0
    %3928 = vmatprep.subr.mxu0 0.0
    %3929 = vmatpush1.xpose.msra.mxu0 0.0
    %3930 = vmatprep.subr.mxu0 0.0
    %3931 = vmatpush1.xpose.msra.mxu0 0.0
    %3932 = vmatprep.subr.mxu0 0.0
    %3933 = vmatpush1.xpose.msra.mxu0 0.0
    %3934 = vmatprep.subr.mxu0 0.0
    %3935 = vmatpush1.xpose.msra.mxu0 0.0
    %3936 = vmatprep.subr.mxu0 0.0
    %3937 = vmatpush1.xpose.msra.mxu0 %v3904
    %3938 = vmatprep.subr.mxu0 0.0
    %3939 = vmatpush2.xpose.msra.mxu0 0.0
    %3940 = vmatprep.subr.mxu0 0.0
    %3941 = vmatpush2.xpose.msra.mxu0 0.0
    %3942 = vmatprep.subr.mxu0 0.0
    %3943 = vmatpush2.xpose.msra.mxu0 0.0
    %3944 = vmatprep.subr.mxu0 0.0
    %3945 = vmatpush2.xpose.msra.mxu0 0.0
    %3946 = vmatprep.subr.mxu0 0.0
    %3947 = vmatpush2.xpose.msra.mxu0 0.0
    %3948 = vmatprep.subr.mxu0 0.0
    %3949 = vmatpush2.xpose.msra.mxu0 0.0
    %3950 = vmatprep.subr.mxu0 0.0
    %3951 = vmatpush2.xpose.msra.mxu0 0.0
    %3952 = vmatprep.subr.mxu0 0.0
    %3953 = vmatpush2.xpose.msra.mxu0 0.0
    %3954 = vmatprep.subr.mxu0 0.0
    %3955 = vmatpush2.xpose.msra.mxu0 0.0
    %3956 = vmatprep.subr.mxu0 0.0
    %3957 = vmatpush2.xpose.msra.mxu0 0.0
    %3958 = vmatprep.subr.mxu0 0.0
    %3959 = vmatpush2.xpose.msra.mxu0 0.0
    %3960 = vmatprep.subr.mxu0 0.0
    %3961 = vmatpush2.xpose.msra.mxu0 0.0
    %3962 = vmatprep.subr.mxu0 0.0
    %3963 = vmatpush2.xpose.msra.mxu0 0.0
    %3964 = vmatprep.subr.mxu0 0.0
    %3965 = vmatpush2.xpose.msra.mxu0 0.0
    %3966 = vmatprep.subr.mxu0 0.0
    %3967 = vmatpush2.xpose.msra.mxu0 0.0
    %3968 = vmatprep.subr.mxu0 0.0
    %3969 = vmatpush2.xpose.msra.mxu0 0.0
    %3970 = vmatprep.mubr.f32.mxu0 0.0
    %3971 = vmatmul.mubr.f32.gmra.mxu0 %v3605
    %v3972 = vpop.f32.mrf.mxu0
    %v3973 = vadd.f32 0.0, %v3972
    %v3974 = vpop.f32.mrf.mxu0
    %3975 = vdwg.mxu0
    %v3976 = vmax.f32 %v3677, 1e-24
    %v3977 = vrsqrt.pop %v3976
    %v3978 = vmax.f32 %v3751, 1e-24
    %v3979 = vrsqrt.pop %v3978
    %v3980 = vmax.f32 %v3825, 1e-24
    %v3981 = vrsqrt.pop %v3980
    %v3982 = vmul.f32 %v3899, %v3977
    %v3983 = vmul.f32 %v3982, %v3979
    %vm3984 = vcmask 8192
    %3985 = vst.msk [vmem:[#allocation2] sm:$0x1] %vm3984, %v3983
    %v3986 = vmul.f32 %v3973, %v3979
    %v3987 = vmul.f32 %v3986, %v3981
    %3988 = vst.msk [vmem:[#allocation2 + $0x1] sm:$0x1] %vm3984, %v3987
    // Predicated region
    $region22: #{tpu_custom_call.1} parent=1 // pred_check
      _
    $region23: #{tpu_custom_call.1} parent=1 // pred_check_branch
      %3990 = sbr.rel (0) target = $region25
    $region24: #{tpu_custom_call.1} parent=1 // pred_region
      %s3992 = ssub.s32 32, 32
      %3993 = vsyncadd [#allocation3], %s3992
      %s3995 = sshll.u32 [#allocation2], 4
      %s3996 = int_to_ptr.vmem [resolvable:$true] %s3995
      %3998 = dma.vmem_to_hbm [thread:$0]  %s3996, 32, %s5, [#allocation3]
    $region25: #{tpu_custom_call.1} parent=1 // pred_fallthru
      _
    // Predicated region
    $region26: #{tpu_custom_call.1} parent=1 // pred_check
      _
    $region27: #{tpu_custom_call.1} parent=1 // pred_check_branch
      %4000 = sbr.rel (0) target = $region29
    $region28: #{tpu_custom_call.1} parent=1 // pred_region
      %4001 = dma.done [#allocation3], 32
    $region29: #{tpu_custom_call.1} parent=1 // pred_fallthru
      _
    %4002 = vsyncpa [#allocation3], 1

</llo_original>
